<compile_context>
chip_gen: v7x
topology: tpu7x:2x2x1
jax: 0.10.0
libtpu: 0.0.40
codegen_flags: <defaults>
</compile_context>

<pallas_src>
import functools
import math

import jax
import jax.numpy as jnp
from jax.experimental import pallas as pl
from jax.experimental.pallas import tpu as pltpu

# ---- model hyper-parameters (match SE3TransformerWrapper defaults) -------------------
NUM_LAYERS = 2
NUM_CHANNELS = 32          # fiber_hidden channels per degree
N_HEADS = 4
DIV = 4
L0_IN, L0_OUT = 32, 32
L1_IN, L1_OUT = 3, 2
NUM_EDGE_FEATURES = 32

H = N_HEADS
DKH = 8                                 # key/query dim per head
DV0 = NUM_CHANNELS // DIV // N_HEADS    # = 2 degree-0 value channels per head
DV1 = NUM_CHANNELS // DIV // N_HEADS    # = 2 degree-1 value channels per head
HID = NUM_CHANNELS                      # 32
CE1 = NUM_EDGE_FEATURES + 1             # + arcsin-distance feature (populate_edge='arcsin')

VS_BLK = 16                             # per-head value block: [v0(2)|v1x(2)|v1y(2)|v1z(2)|s0(2)|pad(6)]
FULL_COLS = 32 + H * VS_BLK             # 96  : [K(32, head-major) | per-head VS blocks]
TILE_COLS = 32 + 4 * HID                # 160 : [Q(32, head-major) | skip0 | skip1x | skip1y | skip1z]
OUTP_ROWS = H * 4 * VS_BLK              # 256 : rows of the fused output projection
SLAB = 4 * HID                          # 128 : lane-dense node slab [x0 | x1x | x1y | x1z]
FIN_COLS = L0_OUT + 3 * L1_OUT          # 38  : lane-dense final output slab


# ======================================================================================
# Per-layer fused Pallas kernel
# ======================================================================================

def _ln(x, g, b, eps=1e-5):
    mu = jnp.mean(x, axis=-1, keepdims=True)
    xc = x - mu
    var = jnp.mean(xc * xc, axis=-1, keepdims=True)
    return xc * jax.lax.rsqrt(var + eps) * g + b


def _se3_layer_kernel(is_last, *refs):
    if is_last:
        (slab_ref, rdir_ref, bias_ref, wf_ref, wt_ref, wo_ref, vecs_ref,
         wfin_ref, o_ref) = refs
    else:
        (slab_ref, rdir_ref, bias_ref, wf_ref, wt_ref, wo_ref, vecs_ref,
         o_ref) = refs

    f32, bf16 = jnp.float32, jnp.bfloat16
    n_nodes = slab_ref.shape[0]
    tq = o_ref.shape[0]
    q0 = pl.multiple_of(pl.program_id(0) * tq, tq)

    xf = slab_ref[...].astype(bf16)                       # (N, Cs)  full nodes (K/V/S)
    xt = slab_ref[pl.ds(q0, tq), :].astype(bf16)          # (TQ, Cs) query tile (Q/skip)

    # -- TWO fused projection matmuls per layer (all heads / all degrees at once) ------
    proj_full = jnp.dot(xf, wf_ref[...], preferred_element_type=f32)    # (N, 96)
    proj_tile = jnp.dot(xt, wt_ref[...], preferred_element_type=f32)    # (TQ, 160)

    k_all = proj_full[:, 0:32].astype(bf16)               # head-major, 8 per head
    vs_all = proj_full[:, 32:FULL_COLS].astype(bf16)      # per-head 16-lane value blocks
    q_all = proj_tile[:, 0:32].astype(bf16)               # 1/sqrt(dk) folded into Wq
    skip_slab = proj_tile[:, 32:TILE_COLS]                # (TQ, 128) f32

    rdir = rdir_ref[...].astype(f32)                      # (3, TQ, N)

    # self-edge mask, offset by the query-tile origin (correct under q-row tiling)
    row = q0 + jax.lax.broadcasted_iota(jnp.int32, (tq, n_nodes), 0)
    col = jax.lax.broadcasted_iota(jnp.int32, (tq, n_nodes), 1)
    neg_diag = jnp.where(row == col, jnp.float32(-1e9), jnp.float32(0.0))

    # -- per-head dense attention: 1 QK matmul + 1 fused apply matmul per head ---------
    pieces = []
    for h in range(H):
        qh = q_all[:, 8 * h:8 * h + 8]
        kh = k_all[:, 8 * h:8 * h + 8]
        logits = jax.lax.dot_general(qh, kh, (((1,), (1,)), ((), ())),
                                     preferred_element_type=f32)        # (TQ, N)
        logits = logits + bias_ref[h].astype(f32) + neg_diag            # precomputed bias
        mx = jnp.max(logits, axis=-1, keepdims=True)
        ex = jnp.exp(logits - mx)
        denom = jnp.sum(ex, axis=-1, keepdims=True)
        probs = ex * pl.reciprocal(denom, approx=True)                  # (TQ, N) f32

        # stacked [probs ; probs*rdir_x ; probs*rdir_y ; probs*rdir_z] -> one MXU call
        lhs4 = jnp.concatenate(
            [probs.astype(bf16),
             (probs * rdir[0]).astype(bf16),
             (probs * rdir[1]).astype(bf16),
             (probs * rdir[2]).astype(bf16)], axis=0)                   # (4TQ, N)
        vs_h = vs_all[:, VS_BLK * h:VS_BLK * (h + 1)]                   # (N, 16)
        res = jnp.dot(lhs4, vs_h, preferred_element_type=f32)           # (4TQ, 16)
        pieces += [res[0:tq], res[tq:2 * tq], res[2 * tq:3 * tq], res[3 * tq:4 * tq]]

    # -- hoisted output projection: one (TQ,256)x(256,128) matmul for wo0 + wo1 --------
    att = jnp.concatenate(pieces, axis=1).astype(bf16)                  # (TQ, 256)
    out_proj = jnp.dot(att, wo_ref[...], preferred_element_type=f32)    # (TQ, 128)
    slab_pre = out_proj + skip_slab + vecs_ref[0:1, :]                  # + (bo0+bskip0 | 0)

    # -- NormSE3 (f32) -------------------------------------------------------------
    g0 = vecs_ref[1:2, 0:HID]
    b0 = vecs_ref[2:3, 0:HID]
    g1 = vecs_ref[3:4, 0:HID]
    b1 = vecs_ref[4:5, 0:HID]

    x0p = slab_pre[:, 0:HID]
    phase = jnp.where(x0p > 0.0, 1.0, jnp.where(x0p < 0.0, -1.0, 0.0))
    x0n = phase * jnp.maximum(_ln(jnp.abs(x0p), g0, b0), 0.0)

    x1x = slab_pre[:, HID:2 * HID]
    x1y = slab_pre[:, 2 * HID:3 * HID]
    x1z = slab_pre[:, 3 * HID:4 * HID]
    n1 = jnp.sqrt(x1x * x1x + x1y * x1y + x1z * x1z + 1e-6)
    ratio = jnp.maximum(_ln(n1, g1, b1), 0.0) / (n1 + 1e-6)

    slab_n = jnp.concatenate([x0n, x1x * ratio, x1y * ratio, x1z * ratio],
                             axis=1)                                    # (TQ, 128) lane-dense

    if is_last:
        # fused final LinearSE3 (zero-init per reset_parameter) -> lane-dense (TQ, 38) slab
        o_ref[...] = jnp.dot(slab_n.astype(bf16), wfin_ref[...],
                             preferred_element_type=f32)
    else:
        o_ref[...] = slab_n


# ======================================================================================
# Parameters (deterministic synthetic init, mirroring reset_parameter semantics)
# ======================================================================================

def _lecun(key, shape):
    fan_in = shape[-1]
    return (jax.random.normal(key, shape) / jnp.sqrt(float(fan_in))).astype(jnp.float32)


def init_params(key):
    layers = []
    c0_in, c1_in = L0_IN, L1_IN
    for _ in range(NUM_LAYERS):
        key, *ks = jax.random.split(key, 11)
        lp = {
            'Wq0':   _lecun(ks[0], (H * DKH, c0_in)),
            'Wk0':   _lecun(ks[1], (H * DKH, c0_in)),
            'We':    _lecun(ks[2], (H, CE1)),
            'Wv0':   _lecun(ks[3], (H * DV0, c0_in)),
            'Wv1':   _lecun(ks[4], (H * DV1, c1_in)),
            'Ws01':  _lecun(ks[5], (H * DV1, c0_in)),
            'Wo0':   _lecun(ks[6], (HID, H * DV0)),
            'Wo1':   _lecun(ks[7], (HID, 2 * H * DV1)),
            'Wskip0': _lecun(ks[8], (HID, c0_in)),
            'Wskip1': _lecun(ks[9], (HID, c1_in)),
            'bo0': jnp.zeros((HID,), jnp.float32),
            'bskip0': jnp.zeros((HID,), jnp.float32),
            'g0': jnp.ones((HID,), jnp.float32), 'b0': jnp.zeros((HID,), jnp.float32),
            'g1': jnp.ones((HID,), jnp.float32), 'b1': jnp.zeros((HID,), jnp.float32),
        }
        layers.append(lp)
        c0_in, c1_in = HID, HID
    # final_layer='lin' (LinearSE3), zero-initialized in reset_parameter()
    return {'layers': layers,
            'W0f': jnp.zeros((L0_OUT, HID), jnp.float32),
            'W1f': jnp.zeros((L1_OUT, HID), jnp.float32)}


def _pack_layer(lp, c0, c1):
    """Build block-structured fused weights for one layer (wrapper-side plumbing)."""
    cs = c0 + 3 * c1
    scale = 1.0 / math.sqrt(DKH)

    # full-node projection: [K(32) | per-head [v0|v1x|v1y|v1z|s0|pad] blocks]
    wf = jnp.zeros((cs, FULL_COLS), jnp.float32)
    wf = wf.at[:c0, 0:32].set(lp['Wk0'].T)
    for h in range(H):
        base = 32 + VS_BLK * h
        wf = wf.at[:c0, base:base + 2].set(lp['Wv0'][2 * h:2 * h + 2, :].T)
        for m in range(3):
            r0 = c0 + m * c1
            wf = wf.at[r0:r0 + c1, base + 2 + 2 * m:base + 4 + 2 * m].set(
                lp['Wv1'][2 * h:2 * h + 2, :].T)
        wf = wf.at[:c0, base + 8:base + 10].set(lp['Ws01'][2 * h:2 * h + 2, :].T)

    # query-tile projection: [Q(32, scaled) | skip0 | skip1x | skip1y | skip1z]
    wt = jnp.zeros((cs, TILE_COLS), jnp.float32)
    wt = wt.at[:c0, 0:32].set(lp['Wq0'].T * scale)
    wt = wt.at[:c0, 32:64].set(lp['Wskip0'].T)
    for m in range(3):
        r0 = c0 + m * c1
        wt = wt.at[r0:r0 + c1, 64 + 32 * m:96 + 32 * m].set(lp['Wskip1'].T)

    # fused output projection (256, 128): rows match the kernel's per-head piece layout
    wo = jnp.zeros((OUTP_ROWS, SLAB), jnp.float32)
    for h in range(H):
        rb = 4 * VS_BLK * h
        for c in range(DV0):
            wo = wo.at[rb + c, 0:32].set(lp['Wo0'][:, 2 * h + c])
        for m in range(3):
            for c in range(DV1):
                wo = wo.at[rb + 2 + 2 * m + c, 32 + 32 * m:64 + 32 * m].set(
                    lp['Wo1'][:, 2 * h + c])                              # self path
                wo = wo.at[rb + VS_BLK * (m + 1) + 8 + c, 32 + 32 * m:64 + 32 * m].set(
                    lp['Wo1'][:, 8 + 2 * h + c])                          # cross (rdir) path

    vec = jnp.zeros((8, SLAB), jnp.float32)
    vec = vec.at[0, 0:HID].set(lp['bo0'] + lp['bskip0'])
    vec = vec.at[1, 0:HID].set(lp['g0'])
    vec = vec.at[2, 0:HID].set(lp['b0'])
    vec = vec.at[3, 0:HID].set(lp['g1'])
    vec = vec.at[4, 0:HID].set(lp['b1'])

    return {'w_full': wf.astype(jnp.bfloat16), 'w_tile': wt.astype(jnp.bfloat16),
            'w_out': wo.astype(jnp.bfloat16), 'vecs': vec, 'we': lp['We']}


def pack_params(params):
    layers = []
    c0, c1 = L0_IN, L1_IN
    for lp in params['layers']:
        layers.append(_pack_layer(lp, c0, c1))
        c0, c1 = HID, HID
    # fused final LinearSE3 -> lane-dense (128, 38) slab weight (all zero at init)
    wfin = jnp.zeros((SLAB, FIN_COLS), jnp.float32)
    wfin = wfin.at[0:32, 0:32].set(params['W0f'].T)
    for m in range(3):
        wfin = wfin.at[32 + 32 * m:64 + 32 * m, 32 + 2 * m:34 + 2 * m].set(params['W1f'].T)
    return {'layers': layers, 'w_final': wfin.astype(jnp.bfloat16)}


# ======================================================================================
# Forward wrapper
# ======================================================================================

def _layer_call(slab, rdir_b, bias_b, lw, w_final, tq):
    n = slab.shape[0]
    is_last = w_final is not None
    out_w = FIN_COLS if is_last else SLAB

    args = [slab, rdir_b, bias_b, lw['w_full'], lw['w_tile'], lw['w_out'], lw['vecs']]
    in_specs = [
        pl.BlockSpec(slab.shape, lambda i: (0, 0)),            # node slab (full residency)
        pl.BlockSpec((3, tq, n), lambda i: (0, i, 0)),          # rdir, streamed per q-tile
        pl.BlockSpec((H, tq, n), lambda i: (0, i, 0)),          # edge bias, streamed per q-tile
        pl.BlockSpec(lw['w_full'].shape, lambda i: (0, 0)),
        pl.BlockSpec(lw['w_tile'].shape, lambda i: (0, 0)),
        pl.BlockSpec(lw['w_out'].shape, lambda i: (0, 0)),
        pl.BlockSpec(lw['vecs'].shape, lambda i: (0, 0)),
    ]
    if is_last:
        args.append(w_final)
        in_specs.append(pl.BlockSpec(w_final.shape, lambda i: (0, 0)))

    return pl.pallas_call(
        functools.partial(_se3_layer_kernel, is_last),
        out_shape=jax.ShapeDtypeStruct((n, out_w), jnp.float32),
        grid=(n // tq,),
        in_specs=in_specs,
        out_specs=pl.BlockSpec((tq, out_w), lambda i: (i, 0)),
        compiler_params=pltpu.CompilerParams(
            dimension_semantics=("parallel",),                  # v7x: both TCs get q-tiles
            vmem_limit_bytes=48 * 1024 * 1024),
    )(*args)


def se3_forward(packed, xyz, type_0_features, type_1_features, edge_features):
    n = xyz.shape[0]
    # Query-row tile: 128/256 rows are good MXU tiles on v5e / v6e-v7x respectively.
    tq = n if n <= 256 else 256
    assert n % tq == 0  # TODO(synk): pad N to a multiple of the query tile for ragged sizes.

    x0 = type_0_features[..., 0].astype(jnp.float32)                       # (N, 32)
    x1 = type_1_features.astype(jnp.float32)                               # (N, 3, 3)
    slab = jnp.concatenate([x0, x1[:, :, 0], x1[:, :, 1], x1[:, :, 2]], axis=1)  # (N, 41)

    # graph geometry (stand-in for the DGL graph's rel_pos)
    rel = xyz[None, :, :] - xyz[:, None, :]                                # x_j - x_i
    dist = jnp.sqrt(jnp.sum(rel * rel, axis=-1) + 1e-8)
    rdir_b = jnp.transpose(rel / dist[..., None], (2, 0, 1)).astype(jnp.bfloat16)  # (3,N,N)

    # populate_edge='arcsin': append arcsin-normalized distance to edge scalars
    d_norm = jnp.clip(dist / (jnp.max(dist) + 1e-6), 0.0, 1.0)
    arc = jnp.arcsin(d_norm) * (2.0 / jnp.pi)
    e_aug = jnp.concatenate([edge_features.astype(jnp.float32), arc[..., None]], axis=-1)

    for li in range(NUM_LAYERS):
        lw = packed['layers'][li]
        # all-head edge-bias projection: ONE MXU matmul per layer, hoisted out of the
        # kernel's head loop; kernel ingests 4 bf16 channels/pair instead of 33 f32.
        bias_b = jnp.einsum('qkc,hc->hqk', e_aug, lw['we']).astype(jnp.bfloat16)
        w_final = packed['w_final'] if li == NUM_LAYERS - 1 else None
        slab = _layer_call(slab, rdir_b, bias_b, lw, w_final, tq)

    # TODO(synk): for very large N add flash-style key-axis streaming (online-softmax carry)
    # so the per-tile (TQ, N) buffers stay bounded on v7x's 64 MiB VMEM.
    out0 = slab[:, :L0_OUT, None]                                          # (N, 32, 1)
    out1 = slab[:, L0_OUT:].reshape(n, 3, L1_OUT).transpose(0, 2, 1)       # (N, 2, 3)
    return {'0': out0, '1': out1}


# ======================================================================================

if __name__ == "__main__":
    key = jax.random.PRNGKey(0)
    k_xyz, k_n0, k_n1, k_e, k_p = jax.random.split(key, 5)

    N = 8
    xyz = jax.random.normal(k_xyz, (N, 3), jnp.float32) * 3.0
    type_0_features = jax.random.normal(k_n0, (N, L0_IN, 1), jnp.float32)
    type_1_features = jax.random.normal(k_n1, (N, L1_IN, 3), jnp.float32)
    edge_features = jax.random.normal(k_e, (N, N, NUM_EDGE_FEATURES), jnp.float32)

    params = init_params(k_p)
    packed = pack_params(params)

    fwd = jax.jit(se3_forward)
    out = fwd(packed, xyz, type_0_features, type_1_features, edge_features)
    jax.block_until_ready(out)

    assert out['0'].shape == (N, L0_OUT, 1)
    assert out['1'].shape == (N, L1_OUT, 3)
    assert bool(jnp.all(jnp.isfinite(out['0']))) and bool(jnp.all(jnp.isfinite(out['1'])))
    # reset_parameter zeros the final LinearSE3 weights -> outputs are exactly zero at init
    assert bool(jnp.all(out['0'] == 0.0)) and bool(jnp.all(out['1'] == 0.0))

    print("KERNEL_OK")
</pallas_src>

<mosaic_0001>
module attributes {stable_mosaic.version = 11 : i64} {
  func.func @_se3_layer_kernel(%arg0: i32, %arg1: memref<8x41xf32, #tpu.memory_space<vmem>>, %arg2: memref<3x8x8xbf16, #tpu.memory_space<vmem>>, %arg3: memref<4x8x8xbf16, #tpu.memory_space<vmem>>, %arg4: memref<41x96xbf16, #tpu.memory_space<vmem>>, %arg5: memref<41x160xbf16, #tpu.memory_space<vmem>>, %arg6: memref<256x128xbf16, #tpu.memory_space<vmem>>, %arg7: memref<8x128xf32, #tpu.memory_space<vmem>>, %arg8: memref<8x128xf32, #tpu.memory_space<vmem>>) attributes {dimension_semantics = [#tpu.dimension_semantics<parallel>], iteration_bounds = array<i64: 1>, scalar_prefetch = 0 : i64, scratch_operands = 0 : i64, tpu.core_type = #tpu.core_type<tc>, window_params = [{pipeline_mode = #tpu.pipeline_mode<synchronous>, transform_indices = @transform_0, window_bounds = array<i64: 8, 41>}, {transform_indices = @transform_1, window_bounds = array<i64: 3, 8, 8>}, {transform_indices = @transform_2, window_bounds = array<i64: 4, 8, 8>}, {pipeline_mode = #tpu.pipeline_mode<synchronous>, transform_indices = @transform_3, window_bounds = array<i64: 41, 96>}, {pipeline_mode = #tpu.pipeline_mode<synchronous>, transform_indices = @transform_4, window_bounds = array<i64: 41, 160>}, {pipeline_mode = #tpu.pipeline_mode<synchronous>, transform_indices = @transform_5, window_bounds = array<i64: 256, 128>}, {pipeline_mode = #tpu.pipeline_mode<synchronous>, transform_indices = @transform_6, window_bounds = array<i64: 8, 128>}, {transform_indices = @transform_7, window_bounds = array<i64: 8, 128>}]} {
    %c8_i32 = arith.constant 8 : i32
    %0 = arith.muli %arg0, %c8_i32 : i32
    %1 = tpu.assume_multiple %0, 8 : i32
    %c0 = arith.constant 0 : index
    %c0_0 = arith.constant 0 : index
    %2 = vector.load %arg1[%c0, %c0_0] : memref<8x41xf32, #tpu.memory_space<vmem>>, vector<8x41xf32>
    %3 = arith.truncf %2 : vector<8x41xf32> to vector<8x41xbf16>
    %4 = arith.index_cast %1 : i32 to index
    %c0_1 = arith.constant 0 : index
    %5 = vector.load %arg1[%4, %c0_1] : memref<8x41xf32, #tpu.memory_space<vmem>>, vector<8x41xf32>
    %6 = arith.truncf %5 : vector<8x41xf32> to vector<8x41xbf16>
    %c0_2 = arith.constant 0 : index
    %c0_3 = arith.constant 0 : index
    %7 = vector.load %arg4[%c0_2, %c0_3] : memref<41x96xbf16, #tpu.memory_space<vmem>>, vector<41x96xbf16>
    %cst = arith.constant dense<0.000000e+00> : vector<8x96xf32>
    %8 = tpu.matmul %3, %7, %cst {dimension_numbers = #tpu.dot_dimension_numbers<[1], [0], [0], [1], [0, 0, 1, 1], [], []>} : vector<8x41xbf16>, vector<41x96xbf16>, vector<8x96xf32> -> vector<8x96xf32>
    %c0_4 = arith.constant 0 : index
    %c0_5 = arith.constant 0 : index
    %9 = vector.load %arg5[%c0_4, %c0_5] : memref<41x160xbf16, #tpu.memory_space<vmem>>, vector<41x160xbf16>
    %cst_6 = arith.constant dense<0.000000e+00> : vector<8x160xf32>
    %10 = tpu.matmul %6, %9, %cst_6 {dimension_numbers = #tpu.dot_dimension_numbers<[1], [0], [0], [1], [0, 0, 1, 1], [], []>} : vector<8x41xbf16>, vector<41x160xbf16>, vector<8x160xf32> -> vector<8x160xf32>
    %11 = vector.extract_strided_slice %8 {offsets = [0, 0], sizes = [8, 32], strides = [1, 1]} : vector<8x96xf32> to vector<8x32xf32>
    %12 = arith.truncf %11 : vector<8x32xf32> to vector<8x32xbf16>
    %13 = vector.extract_strided_slice %8 {offsets = [0, 32], sizes = [8, 64], strides = [1, 1]} : vector<8x96xf32> to vector<8x64xf32>
    %14 = arith.truncf %13 : vector<8x64xf32> to vector<8x64xbf16>
    %15 = vector.extract_strided_slice %10 {offsets = [0, 0], sizes = [8, 32], strides = [1, 1]} : vector<8x160xf32> to vector<8x32xf32>
    %16 = arith.truncf %15 : vector<8x32xf32> to vector<8x32xbf16>
    %17 = vector.extract_strided_slice %10 {offsets = [0, 32], sizes = [8, 128], strides = [1, 1]} : vector<8x160xf32> to vector<8x128xf32>
    %c0_7 = arith.constant 0 : index
    %c0_8 = arith.constant 0 : index
    %c0_9 = arith.constant 0 : index
    %18 = vector.load %arg2[%c0_7, %c0_8, %c0_9] : memref<3x8x8xbf16, #tpu.memory_space<vmem>>, vector<3x8x8xbf16>
    %19 = arith.extf %18 : vector<3x8x8xbf16> to vector<3x8x8xf32>
    %20 = tpu.iota {dimensions = array<i32: 0>} : vector<8x8xi32>
    %21 = vector.broadcast %1 : i32 to vector<8x8xi32>
    %22 = arith.addi %21, %20 : vector<8x8xi32>
    %23 = tpu.iota {dimensions = array<i32: 1>} : vector<8x8xi32>
    %24 = arith.cmpi eq, %22, %23 : vector<8x8xi32>
    %cst_10 = arith.constant -1.000000e+09 : f32
    %cst_11 = arith.constant 0.000000e+00 : f32
    %25 = vector.broadcast %cst_10 : f32 to vector<8x8xf32>
    %26 = vector.broadcast %cst_11 : f32 to vector<8x8xf32>
    %27 = arith.select %24, %25, %26 : vector<8x8xi1>, vector<8x8xf32>
    %28 = vector.extract_strided_slice %16 {offsets = [0, 0], sizes = [8, 8], strides = [1, 1]} : vector<8x32xbf16> to vector<8x8xbf16>
    %29 = vector.extract_strided_slice %12 {offsets = [0, 0], sizes = [8, 8], strides = [1, 1]} : vector<8x32xbf16> to vector<8x8xbf16>
    %cst_12 = arith.constant dense<0.000000e+00> : vector<8x8xf32>
    %30 = tpu.matmul %28, %29, %cst_12 {dimension_numbers = #tpu.dot_dimension_numbers<[1], [1], [0], [0], [0, 0, 1, 0], [], []>} : vector<8x8xbf16>, vector<8x8xbf16>, vector<8x8xf32> -> vector<8x8xf32>
    %c0_13 = arith.constant 0 : index
    %c0_14 = arith.constant 0 : index
    %c0_15 = arith.constant 0 : index
    %31 = vector.load %arg3[%c0_13, %c0_14, %c0_15] : memref<4x8x8xbf16, #tpu.memory_space<vmem>>, vector<1x8x8xbf16>
    %32 = vector.shape_cast %31 : vector<1x8x8xbf16> to vector<8x8xbf16>
    %33 = arith.extf %32 : vector<8x8xbf16> to vector<8x8xf32>
    %34 = arith.addf %30, %33 : vector<8x8xf32>
    %35 = arith.addf %34, %27 : vector<8x8xf32>
    %cst_16 = arith.constant dense<0xFF800000> : vector<8xf32>
    %36 = vector.multi_reduction <maximumf>, %35, %cst_16 [1] : vector<8x8xf32> to vector<8xf32>
    %37 = vector.shape_cast %36 : vector<8xf32> to vector<8x1xf32>
    %38 = vector.broadcast %37 : vector<8x1xf32> to vector<8x8xf32>
    %39 = arith.subf %35, %38 : vector<8x8xf32>
    %40 = math.exp %39 : vector<8x8xf32>
    %cst_17 = arith.constant dense<0.000000e+00> : vector<8xf32>
    %41 = vector.multi_reduction <add>, %40, %cst_17 [1] : vector<8x8xf32> to vector<8xf32>
    %42 = vector.shape_cast %41 : vector<8xf32> to vector<8x1xf32>
    %43 = tpu.reciprocal %42 {approx = true} : vector<8x1xf32> -> vector<8x1xf32>
    %44 = vector.broadcast %43 : vector<8x1xf32> to vector<8x8xf32>
    %45 = arith.mulf %40, %44 : vector<8x8xf32>
    %46 = arith.truncf %45 : vector<8x8xf32> to vector<8x8xbf16>
    %47 = vector.extract_strided_slice %19 {offsets = [0, 0, 0], sizes = [1, 8, 8], strides = [1, 1, 1]} : vector<3x8x8xf32> to vector<1x8x8xf32>
    %48 = vector.shape_cast %47 : vector<1x8x8xf32> to vector<8x8xf32>
    %49 = arith.mulf %45, %48 : vector<8x8xf32>
    %50 = arith.truncf %49 : vector<8x8xf32> to vector<8x8xbf16>
    %51 = vector.extract_strided_slice %19 {offsets = [1, 0, 0], sizes = [1, 8, 8], strides = [1, 1, 1]} : vector<3x8x8xf32> to vector<1x8x8xf32>
    %52 = vector.shape_cast %51 : vector<1x8x8xf32> to vector<8x8xf32>
    %53 = arith.mulf %45, %52 : vector<8x8xf32>
    %54 = arith.truncf %53 : vector<8x8xf32> to vector<8x8xbf16>
    %55 = vector.extract_strided_slice %19 {offsets = [2, 0, 0], sizes = [1, 8, 8], strides = [1, 1, 1]} : vector<3x8x8xf32> to vector<1x8x8xf32>
    %56 = vector.shape_cast %55 : vector<1x8x8xf32> to vector<8x8xf32>
    %57 = arith.mulf %45, %56 : vector<8x8xf32>
    %58 = arith.truncf %57 : vector<8x8xf32> to vector<8x8xbf16>
    %59 = tpu.concatenate %46, %50, %54, %58 in 0 : vector<8x8xbf16>, vector<8x8xbf16>, vector<8x8xbf16>, vector<8x8xbf16> -> vector<32x8xbf16>
    %60 = vector.extract_strided_slice %14 {offsets = [0, 0], sizes = [8, 16], strides = [1, 1]} : vector<8x64xbf16> to vector<8x16xbf16>
    %cst_18 = arith.constant dense<0.000000e+00> : vector<32x16xf32>
    %61 = tpu.matmul %59, %60, %cst_18 {dimension_numbers = #tpu.dot_dimension_numbers<[1], [0], [0], [1], [0, 0, 1, 1], [], []>} : vector<32x8xbf16>, vector<8x16xbf16>, vector<32x16xf32> -> vector<32x16xf32>
    %62 = vector.extract_strided_slice %61 {offsets = [0, 0], sizes = [8, 16], strides = [1, 1]} : vector<32x16xf32> to vector<8x16xf32>
    %63 = vector.extract_strided_slice %61 {offsets = [8, 0], sizes = [8, 16], strides = [1, 1]} : vector<32x16xf32> to vector<8x16xf32>
    %64 = vector.extract_strided_slice %61 {offsets = [16, 0], sizes = [8, 16], strides = [1, 1]} : vector<32x16xf32> to vector<8x16xf32>
    %65 = vector.extract_strided_slice %61 {offsets = [24, 0], sizes = [8, 16], strides = [1, 1]} : vector<32x16xf32> to vector<8x16xf32>
    %66 = vector.extract_strided_slice %16 {offsets = [0, 8], sizes = [8, 8], strides = [1, 1]} : vector<8x32xbf16> to vector<8x8xbf16>
    %67 = vector.extract_strided_slice %12 {offsets = [0, 8], sizes = [8, 8], strides = [1, 1]} : vector<8x32xbf16> to vector<8x8xbf16>
    %cst_19 = arith.constant dense<0.000000e+00> : vector<8x8xf32>
    %68 = tpu.matmul %66, %67, %cst_19 {dimension_numbers = #tpu.dot_dimension_numbers<[1], [1], [0], [0], [0, 0, 1, 0], [], []>} : vector<8x8xbf16>, vector<8x8xbf16>, vector<8x8xf32> -> vector<8x8xf32>
    %c1 = arith.constant 1 : index
    %c0_20 = arith.constant 0 : index
    %c0_21 = arith.constant 0 : index
    %69 = vector.load %arg3[%c1, %c0_20, %c0_21] : memref<4x8x8xbf16, #tpu.memory_space<vmem>>, vector<1x8x8xbf16>
    %70 = vector.shape_cast %69 : vector<1x8x8xbf16> to vector<8x8xbf16>
    %71 = arith.extf %70 : vector<8x8xbf16> to vector<8x8xf32>
    %72 = arith.addf %68, %71 : vector<8x8xf32>
    %73 = arith.addf %72, %27 : vector<8x8xf32>
    %cst_22 = arith.constant dense<0xFF800000> : vector<8xf32>
    %74 = vector.multi_reduction <maximumf>, %73, %cst_22 [1] : vector<8x8xf32> to vector<8xf32>
    %75 = vector.shape_cast %74 : vector<8xf32> to vector<8x1xf32>
    %76 = vector.broadcast %75 : vector<8x1xf32> to vector<8x8xf32>
    %77 = arith.subf %73, %76 : vector<8x8xf32>
    %78 = math.exp %77 : vector<8x8xf32>
    %cst_23 = arith.constant dense<0.000000e+00> : vector<8xf32>
    %79 = vector.multi_reduction <add>, %78, %cst_23 [1] : vector<8x8xf32> to vector<8xf32>
    %80 = vector.shape_cast %79 : vector<8xf32> to vector<8x1xf32>
    %81 = tpu.reciprocal %80 {approx = true} : vector<8x1xf32> -> vector<8x1xf32>
    %82 = vector.broadcast %81 : vector<8x1xf32> to vector<8x8xf32>
    %83 = arith.mulf %78, %82 : vector<8x8xf32>
    %84 = arith.truncf %83 : vector<8x8xf32> to vector<8x8xbf16>
    %85 = vector.extract_strided_slice %19 {offsets = [0, 0, 0], sizes = [1, 8, 8], strides = [1, 1, 1]} : vector<3x8x8xf32> to vector<1x8x8xf32>
    %86 = vector.shape_cast %85 : vector<1x8x8xf32> to vector<8x8xf32>
    %87 = arith.mulf %83, %86 : vector<8x8xf32>
    %88 = arith.truncf %87 : vector<8x8xf32> to vector<8x8xbf16>
    %89 = vector.extract_strided_slice %19 {offsets = [1, 0, 0], sizes = [1, 8, 8], strides = [1, 1, 1]} : vector<3x8x8xf32> to vector<1x8x8xf32>
    %90 = vector.shape_cast %89 : vector<1x8x8xf32> to vector<8x8xf32>
    %91 = arith.mulf %83, %90 : vector<8x8xf32>
    %92 = arith.truncf %91 : vector<8x8xf32> to vector<8x8xbf16>
    %93 = vector.extract_strided_slice %19 {offsets = [2, 0, 0], sizes = [1, 8, 8], strides = [1, 1, 1]} : vector<3x8x8xf32> to vector<1x8x8xf32>
    %94 = vector.shape_cast %93 : vector<1x8x8xf32> to vector<8x8xf32>
    %95 = arith.mulf %83, %94 : vector<8x8xf32>
    %96 = arith.truncf %95 : vector<8x8xf32> to vector<8x8xbf16>
    %97 = tpu.concatenate %84, %88, %92, %96 in 0 : vector<8x8xbf16>, vector<8x8xbf16>, vector<8x8xbf16>, vector<8x8xbf16> -> vector<32x8xbf16>
    %98 = vector.extract_strided_slice %14 {offsets = [0, 16], sizes = [8, 16], strides = [1, 1]} : vector<8x64xbf16> to vector<8x16xbf16>
    %cst_24 = arith.constant dense<0.000000e+00> : vector<32x16xf32>
    %99 = tpu.matmul %97, %98, %cst_24 {dimension_numbers = #tpu.dot_dimension_numbers<[1], [0], [0], [1], [0, 0, 1, 1], [], []>} : vector<32x8xbf16>, vector<8x16xbf16>, vector<32x16xf32> -> vector<32x16xf32>
    %100 = vector.extract_strided_slice %99 {offsets = [0, 0], sizes = [8, 16], strides = [1, 1]} : vector<32x16xf32> to vector<8x16xf32>
    %101 = vector.extract_strided_slice %99 {offsets = [8, 0], sizes = [8, 16], strides = [1, 1]} : vector<32x16xf32> to vector<8x16xf32>
    %102 = vector.extract_strided_slice %99 {offsets = [16, 0], sizes = [8, 16], strides = [1, 1]} : vector<32x16xf32> to vector<8x16xf32>
    %103 = vector.extract_strided_slice %99 {offsets = [24, 0], sizes = [8, 16], strides = [1, 1]} : vector<32x16xf32> to vector<8x16xf32>
    %104 = vector.extract_strided_slice %16 {offsets = [0, 16], sizes = [8, 8], strides = [1, 1]} : vector<8x32xbf16> to vector<8x8xbf16>
    %105 = vector.extract_strided_slice %12 {offsets = [0, 16], sizes = [8, 8], strides = [1, 1]} : vector<8x32xbf16> to vector<8x8xbf16>
    %cst_25 = arith.constant dense<0.000000e+00> : vector<8x8xf32>
    %106 = tpu.matmul %104, %105, %cst_25 {dimension_numbers = #tpu.dot_dimension_numbers<[1], [1], [0], [0], [0, 0, 1, 0], [], []>} : vector<8x8xbf16>, vector<8x8xbf16>, vector<8x8xf32> -> vector<8x8xf32>
    %c2 = arith.constant 2 : index
    %c0_26 = arith.constant 0 : index
    %c0_27 = arith.constant 0 : index
    %107 = vector.load %arg3[%c2, %c0_26, %c0_27] : memref<4x8x8xbf16, #tpu.memory_space<vmem>>, vector<1x8x8xbf16>
    %108 = vector.shape_cast %107 : vector<1x8x8xbf16> to vector<8x8xbf16>
    %109 = arith.extf %108 : vector<8x8xbf16> to vector<8x8xf32>
    %110 = arith.addf %106, %109 : vector<8x8xf32>
    %111 = arith.addf %110, %27 : vector<8x8xf32>
    %cst_28 = arith.constant dense<0xFF800000> : vector<8xf32>
    %112 = vector.multi_reduction <maximumf>, %111, %cst_28 [1] : vector<8x8xf32> to vector<8xf32>
    %113 = vector.shape_cast %112 : vector<8xf32> to vector<8x1xf32>
    %114 = vector.broadcast %113 : vector<8x1xf32> to vector<8x8xf32>
    %115 = arith.subf %111, %114 : vector<8x8xf32>
    %116 = math.exp %115 : vector<8x8xf32>
    %cst_29 = arith.constant dense<0.000000e+00> : vector<8xf32>
    %117 = vector.multi_reduction <add>, %116, %cst_29 [1] : vector<8x8xf32> to vector<8xf32>
    %118 = vector.shape_cast %117 : vector<8xf32> to vector<8x1xf32>
    %119 = tpu.reciprocal %118 {approx = true} : vector<8x1xf32> -> vector<8x1xf32>
    %120 = vector.broadcast %119 : vector<8x1xf32> to vector<8x8xf32>
    %121 = arith.mulf %116, %120 : vector<8x8xf32>
    %122 = arith.truncf %121 : vector<8x8xf32> to vector<8x8xbf16>
    %123 = vector.extract_strided_slice %19 {offsets = [0, 0, 0], sizes = [1, 8, 8], strides = [1, 1, 1]} : vector<3x8x8xf32> to vector<1x8x8xf32>
    %124 = vector.shape_cast %123 : vector<1x8x8xf32> to vector<8x8xf32>
    %125 = arith.mulf %121, %124 : vector<8x8xf32>
    %126 = arith.truncf %125 : vector<8x8xf32> to vector<8x8xbf16>
    %127 = vector.extract_strided_slice %19 {offsets = [1, 0, 0], sizes = [1, 8, 8], strides = [1, 1, 1]} : vector<3x8x8xf32> to vector<1x8x8xf32>
    %128 = vector.shape_cast %127 : vector<1x8x8xf32> to vector<8x8xf32>
    %129 = arith.mulf %121, %128 : vector<8x8xf32>
    %130 = arith.truncf %129 : vector<8x8xf32> to vector<8x8xbf16>
    %131 = vector.extract_strided_slice %19 {offsets = [2, 0, 0], sizes = [1, 8, 8], strides = [1, 1, 1]} : vector<3x8x8xf32> to vector<1x8x8xf32>
    %132 = vector.shape_cast %131 : vector<1x8x8xf32> to vector<8x8xf32>
    %133 = arith.mulf %121, %132 : vector<8x8xf32>
    %134 = arith.truncf %133 : vector<8x8xf32> to vector<8x8xbf16>
    %135 = tpu.concatenate %122, %126, %130, %134 in 0 : vector<8x8xbf16>, vector<8x8xbf16>, vector<8x8xbf16>, vector<8x8xbf16> -> vector<32x8xbf16>
    %136 = vector.extract_strided_slice %14 {offsets = [0, 32], sizes = [8, 16], strides = [1, 1]} : vector<8x64xbf16> to vector<8x16xbf16>
    %cst_30 = arith.constant dense<0.000000e+00> : vector<32x16xf32>
    %137 = tpu.matmul %135, %136, %cst_30 {dimension_numbers = #tpu.dot_dimension_numbers<[1], [0], [0], [1], [0, 0, 1, 1], [], []>} : vector<32x8xbf16>, vector<8x16xbf16>, vector<32x16xf32> -> vector<32x16xf32>
    %138 = vector.extract_strided_slice %137 {offsets = [0, 0], sizes = [8, 16], strides = [1, 1]} : vector<32x16xf32> to vector<8x16xf32>
    %139 = vector.extract_strided_slice %137 {offsets = [8, 0], sizes = [8, 16], strides = [1, 1]} : vector<32x16xf32> to vector<8x16xf32>
    %140 = vector.extract_strided_slice %137 {offsets = [16, 0], sizes = [8, 16], strides = [1, 1]} : vector<32x16xf32> to vector<8x16xf32>
    %141 = vector.extract_strided_slice %137 {offsets = [24, 0], sizes = [8, 16], strides = [1, 1]} : vector<32x16xf32> to vector<8x16xf32>
    %142 = vector.extract_strided_slice %16 {offsets = [0, 24], sizes = [8, 8], strides = [1, 1]} : vector<8x32xbf16> to vector<8x8xbf16>
    %143 = vector.extract_strided_slice %12 {offsets = [0, 24], sizes = [8, 8], strides = [1, 1]} : vector<8x32xbf16> to vector<8x8xbf16>
    %cst_31 = arith.constant dense<0.000000e+00> : vector<8x8xf32>
    %144 = tpu.matmul %142, %143, %cst_31 {dimension_numbers = #tpu.dot_dimension_numbers<[1], [1], [0], [0], [0, 0, 1, 0], [], []>} : vector<8x8xbf16>, vector<8x8xbf16>, vector<8x8xf32> -> vector<8x8xf32>
    %c3 = arith.constant 3 : index
    %c0_32 = arith.constant 0 : index
    %c0_33 = arith.constant 0 : index
    %145 = vector.load %arg3[%c3, %c0_32, %c0_33] : memref<4x8x8xbf16, #tpu.memory_space<vmem>>, vector<1x8x8xbf16>
    %146 = vector.shape_cast %145 : vector<1x8x8xbf16> to vector<8x8xbf16>
    %147 = arith.extf %146 : vector<8x8xbf16> to vector<8x8xf32>
    %148 = arith.addf %144, %147 : vector<8x8xf32>
    %149 = arith.addf %148, %27 : vector<8x8xf32>
    %cst_34 = arith.constant dense<0xFF800000> : vector<8xf32>
    %150 = vector.multi_reduction <maximumf>, %149, %cst_34 [1] : vector<8x8xf32> to vector<8xf32>
    %151 = vector.shape_cast %150 : vector<8xf32> to vector<8x1xf32>
    %152 = vector.broadcast %151 : vector<8x1xf32> to vector<8x8xf32>
    %153 = arith.subf %149, %152 : vector<8x8xf32>
    %154 = math.exp %153 : vector<8x8xf32>
    %cst_35 = arith.constant dense<0.000000e+00> : vector<8xf32>
    %155 = vector.multi_reduction <add>, %154, %cst_35 [1] : vector<8x8xf32> to vector<8xf32>
    %156 = vector.shape_cast %155 : vector<8xf32> to vector<8x1xf32>
    %157 = tpu.reciprocal %156 {approx = true} : vector<8x1xf32> -> vector<8x1xf32>
    %158 = vector.broadcast %157 : vector<8x1xf32> to vector<8x8xf32>
    %159 = arith.mulf %154, %158 : vector<8x8xf32>
    %160 = arith.truncf %159 : vector<8x8xf32> to vector<8x8xbf16>
    %161 = vector.extract_strided_slice %19 {offsets = [0, 0, 0], sizes = [1, 8, 8], strides = [1, 1, 1]} : vector<3x8x8xf32> to vector<1x8x8xf32>
    %162 = vector.shape_cast %161 : vector<1x8x8xf32> to vector<8x8xf32>
    %163 = arith.mulf %159, %162 : vector<8x8xf32>
    %164 = arith.truncf %163 : vector<8x8xf32> to vector<8x8xbf16>
    %165 = vector.extract_strided_slice %19 {offsets = [1, 0, 0], sizes = [1, 8, 8], strides = [1, 1, 1]} : vector<3x8x8xf32> to vector<1x8x8xf32>
    %166 = vector.shape_cast %165 : vector<1x8x8xf32> to vector<8x8xf32>
    %167 = arith.mulf %159, %166 : vector<8x8xf32>
    %168 = arith.truncf %167 : vector<8x8xf32> to vector<8x8xbf16>
    %169 = vector.extract_strided_slice %19 {offsets = [2, 0, 0], sizes = [1, 8, 8], strides = [1, 1, 1]} : vector<3x8x8xf32> to vector<1x8x8xf32>
    %170 = vector.shape_cast %169 : vector<1x8x8xf32> to vector<8x8xf32>
    %171 = arith.mulf %159, %170 : vector<8x8xf32>
    %172 = arith.truncf %171 : vector<8x8xf32> to vector<8x8xbf16>
    %173 = tpu.concatenate %160, %164, %168, %172 in 0 : vector<8x8xbf16>, vector<8x8xbf16>, vector<8x8xbf16>, vector<8x8xbf16> -> vector<32x8xbf16>
    %174 = vector.extract_strided_slice %14 {offsets = [0, 48], sizes = [8, 16], strides = [1, 1]} : vector<8x64xbf16> to vector<8x16xbf16>
    %cst_36 = arith.constant dense<0.000000e+00> : vector<32x16xf32>
    %175 = tpu.matmul %173, %174, %cst_36 {dimension_numbers = #tpu.dot_dimension_numbers<[1], [0], [0], [1], [0, 0, 1, 1], [], []>} : vector<32x8xbf16>, vector<8x16xbf16>, vector<32x16xf32> -> vector<32x16xf32>
    %176 = vector.extract_strided_slice %175 {offsets = [0, 0], sizes = [8, 16], strides = [1, 1]} : vector<32x16xf32> to vector<8x16xf32>
    %177 = vector.extract_strided_slice %175 {offsets = [8, 0], sizes = [8, 16], strides = [1, 1]} : vector<32x16xf32> to vector<8x16xf32>
    %178 = vector.extract_strided_slice %175 {offsets = [16, 0], sizes = [8, 16], strides = [1, 1]} : vector<32x16xf32> to vector<8x16xf32>
    %179 = vector.extract_strided_slice %175 {offsets = [24, 0], sizes = [8, 16], strides = [1, 1]} : vector<32x16xf32> to vector<8x16xf32>
    %180 = tpu.concatenate %62, %63, %64, %65, %100, %101, %102, %103, %138, %139, %140, %141, %176, %177, %178, %179 in 1 : vector<8x16xf32>, vector<8x16xf32>, vector<8x16xf32>, vector<8x16xf32>, vector<8x16xf32>, vector<8x16xf32>, vector<8x16xf32>, vector<8x16xf32>, vector<8x16xf32>, vector<8x16xf32>, vector<8x16xf32>, vector<8x16xf32>, vector<8x16xf32>, vector<8x16xf32>, vector<8x16xf32>, vector<8x16xf32> -> vector<8x256xf32>
    %181 = arith.truncf %180 : vector<8x256xf32> to vector<8x256xbf16>
    %c0_37 = arith.constant 0 : index
    %c0_38 = arith.constant 0 : index
    %182 = vector.load %arg6[%c0_37, %c0_38] : memref<256x128xbf16, #tpu.memory_space<vmem>>, vector<256x128xbf16>
    %cst_39 = arith.constant dense<0.000000e+00> : vector<8x128xf32>
    %183 = tpu.matmul %181, %182, %cst_39 {dimension_numbers = #tpu.dot_dimension_numbers<[1], [0], [0], [1], [0, 0, 1, 1], [], []>} : vector<8x256xbf16>, vector<256x128xbf16>, vector<8x128xf32> -> vector<8x128xf32>
    %184 = arith.addf %183, %17 : vector<8x128xf32>
    %c0_40 = arith.constant 0 : index
    %c0_41 = arith.constant 0 : index
    %185 = vector.load %arg7[%c0_40, %c0_41] : memref<8x128xf32, #tpu.memory_space<vmem>>, vector<1x128xf32>
    %186 = vector.broadcast %185 : vector<1x128xf32> to vector<8x128xf32>
    %187 = arith.addf %184, %186 : vector<8x128xf32>
    %c1_42 = arith.constant 1 : index
    %c0_43 = arith.constant 0 : index
    %188 = vector.load %arg7[%c1_42, %c0_43] : memref<8x128xf32, #tpu.memory_space<vmem>>, vector<1x32xf32>
    %c2_44 = arith.constant 2 : index
    %c0_45 = arith.constant 0 : index
    %189 = vector.load %arg7[%c2_44, %c0_45] : memref<8x128xf32, #tpu.memory_space<vmem>>, vector<1x32xf32>
    %c3_46 = arith.constant 3 : index
    %c0_47 = arith.constant 0 : index
    %190 = vector.load %arg7[%c3_46, %c0_47] : memref<8x128xf32, #tpu.memory_space<vmem>>, vector<1x32xf32>
    %c4 = arith.constant 4 : index
    %c0_48 = arith.constant 0 : index
    %191 = vector.load %arg7[%c4, %c0_48] : memref<8x128xf32, #tpu.memory_space<vmem>>, vector<1x32xf32>
    %192 = vector.extract_strided_slice %187 {offsets = [0, 0], sizes = [8, 32], strides = [1, 1]} : vector<8x128xf32> to vector<8x32xf32>
    %cst_49 = arith.constant 0.000000e+00 : f32
    %193 = vector.broadcast %cst_49 : f32 to vector<8x32xf32>
    %194 = arith.cmpf ogt, %192, %193 : vector<8x32xf32>
    %cst_50 = arith.constant 0.000000e+00 : f32
    %195 = vector.broadcast %cst_50 : f32 to vector<8x32xf32>
    %196 = arith.cmpf olt, %192, %195 : vector<8x32xf32>
    %cst_51 = arith.constant -1.000000e+00 : f32
    %cst_52 = arith.constant 0.000000e+00 : f32
    %197 = vector.broadcast %cst_51 : f32 to vector<8x32xf32>
    %198 = vector.broadcast %cst_52 : f32 to vector<8x32xf32>
    %199 = arith.select %196, %197, %198 : vector<8x32xi1>, vector<8x32xf32>
    %cst_53 = arith.constant 1.000000e+00 : f32
    %200 = vector.broadcast %cst_53 : f32 to vector<8x32xf32>
    %201 = arith.select %194, %200, %199 : vector<8x32xi1>, vector<8x32xf32>
    %202 = math.absf %192 : vector<8x32xf32>
    %cst_54 = arith.constant dense<0.000000e+00> : vector<8xf32>
    %203 = vector.multi_reduction <add>, %202, %cst_54 [1] : vector<8x32xf32> to vector<8xf32>
    %204 = vector.shape_cast %203 : vector<8xf32> to vector<8x1xf32>
    %cst_55 = arith.constant 3.200000e+01 : f32
    %205 = vector.broadcast %cst_55 : f32 to vector<8x1xf32>
    %206 = arith.divf %204, %205 : vector<8x1xf32>
    %207 = vector.broadcast %206 : vector<8x1xf32> to vector<8x32xf32>
    %208 = arith.subf %202, %207 : vector<8x32xf32>
    %209 = arith.mulf %208, %208 : vector<8x32xf32>
    %cst_56 = arith.constant dense<0.000000e+00> : vector<8xf32>
    %210 = vector.multi_reduction <add>, %209, %cst_56 [1] : vector<8x32xf32> to vector<8xf32>
    %211 = vector.shape_cast %210 : vector<8xf32> to vector<8x1xf32>
    %cst_57 = arith.constant 3.200000e+01 : f32
    %212 = vector.broadcast %cst_57 : f32 to vector<8x1xf32>
    %213 = arith.divf %211, %212 : vector<8x1xf32>
    %cst_58 = arith.constant 9.99999974E-6 : f32
    %214 = vector.broadcast %cst_58 : f32 to vector<8x1xf32>
    %215 = arith.addf %213, %214 : vector<8x1xf32>
    %216 = math.rsqrt %215 : vector<8x1xf32>
    %217 = vector.broadcast %216 : vector<8x1xf32> to vector<8x32xf32>
    %218 = arith.mulf %208, %217 : vector<8x32xf32>
    %219 = vector.broadcast %188 : vector<1x32xf32> to vector<8x32xf32>
    %220 = arith.mulf %218, %219 : vector<8x32xf32>
    %221 = vector.broadcast %189 : vector<1x32xf32> to vector<8x32xf32>
    %222 = arith.addf %220, %221 : vector<8x32xf32>
    %cst_59 = arith.constant 0.000000e+00 : f32
    %223 = vector.broadcast %cst_59 : f32 to vector<8x32xf32>
    %224 = arith.maximumf %222, %223 : vector<8x32xf32>
    %225 = arith.mulf %201, %224 : vector<8x32xf32>
    %226 = vector.extract_strided_slice %187 {offsets = [0, 32], sizes = [8, 32], strides = [1, 1]} : vector<8x128xf32> to vector<8x32xf32>
    %227 = vector.extract_strided_slice %187 {offsets = [0, 64], sizes = [8, 32], strides = [1, 1]} : vector<8x128xf32> to vector<8x32xf32>
    %228 = vector.extract_strided_slice %187 {offsets = [0, 96], sizes = [8, 32], strides = [1, 1]} : vector<8x128xf32> to vector<8x32xf32>
    %229 = arith.mulf %226, %226 : vector<8x32xf32>
    %230 = arith.mulf %227, %227 : vector<8x32xf32>
    %231 = arith.addf %229, %230 : vector<8x32xf32>
    %232 = arith.mulf %228, %228 : vector<8x32xf32>
    %233 = arith.addf %231, %232 : vector<8x32xf32>
    %cst_60 = arith.constant 9.99999997E-7 : f32
    %234 = vector.broadcast %cst_60 : f32 to vector<8x32xf32>
    %235 = arith.addf %233, %234 : vector<8x32xf32>
    %236 = math.sqrt %235 : vector<8x32xf32>
    %cst_61 = arith.constant dense<0.000000e+00> : vector<8xf32>
    %237 = vector.multi_reduction <add>, %236, %cst_61 [1] : vector<8x32xf32> to vector<8xf32>
    %238 = vector.shape_cast %237 : vector<8xf32> to vector<8x1xf32>
    %cst_62 = arith.constant 3.200000e+01 : f32
    %239 = vector.broadcast %cst_62 : f32 to vector<8x1xf32>
    %240 = arith.divf %238, %239 : vector<8x1xf32>
    %241 = vector.broadcast %240 : vector<8x1xf32> to vector<8x32xf32>
    %242 = arith.subf %236, %241 : vector<8x32xf32>
    %243 = arith.mulf %242, %242 : vector<8x32xf32>
    %cst_63 = arith.constant dense<0.000000e+00> : vector<8xf32>
    %244 = vector.multi_reduction <add>, %243, %cst_63 [1] : vector<8x32xf32> to vector<8xf32>
    %245 = vector.shape_cast %244 : vector<8xf32> to vector<8x1xf32>
    %cst_64 = arith.constant 3.200000e+01 : f32
    %246 = vector.broadcast %cst_64 : f32 to vector<8x1xf32>
    %247 = arith.divf %245, %246 : vector<8x1xf32>
    %cst_65 = arith.constant 9.99999974E-6 : f32
    %248 = vector.broadcast %cst_65 : f32 to vector<8x1xf32>
    %249 = arith.addf %247, %248 : vector<8x1xf32>
    %250 = math.rsqrt %249 : vector<8x1xf32>
    %251 = vector.broadcast %250 : vector<8x1xf32> to vector<8x32xf32>
    %252 = arith.mulf %242, %251 : vector<8x32xf32>
    %253 = vector.broadcast %190 : vector<1x32xf32> to vector<8x32xf32>
    %254 = arith.mulf %252, %253 : vector<8x32xf32>
    %255 = vector.broadcast %191 : vector<1x32xf32> to vector<8x32xf32>
    %256 = arith.addf %254, %255 : vector<8x32xf32>
    %cst_66 = arith.constant 0.000000e+00 : f32
    %257 = vector.broadcast %cst_66 : f32 to vector<8x32xf32>
    %258 = arith.maximumf %256, %257 : vector<8x32xf32>
    %cst_67 = arith.constant 9.99999997E-7 : f32
    %259 = vector.broadcast %cst_67 : f32 to vector<8x32xf32>
    %260 = arith.addf %236, %259 : vector<8x32xf32>
    %261 = arith.divf %258, %260 : vector<8x32xf32>
    %262 = arith.mulf %226, %261 : vector<8x32xf32>
    %263 = arith.mulf %227, %261 : vector<8x32xf32>
    %264 = arith.mulf %228, %261 : vector<8x32xf32>
    %265 = tpu.concatenate %225, %262, %263, %264 in 1 : vector<8x32xf32>, vector<8x32xf32>, vector<8x32xf32>, vector<8x32xf32> -> vector<8x128xf32>
    %c0_68 = arith.constant 0 : index
    %c0_69 = arith.constant 0 : index
    %266 = vector.load %arg8[%c0_68, %c0_69] : memref<8x128xf32, #tpu.memory_space<vmem>>, vector<8x128xf32>
    tpu.vector_store %arg8[%c0_68, %c0_69], %265 {strides = array<i32>} : memref<8x128xf32, #tpu.memory_space<vmem>>, vector<8x128xf32>,
    return
  }
  func.func @transform_0(%arg0: i32) -> (i32, i32) {
    %c0_i32 = arith.constant 0 : i32
    %c0_i32_0 = arith.constant 0 : i32
    %c0_i32_1 = arith.constant 0 : i32
    return %c0_i32, %c0_i32_0 : i32, i32
  }
  func.func @transform_1(%arg0: i32) -> (i32, i32, i32) {
    %c0_i32 = arith.constant 0 : i32
    %c0_i32_0 = arith.constant 0 : i32
    %c0_i32_1 = arith.constant 0 : i32
    return %c0_i32, %arg0, %c0_i32_0 : i32, i32, i32
  }
  func.func @transform_2(%arg0: i32) -> (i32, i32, i32) {
    %c0_i32 = arith.constant 0 : i32
    %c0_i32_0 = arith.constant 0 : i32
    %c0_i32_1 = arith.constant 0 : i32
    return %c0_i32, %arg0, %c0_i32_0 : i32, i32, i32
  }
  func.func @transform_3(%arg0: i32) -> (i32, i32) {
    %c0_i32 = arith.constant 0 : i32
    %c0_i32_0 = arith.constant 0 : i32
    %c0_i32_1 = arith.constant 0 : i32
    return %c0_i32, %c0_i32_0 : i32, i32
  }
  func.func @transform_4(%arg0: i32) -> (i32, i32) {
    %c0_i32 = arith.constant 0 : i32
    %c0_i32_0 = arith.constant 0 : i32
    %c0_i32_1 = arith.constant 0 : i32
    return %c0_i32, %c0_i32_0 : i32, i32
  }
  func.func @transform_5(%arg0: i32) -> (i32, i32) {
    %c0_i32 = arith.constant 0 : i32
    %c0_i32_0 = arith.constant 0 : i32
    %c0_i32_1 = arith.constant 0 : i32
    return %c0_i32, %c0_i32_0 : i32, i32
  }
  func.func @transform_6(%arg0: i32) -> (i32, i32) {
    %c0_i32 = arith.constant 0 : i32
    %c0_i32_0 = arith.constant 0 : i32
    %c0_i32_1 = arith.constant 0 : i32
    return %c0_i32, %c0_i32_0 : i32, i32
  }
  func.func @transform_7(%arg0: i32) -> (i32, i32) {
    %c0_i32 = arith.constant 0 : i32
    %c0_i32_0 = arith.constant 0 : i32
    return %arg0, %c0_i32 : i32, i32
  }
}

module attributes {stable_mosaic.version = 11 : i64} {
  func.func @_se3_layer_kernel(%arg0: i32, %arg1: memref<8x128xf32, #tpu.memory_space<vmem>>, %arg2: memref<3x8x8xbf16, #tpu.memory_space<vmem>>, %arg3: memref<4x8x8xbf16, #tpu.memory_space<vmem>>, %arg4: memref<128x96xbf16, #tpu.memory_space<vmem>>, %arg5: memref<128x160xbf16, #tpu.memory_space<vmem>>, %arg6: memref<256x128xbf16, #tpu.memory_space<vmem>>, %arg7: memref<8x128xf32, #tpu.memory_space<vmem>>, %arg8: memref<128x38xbf16, #tpu.memory_space<vmem>>, %arg9: memref<8x38xf32, #tpu.memory_space<vmem>>) attributes {dimension_semantics = [#tpu.dimension_semantics<parallel>], iteration_bounds = array<i64: 1>, scalar_prefetch = 0 : i64, scratch_operands = 0 : i64, tpu.core_type = #tpu.core_type<tc>, window_params = [{pipeline_mode = #tpu.pipeline_mode<synchronous>, transform_indices = @transform_0, window_bounds = array<i64: 8, 128>}, {transform_indices = @transform_1, window_bounds = array<i64: 3, 8, 8>}, {transform_indices = @transform_2, window_bounds = array<i64: 4, 8, 8>}, {pipeline_mode = #tpu.pipeline_mode<synchronous>, transform_indices = @transform_3, window_bounds = array<i64: 128, 96>}, {pipeline_mode = #tpu.pipeline_mode<synchronous>, transform_indices = @transform_4, window_bounds = array<i64: 128, 160>}, {pipeline_mode = #tpu.pipeline_mode<synchronous>, transform_indices = @transform_5, window_bounds = array<i64: 256, 128>}, {pipeline_mode = #tpu.pipeline_mode<synchronous>, transform_indices = @transform_6, window_bounds = array<i64: 8, 128>}, {pipeline_mode = #tpu.pipeline_mode<synchronous>, transform_indices = @transform_7, window_bounds = array<i64: 128, 38>}, {transform_indices = @transform_8, window_bounds = array<i64: 8, 38>}]} {
    %c8_i32 = arith.constant 8 : i32
    %0 = arith.muli %arg0, %c8_i32 : i32
    %1 = tpu.assume_multiple %0, 8 : i32
    %c0 = arith.constant 0 : index
    %c0_0 = arith.constant 0 : index
    %2 = vector.load %arg1[%c0, %c0_0] : memref<8x128xf32, #tpu.memory_space<vmem>>, vector<8x128xf32>
    %3 = arith.truncf %2 : vector<8x128xf32> to vector<8x128xbf16>
    %4 = arith.index_cast %1 : i32 to index
    %c0_1 = arith.constant 0 : index
    %5 = vector.load %arg1[%4, %c0_1] : memref<8x128xf32, #tpu.memory_space<vmem>>, vector<8x128xf32>
    %6 = arith.truncf %5 : vector<8x128xf32> to vector<8x128xbf16>
    %c0_2 = arith.constant 0 : index
    %c0_3 = arith.constant 0 : index
    %7 = vector.load %arg4[%c0_2, %c0_3] : memref<128x96xbf16, #tpu.memory_space<vmem>>, vector<128x96xbf16>
    %cst = arith.constant dense<0.000000e+00> : vector<8x96xf32>
    %8 = tpu.matmul %3, %7, %cst {dimension_numbers = #tpu.dot_dimension_numbers<[1], [0], [0], [1], [0, 0, 1, 1], [], []>} : vector<8x128xbf16>, vector<128x96xbf16>, vector<8x96xf32> -> vector<8x96xf32>
    %c0_4 = arith.constant 0 : index
    %c0_5 = arith.constant 0 : index
    %9 = vector.load %arg5[%c0_4, %c0_5] : memref<128x160xbf16, #tpu.memory_space<vmem>>, vector<128x160xbf16>
    %cst_6 = arith.constant dense<0.000000e+00> : vector<8x160xf32>
    %10 = tpu.matmul %6, %9, %cst_6 {dimension_numbers = #tpu.dot_dimension_numbers<[1], [0], [0], [1], [0, 0, 1, 1], [], []>} : vector<8x128xbf16>, vector<128x160xbf16>, vector<8x160xf32> -> vector<8x160xf32>
    %11 = vector.extract_strided_slice %8 {offsets = [0, 0], sizes = [8, 32], strides = [1, 1]} : vector<8x96xf32> to vector<8x32xf32>
    %12 = arith.truncf %11 : vector<8x32xf32> to vector<8x32xbf16>
    %13 = vector.extract_strided_slice %8 {offsets = [0, 32], sizes = [8, 64], strides = [1, 1]} : vector<8x96xf32> to vector<8x64xf32>
    %14 = arith.truncf %13 : vector<8x64xf32> to vector<8x64xbf16>
    %15 = vector.extract_strided_slice %10 {offsets = [0, 0], sizes = [8, 32], strides = [1, 1]} : vector<8x160xf32> to vector<8x32xf32>
    %16 = arith.truncf %15 : vector<8x32xf32> to vector<8x32xbf16>
    %17 = vector.extract_strided_slice %10 {offsets = [0, 32], sizes = [8, 128], strides = [1, 1]} : vector<8x160xf32> to vector<8x128xf32>
    %c0_7 = arith.constant 0 : index
    %c0_8 = arith.constant 0 : index
    %c0_9 = arith.constant 0 : index
    %18 = vector.load %arg2[%c0_7, %c0_8, %c0_9] : memref<3x8x8xbf16, #tpu.memory_space<vmem>>, vector<3x8x8xbf16>
    %19 = arith.extf %18 : vector<3x8x8xbf16> to vector<3x8x8xf32>
    %20 = tpu.iota {dimensions = array<i32: 0>} : vector<8x8xi32>
    %21 = vector.broadcast %1 : i32 to vector<8x8xi32>
    %22 = arith.addi %21, %20 : vector<8x8xi32>
    %23 = tpu.iota {dimensions = array<i32: 1>} : vector<8x8xi32>
    %24 = arith.cmpi eq, %22, %23 : vector<8x8xi32>
    %cst_10 = arith.constant -1.000000e+09 : f32
    %cst_11 = arith.constant 0.000000e+00 : f32
    %25 = vector.broadcast %cst_10 : f32 to vector<8x8xf32>
    %26 = vector.broadcast %cst_11 : f32 to vector<8x8xf32>
    %27 = arith.select %24, %25, %26 : vector<8x8xi1>, vector<8x8xf32>
    %28 = vector.extract_strided_slice %16 {offsets = [0, 0], sizes = [8, 8], strides = [1, 1]} : vector<8x32xbf16> to vector<8x8xbf16>
    %29 = vector.extract_strided_slice %12 {offsets = [0, 0], sizes = [8, 8], strides = [1, 1]} : vector<8x32xbf16> to vector<8x8xbf16>
    %cst_12 = arith.constant dense<0.000000e+00> : vector<8x8xf32>
    %30 = tpu.matmul %28, %29, %cst_12 {dimension_numbers = #tpu.dot_dimension_numbers<[1], [1], [0], [0], [0, 0, 1, 0], [], []>} : vector<8x8xbf16>, vector<8x8xbf16>, vector<8x8xf32> -> vector<8x8xf32>
    %c0_13 = arith.constant 0 : index
    %c0_14 = arith.constant 0 : index
    %c0_15 = arith.constant 0 : index
    %31 = vector.load %arg3[%c0_13, %c0_14, %c0_15] : memref<4x8x8xbf16, #tpu.memory_space<vmem>>, vector<1x8x8xbf16>
    %32 = vector.shape_cast %31 : vector<1x8x8xbf16> to vector<8x8xbf16>
    %33 = arith.extf %32 : vector<8x8xbf16> to vector<8x8xf32>
    %34 = arith.addf %30, %33 : vector<8x8xf32>
    %35 = arith.addf %34, %27 : vector<8x8xf32>
    %cst_16 = arith.constant dense<0xFF800000> : vector<8xf32>
    %36 = vector.multi_reduction <maximumf>, %35, %cst_16 [1] : vector<8x8xf32> to vector<8xf32>
    %37 = vector.shape_cast %36 : vector<8xf32> to vector<8x1xf32>
    %38 = vector.broadcast %37 : vector<8x1xf32> to vector<8x8xf32>
    %39 = arith.subf %35, %38 : vector<8x8xf32>
    %40 = math.exp %39 : vector<8x8xf32>
    %cst_17 = arith.constant dense<0.000000e+00> : vector<8xf32>
    %41 = vector.multi_reduction <add>, %40, %cst_17 [1] : vector<8x8xf32> to vector<8xf32>
    %42 = vector.shape_cast %41 : vector<8xf32> to vector<8x1xf32>
    %43 = tpu.reciprocal %42 {approx = true} : vector<8x1xf32> -> vector<8x1xf32>
    %44 = vector.broadcast %43 : vector<8x1xf32> to vector<8x8xf32>
    %45 = arith.mulf %40, %44 : vector<8x8xf32>
    %46 = arith.truncf %45 : vector<8x8xf32> to vector<8x8xbf16>
    %47 = vector.extract_strided_slice %19 {offsets = [0, 0, 0], sizes = [1, 8, 8], strides = [1, 1, 1]} : vector<3x8x8xf32> to vector<1x8x8xf32>
    %48 = vector.shape_cast %47 : vector<1x8x8xf32> to vector<8x8xf32>
    %49 = arith.mulf %45, %48 : vector<8x8xf32>
    %50 = arith.truncf %49 : vector<8x8xf32> to vector<8x8xbf16>
    %51 = vector.extract_strided_slice %19 {offsets = [1, 0, 0], sizes = [1, 8, 8], strides = [1, 1, 1]} : vector<3x8x8xf32> to vector<1x8x8xf32>
    %52 = vector.shape_cast %51 : vector<1x8x8xf32> to vector<8x8xf32>
    %53 = arith.mulf %45, %52 : vector<8x8xf32>
    %54 = arith.truncf %53 : vector<8x8xf32> to vector<8x8xbf16>
    %55 = vector.extract_strided_slice %19 {offsets = [2, 0, 0], sizes = [1, 8, 8], strides = [1, 1, 1]} : vector<3x8x8xf32> to vector<1x8x8xf32>
    %56 = vector.shape_cast %55 : vector<1x8x8xf32> to vector<8x8xf32>
    %57 = arith.mulf %45, %56 : vector<8x8xf32>
    %58 = arith.truncf %57 : vector<8x8xf32> to vector<8x8xbf16>
    %59 = tpu.concatenate %46, %50, %54, %58 in 0 : vector<8x8xbf16>, vector<8x8xbf16>, vector<8x8xbf16>, vector<8x8xbf16> -> vector<32x8xbf16>
    %60 = vector.extract_strided_slice %14 {offsets = [0, 0], sizes = [8, 16], strides = [1, 1]} : vector<8x64xbf16> to vector<8x16xbf16>
    %cst_18 = arith.constant dense<0.000000e+00> : vector<32x16xf32>
    %61 = tpu.matmul %59, %60, %cst_18 {dimension_numbers = #tpu.dot_dimension_numbers<[1], [0], [0], [1], [0, 0, 1, 1], [], []>} : vector<32x8xbf16>, vector<8x16xbf16>, vector<32x16xf32> -> vector<32x16xf32>
    %62 = vector.extract_strided_slice %61 {offsets = [0, 0], sizes = [8, 16], strides = [1, 1]} : vector<32x16xf32> to vector<8x16xf32>
    %63 = vector.extract_strided_slice %61 {offsets = [8, 0], sizes = [8, 16], strides = [1, 1]} : vector<32x16xf32> to vector<8x16xf32>
    %64 = vector.extract_strided_slice %61 {offsets = [16, 0], sizes = [8, 16], strides = [1, 1]} : vector<32x16xf32> to vector<8x16xf32>
    %65 = vector.extract_strided_slice %61 {offsets = [24, 0], sizes = [8, 16], strides = [1, 1]} : vector<32x16xf32> to vector<8x16xf32>
    %66 = vector.extract_strided_slice %16 {offsets = [0, 8], sizes = [8, 8], strides = [1, 1]} : vector<8x32xbf16> to vector<8x8xbf16>
    %67 = vector.extract_strided_slice %12 {offsets = [0, 8], sizes = [8, 8], strides = [1, 1]} : vector<8x32xbf16> to vector<8x8xbf16>
    %cst_19 = arith.constant dense<0.000000e+00> : vector<8x8xf32>
    %68 = tpu.matmul %66, %67, %cst_19 {dimension_numbers = #tpu.dot_dimension_numbers<[1], [1], [0], [0], [0, 0, 1, 0], [], []>} : vector<8x8xbf16>, vector<8x8xbf16>, vector<8x8xf32> -> vector<8x8xf32>
    %c1 = arith.constant 1 : index
    %c0_20 = arith.constant 0 : index
    %c0_21 = arith.constant 0 : index
    %69 = vector.load %arg3[%c1, %c0_20, %c0_21] : memref<4x8x8xbf16, #tpu.memory_space<vmem>>, vector<1x8x8xbf16>
    %70 = vector.shape_cast %69 : vector<1x8x8xbf16> to vector<8x8xbf16>
    %71 = arith.extf %70 : vector<8x8xbf16> to vector<8x8xf32>
    %72 = arith.addf %68, %71 : vector<8x8xf32>
    %73 = arith.addf %72, %27 : vector<8x8xf32>
    %cst_22 = arith.constant dense<0xFF800000> : vector<8xf32>
    %74 = vector.multi_reduction <maximumf>, %73, %cst_22 [1] : vector<8x8xf32> to vector<8xf32>
    %75 = vector.shape_cast %74 : vector<8xf32> to vector<8x1xf32>
    %76 = vector.broadcast %75 : vector<8x1xf32> to vector<8x8xf32>
    %77 = arith.subf %73, %76 : vector<8x8xf32>
    %78 = math.exp %77 : vector<8x8xf32>
    %cst_23 = arith.constant dense<0.000000e+00> : vector<8xf32>
    %79 = vector.multi_reduction <add>, %78, %cst_23 [1] : vector<8x8xf32> to vector<8xf32>
    %80 = vector.shape_cast %79 : vector<8xf32> to vector<8x1xf32>
    %81 = tpu.reciprocal %80 {approx = true} : vector<8x1xf32> -> vector<8x1xf32>
    %82 = vector.broadcast %81 : vector<8x1xf32> to vector<8x8xf32>
    %83 = arith.mulf %78, %82 : vector<8x8xf32>
    %84 = arith.truncf %83 : vector<8x8xf32> to vector<8x8xbf16>
    %85 = vector.extract_strided_slice %19 {offsets = [0, 0, 0], sizes = [1, 8, 8], strides = [1, 1, 1]} : vector<3x8x8xf32> to vector<1x8x8xf32>
    %86 = vector.shape_cast %85 : vector<1x8x8xf32> to vector<8x8xf32>
    %87 = arith.mulf %83, %86 : vector<8x8xf32>
    %88 = arith.truncf %87 : vector<8x8xf32> to vector<8x8xbf16>
    %89 = vector.extract_strided_slice %19 {offsets = [1, 0, 0], sizes = [1, 8, 8], strides = [1, 1, 1]} : vector<3x8x8xf32> to vector<1x8x8xf32>
    %90 = vector.shape_cast %89 : vector<1x8x8xf32> to vector<8x8xf32>
    %91 = arith.mulf %83, %90 : vector<8x8xf32>
    %92 = arith.truncf %91 : vector<8x8xf32> to vector<8x8xbf16>
    %93 = vector.extract_strided_slice %19 {offsets = [2, 0, 0], sizes = [1, 8, 8], strides = [1, 1, 1]} : vector<3x8x8xf32> to vector<1x8x8xf32>
    %94 = vector.shape_cast %93 : vector<1x8x8xf32> to vector<8x8xf32>
    %95 = arith.mulf %83, %94 : vector<8x8xf32>
    %96 = arith.truncf %95 : vector<8x8xf32> to vector<8x8xbf16>
    %97 = tpu.concatenate %84, %88, %92, %96 in 0 : vector<8x8xbf16>, vector<8x8xbf16>, vector<8x8xbf16>, vector<8x8xbf16> -> vector<32x8xbf16>
    %98 = vector.extract_strided_slice %14 {offsets = [0, 16], sizes = [8, 16], strides = [1, 1]} : vector<8x64xbf16> to vector<8x16xbf16>
    %cst_24 = arith.constant dense<0.000000e+00> : vector<32x16xf32>
    %99 = tpu.matmul %97, %98, %cst_24 {dimension_numbers = #tpu.dot_dimension_numbers<[1], [0], [0], [1], [0, 0, 1, 1], [], []>} : vector<32x8xbf16>, vector<8x16xbf16>, vector<32x16xf32> -> vector<32x16xf32>
    %100 = vector.extract_strided_slice %99 {offsets = [0, 0], sizes = [8, 16], strides = [1, 1]} : vector<32x16xf32> to vector<8x16xf32>
    %101 = vector.extract_strided_slice %99 {offsets = [8, 0], sizes = [8, 16], strides = [1, 1]} : vector<32x16xf32> to vector<8x16xf32>
    %102 = vector.extract_strided_slice %99 {offsets = [16, 0], sizes = [8, 16], strides = [1, 1]} : vector<32x16xf32> to vector<8x16xf32>
    %103 = vector.extract_strided_slice %99 {offsets = [24, 0], sizes = [8, 16], strides = [1, 1]} : vector<32x16xf32> to vector<8x16xf32>
    %104 = vector.extract_strided_slice %16 {offsets = [0, 16], sizes = [8, 8], strides = [1, 1]} : vector<8x32xbf16> to vector<8x8xbf16>
    %105 = vector.extract_strided_slice %12 {offsets = [0, 16], sizes = [8, 8], strides = [1, 1]} : vector<8x32xbf16> to vector<8x8xbf16>
    %cst_25 = arith.constant dense<0.000000e+00> : vector<8x8xf32>
    %106 = tpu.matmul %104, %105, %cst_25 {dimension_numbers = #tpu.dot_dimension_numbers<[1], [1], [0], [0], [0, 0, 1, 0], [], []>} : vector<8x8xbf16>, vector<8x8xbf16>, vector<8x8xf32> -> vector<8x8xf32>
    %c2 = arith.constant 2 : index
    %c0_26 = arith.constant 0 : index
    %c0_27 = arith.constant 0 : index
    %107 = vector.load %arg3[%c2, %c0_26, %c0_27] : memref<4x8x8xbf16, #tpu.memory_space<vmem>>, vector<1x8x8xbf16>
    %108 = vector.shape_cast %107 : vector<1x8x8xbf16> to vector<8x8xbf16>
    %109 = arith.extf %108 : vector<8x8xbf16> to vector<8x8xf32>
    %110 = arith.addf %106, %109 : vector<8x8xf32>
    %111 = arith.addf %110, %27 : vector<8x8xf32>
    %cst_28 = arith.constant dense<0xFF800000> : vector<8xf32>
    %112 = vector.multi_reduction <maximumf>, %111, %cst_28 [1] : vector<8x8xf32> to vector<8xf32>
    %113 = vector.shape_cast %112 : vector<8xf32> to vector<8x1xf32>
    %114 = vector.broadcast %113 : vector<8x1xf32> to vector<8x8xf32>
    %115 = arith.subf %111, %114 : vector<8x8xf32>
    %116 = math.exp %115 : vector<8x8xf32>
    %cst_29 = arith.constant dense<0.000000e+00> : vector<8xf32>
    %117 = vector.multi_reduction <add>, %116, %cst_29 [1] : vector<8x8xf32> to vector<8xf32>
    %118 = vector.shape_cast %117 : vector<8xf32> to vector<8x1xf32>
    %119 = tpu.reciprocal %118 {approx = true} : vector<8x1xf32> -> vector<8x1xf32>
    %120 = vector.broadcast %119 : vector<8x1xf32> to vector<8x8xf32>
    %121 = arith.mulf %116, %120 : vector<8x8xf32>
    %122 = arith.truncf %121 : vector<8x8xf32> to vector<8x8xbf16>
    %123 = vector.extract_strided_slice %19 {offsets = [0, 0, 0], sizes = [1, 8, 8], strides = [1, 1, 1]} : vector<3x8x8xf32> to vector<1x8x8xf32>
    %124 = vector.shape_cast %123 : vector<1x8x8xf32> to vector<8x8xf32>
    %125 = arith.mulf %121, %124 : vector<8x8xf32>
    %126 = arith.truncf %125 : vector<8x8xf32> to vector<8x8xbf16>
    %127 = vector.extract_strided_slice %19 {offsets = [1, 0, 0], sizes = [1, 8, 8], strides = [1, 1, 1]} : vector<3x8x8xf32> to vector<1x8x8xf32>
    %128 = vector.shape_cast %127 : vector<1x8x8xf32> to vector<8x8xf32>
    %129 = arith.mulf %121, %128 : vector<8x8xf32>
    %130 = arith.truncf %129 : vector<8x8xf32> to vector<8x8xbf16>
    %131 = vector.extract_strided_slice %19 {offsets = [2, 0, 0], sizes = [1, 8, 8], strides = [1, 1, 1]} : vector<3x8x8xf32> to vector<1x8x8xf32>
    %132 = vector.shape_cast %131 : vector<1x8x8xf32> to vector<8x8xf32>
    %133 = arith.mulf %121, %132 : vector<8x8xf32>
    %134 = arith.truncf %133 : vector<8x8xf32> to vector<8x8xbf16>
    %135 = tpu.concatenate %122, %126, %130, %134 in 0 : vector<8x8xbf16>, vector<8x8xbf16>, vector<8x8xbf16>, vector<8x8xbf16> -> vector<32x8xbf16>
    %136 = vector.extract_strided_slice %14 {offsets = [0, 32], sizes = [8, 16], strides = [1, 1]} : vector<8x64xbf16> to vector<8x16xbf16>
    %cst_30 = arith.constant dense<0.000000e+00> : vector<32x16xf32>
    %137 = tpu.matmul %135, %136, %cst_30 {dimension_numbers = #tpu.dot_dimension_numbers<[1], [0], [0], [1], [0, 0, 1, 1], [], []>} : vector<32x8xbf16>, vector<8x16xbf16>, vector<32x16xf32> -> vector<32x16xf32>
    %138 = vector.extract_strided_slice %137 {offsets = [0, 0], sizes = [8, 16], strides = [1, 1]} : vector<32x16xf32> to vector<8x16xf32>
    %139 = vector.extract_strided_slice %137 {offsets = [8, 0], sizes = [8, 16], strides = [1, 1]} : vector<32x16xf32> to vector<8x16xf32>
    %140 = vector.extract_strided_slice %137 {offsets = [16, 0], sizes = [8, 16], strides = [1, 1]} : vector<32x16xf32> to vector<8x16xf32>
    %141 = vector.extract_strided_slice %137 {offsets = [24, 0], sizes = [8, 16], strides = [1, 1]} : vector<32x16xf32> to vector<8x16xf32>
    %142 = vector.extract_strided_slice %16 {offsets = [0, 24], sizes = [8, 8], strides = [1, 1]} : vector<8x32xbf16> to vector<8x8xbf16>
    %143 = vector.extract_strided_slice %12 {offsets = [0, 24], sizes = [8, 8], strides = [1, 1]} : vector<8x32xbf16> to vector<8x8xbf16>
    %cst_31 = arith.constant dense<0.000000e+00> : vector<8x8xf32>
    %144 = tpu.matmul %142, %143, %cst_31 {dimension_numbers = #tpu.dot_dimension_numbers<[1], [1], [0], [0], [0, 0, 1, 0], [], []>} : vector<8x8xbf16>, vector<8x8xbf16>, vector<8x8xf32> -> vector<8x8xf32>
    %c3 = arith.constant 3 : index
    %c0_32 = arith.constant 0 : index
    %c0_33 = arith.constant 0 : index
    %145 = vector.load %arg3[%c3, %c0_32, %c0_33] : memref<4x8x8xbf16, #tpu.memory_space<vmem>>, vector<1x8x8xbf16>
    %146 = vector.shape_cast %145 : vector<1x8x8xbf16> to vector<8x8xbf16>
    %147 = arith.extf %146 : vector<8x8xbf16> to vector<8x8xf32>
    %148 = arith.addf %144, %147 : vector<8x8xf32>
    %149 = arith.addf %148, %27 : vector<8x8xf32>
    %cst_34 = arith.constant dense<0xFF800000> : vector<8xf32>
    %150 = vector.multi_reduction <maximumf>, %149, %cst_34 [1] : vector<8x8xf32> to vector<8xf32>
    %151 = vector.shape_cast %150 : vector<8xf32> to vector<8x1xf32>
    %152 = vector.broadcast %151 : vector<8x1xf32> to vector<8x8xf32>
    %153 = arith.subf %149, %152 : vector<8x8xf32>
    %154 = math.exp %153 : vector<8x8xf32>
    %cst_35 = arith.constant dense<0.000000e+00> : vector<8xf32>
    %155 = vector.multi_reduction <add>, %154, %cst_35 [1] : vector<8x8xf32> to vector<8xf32>
    %156 = vector.shape_cast %155 : vector<8xf32> to vector<8x1xf32>
    %157 = tpu.reciprocal %156 {approx = true} : vector<8x1xf32> -> vector<8x1xf32>
    %158 = vector.broadcast %157 : vector<8x1xf32> to vector<8x8xf32>
    %159 = arith.mulf %154, %158 : vector<8x8xf32>
    %160 = arith.truncf %159 : vector<8x8xf32> to vector<8x8xbf16>
    %161 = vector.extract_strided_slice %19 {offsets = [0, 0, 0], sizes = [1, 8, 8], strides = [1, 1, 1]} : vector<3x8x8xf32> to vector<1x8x8xf32>
    %162 = vector.shape_cast %161 : vector<1x8x8xf32> to vector<8x8xf32>
    %163 = arith.mulf %159, %162 : vector<8x8xf32>
    %164 = arith.truncf %163 : vector<8x8xf32> to vector<8x8xbf16>
    %165 = vector.extract_strided_slice %19 {offsets = [1, 0, 0], sizes = [1, 8, 8], strides = [1, 1, 1]} : vector<3x8x8xf32> to vector<1x8x8xf32>
    %166 = vector.shape_cast %165 : vector<1x8x8xf32> to vector<8x8xf32>
    %167 = arith.mulf %159, %166 : vector<8x8xf32>
    %168 = arith.truncf %167 : vector<8x8xf32> to vector<8x8xbf16>
    %169 = vector.extract_strided_slice %19 {offsets = [2, 0, 0], sizes = [1, 8, 8], strides = [1, 1, 1]} : vector<3x8x8xf32> to vector<1x8x8xf32>
    %170 = vector.shape_cast %169 : vector<1x8x8xf32> to vector<8x8xf32>
    %171 = arith.mulf %159, %170 : vector<8x8xf32>
    %172 = arith.truncf %171 : vector<8x8xf32> to vector<8x8xbf16>
    %173 = tpu.concatenate %160, %164, %168, %172 in 0 : vector<8x8xbf16>, vector<8x8xbf16>, vector<8x8xbf16>, vector<8x8xbf16> -> vector<32x8xbf16>
    %174 = vector.extract_strided_slice %14 {offsets = [0, 48], sizes = [8, 16], strides = [1, 1]} : vector<8x64xbf16> to vector<8x16xbf16>
    %cst_36 = arith.constant dense<0.000000e+00> : vector<32x16xf32>
    %175 = tpu.matmul %173, %174, %cst_36 {dimension_numbers = #tpu.dot_dimension_numbers<[1], [0], [0], [1], [0, 0, 1, 1], [], []>} : vector<32x8xbf16>, vector<8x16xbf16>, vector<32x16xf32> -> vector<32x16xf32>
    %176 = vector.extract_strided_slice %175 {offsets = [0, 0], sizes = [8, 16], strides = [1, 1]} : vector<32x16xf32> to vector<8x16xf32>
    %177 = vector.extract_strided_slice %175 {offsets = [8, 0], sizes = [8, 16], strides = [1, 1]} : vector<32x16xf32> to vector<8x16xf32>
    %178 = vector.extract_strided_slice %175 {offsets = [16, 0], sizes = [8, 16], strides = [1, 1]} : vector<32x16xf32> to vector<8x16xf32>
    %179 = vector.extract_strided_slice %175 {offsets = [24, 0], sizes = [8, 16], strides = [1, 1]} : vector<32x16xf32> to vector<8x16xf32>
    %180 = tpu.concatenate %62, %63, %64, %65, %100, %101, %102, %103, %138, %139, %140, %141, %176, %177, %178, %179 in 1 : vector<8x16xf32>, vector<8x16xf32>, vector<8x16xf32>, vector<8x16xf32>, vector<8x16xf32>, vector<8x16xf32>, vector<8x16xf32>, vector<8x16xf32>, vector<8x16xf32>, vector<8x16xf32>, vector<8x16xf32>, vector<8x16xf32>, vector<8x16xf32>, vector<8x16xf32>, vector<8x16xf32>, vector<8x16xf32> -> vector<8x256xf32>
    %181 = arith.truncf %180 : vector<8x256xf32> to vector<8x256xbf16>
    %c0_37 = arith.constant 0 : index
    %c0_38 = arith.constant 0 : index
    %182 = vector.load %arg6[%c0_37, %c0_38] : memref<256x128xbf16, #tpu.memory_space<vmem>>, vector<256x128xbf16>
    %cst_39 = arith.constant dense<0.000000e+00> : vector<8x128xf32>
    %183 = tpu.matmul %181, %182, %cst_39 {dimension_numbers = #tpu.dot_dimension_numbers<[1], [0], [0], [1], [0, 0, 1, 1], [], []>} : vector<8x256xbf16>, vector<256x128xbf16>, vector<8x128xf32> -> vector<8x128xf32>
    %184 = arith.addf %183, %17 : vector<8x128xf32>
    %c0_40 = arith.constant 0 : index
    %c0_41 = arith.constant 0 : index
    %185 = vector.load %arg7[%c0_40, %c0_41] : memref<8x128xf32, #tpu.memory_space<vmem>>, vector<1x128xf32>
    %186 = vector.broadcast %185 : vector<1x128xf32> to vector<8x128xf32>
    %187 = arith.addf %184, %186 : vector<8x128xf32>
    %c1_42 = arith.constant 1 : index
    %c0_43 = arith.constant 0 : index
    %188 = vector.load %arg7[%c1_42, %c0_43] : memref<8x128xf32, #tpu.memory_space<vmem>>, vector<1x32xf32>
    %c2_44 = arith.constant 2 : index
    %c0_45 = arith.constant 0 : index
    %189 = vector.load %arg7[%c2_44, %c0_45] : memref<8x128xf32, #tpu.memory_space<vmem>>, vector<1x32xf32>
    %c3_46 = arith.constant 3 : index
    %c0_47 = arith.constant 0 : index
    %190 = vector.load %arg7[%c3_46, %c0_47] : memref<8x128xf32, #tpu.memory_space<vmem>>, vector<1x32xf32>
    %c4 = arith.constant 4 : index
    %c0_48 = arith.constant 0 : index
    %191 = vector.load %arg7[%c4, %c0_48] : memref<8x128xf32, #tpu.memory_space<vmem>>, vector<1x32xf32>
    %192 = vector.extract_strided_slice %187 {offsets = [0, 0], sizes = [8, 32], strides = [1, 1]} : vector<8x128xf32> to vector<8x32xf32>
    %cst_49 = arith.constant 0.000000e+00 : f32
    %193 = vector.broadcast %cst_49 : f32 to vector<8x32xf32>
    %194 = arith.cmpf ogt, %192, %193 : vector<8x32xf32>
    %cst_50 = arith.constant 0.000000e+00 : f32
    %195 = vector.broadcast %cst_50 : f32 to vector<8x32xf32>
    %196 = arith.cmpf olt, %192, %195 : vector<8x32xf32>
    %cst_51 = arith.constant -1.000000e+00 : f32
    %cst_52 = arith.constant 0.000000e+00 : f32
    %197 = vector.broadcast %cst_51 : f32 to vector<8x32xf32>
    %198 = vector.broadcast %cst_52 : f32 to vector<8x32xf32>
    %199 = arith.select %196, %197, %198 : vector<8x32xi1>, vector<8x32xf32>
    %cst_53 = arith.constant 1.000000e+00 : f32
    %200 = vector.broadcast %cst_53 : f32 to vector<8x32xf32>
    %201 = arith.select %194, %200, %199 : vector<8x32xi1>, vector<8x32xf32>
    %202 = math.absf %192 : vector<8x32xf32>
    %cst_54 = arith.constant dense<0.000000e+00> : vector<8xf32>
    %203 = vector.multi_reduction <add>, %202, %cst_54 [1] : vector<8x32xf32> to vector<8xf32>
    %204 = vector.shape_cast %203 : vector<8xf32> to vector<8x1xf32>
    %cst_55 = arith.constant 3.200000e+01 : f32
    %205 = vector.broadcast %cst_55 : f32 to vector<8x1xf32>
    %206 = arith.divf %204, %205 : vector<8x1xf32>
    %207 = vector.broadcast %206 : vector<8x1xf32> to vector<8x32xf32>
    %208 = arith.subf %202, %207 : vector<8x32xf32>
    %209 = arith.mulf %208, %208 : vector<8x32xf32>
    %cst_56 = arith.constant dense<0.000000e+00> : vector<8xf32>
    %210 = vector.multi_reduction <add>, %209, %cst_56 [1] : vector<8x32xf32> to vector<8xf32>
    %211 = vector.shape_cast %210 : vector<8xf32> to vector<8x1xf32>
    %cst_57 = arith.constant 3.200000e+01 : f32
    %212 = vector.broadcast %cst_57 : f32 to vector<8x1xf32>
    %213 = arith.divf %211, %212 : vector<8x1xf32>
    %cst_58 = arith.constant 9.99999974E-6 : f32
    %214 = vector.broadcast %cst_58 : f32 to vector<8x1xf32>
    %215 = arith.addf %213, %214 : vector<8x1xf32>
    %216 = math.rsqrt %215 : vector<8x1xf32>
    %217 = vector.broadcast %216 : vector<8x1xf32> to vector<8x32xf32>
    %218 = arith.mulf %208, %217 : vector<8x32xf32>
    %219 = vector.broadcast %188 : vector<1x32xf32> to vector<8x32xf32>
    %220 = arith.mulf %218, %219 : vector<8x32xf32>
    %221 = vector.broadcast %189 : vector<1x32xf32> to vector<8x32xf32>
    %222 = arith.addf %220, %221 : vector<8x32xf32>
    %cst_59 = arith.constant 0.000000e+00 : f32
    %223 = vector.broadcast %cst_59 : f32 to vector<8x32xf32>
    %224 = arith.maximumf %222, %223 : vector<8x32xf32>
    %225 = arith.mulf %201, %224 : vector<8x32xf32>
    %226 = vector.extract_strided_slice %187 {offsets = [0, 32], sizes = [8, 32], strides = [1, 1]} : vector<8x128xf32> to vector<8x32xf32>
    %227 = vector.extract_strided_slice %187 {offsets = [0, 64], sizes = [8, 32], strides = [1, 1]} : vector<8x128xf32> to vector<8x32xf32>
    %228 = vector.extract_strided_slice %187 {offsets = [0, 96], sizes = [8, 32], strides = [1, 1]} : vector<8x128xf32> to vector<8x32xf32>
    %229 = arith.mulf %226, %226 : vector<8x32xf32>
    %230 = arith.mulf %227, %227 : vector<8x32xf32>
    %231 = arith.addf %229, %230 : vector<8x32xf32>
    %232 = arith.mulf %228, %228 : vector<8x32xf32>
    %233 = arith.addf %231, %232 : vector<8x32xf32>
    %cst_60 = arith.constant 9.99999997E-7 : f32
    %234 = vector.broadcast %cst_60 : f32 to vector<8x32xf32>
    %235 = arith.addf %233, %234 : vector<8x32xf32>
    %236 = math.sqrt %235 : vector<8x32xf32>
    %cst_61 = arith.constant dense<0.000000e+00> : vector<8xf32>
    %237 = vector.multi_reduction <add>, %236, %cst_61 [1] : vector<8x32xf32> to vector<8xf32>
    %238 = vector.shape_cast %237 : vector<8xf32> to vector<8x1xf32>
    %cst_62 = arith.constant 3.200000e+01 : f32
    %239 = vector.broadcast %cst_62 : f32 to vector<8x1xf32>
    %240 = arith.divf %238, %239 : vector<8x1xf32>
    %241 = vector.broadcast %240 : vector<8x1xf32> to vector<8x32xf32>
    %242 = arith.subf %236, %241 : vector<8x32xf32>
    %243 = arith.mulf %242, %242 : vector<8x32xf32>
    %cst_63 = arith.constant dense<0.000000e+00> : vector<8xf32>
    %244 = vector.multi_reduction <add>, %243, %cst_63 [1] : vector<8x32xf32> to vector<8xf32>
    %245 = vector.shape_cast %244 : vector<8xf32> to vector<8x1xf32>
    %cst_64 = arith.constant 3.200000e+01 : f32
    %246 = vector.broadcast %cst_64 : f32 to vector<8x1xf32>
    %247 = arith.divf %245, %246 : vector<8x1xf32>
    %cst_65 = arith.constant 9.99999974E-6 : f32
    %248 = vector.broadcast %cst_65 : f32 to vector<8x1xf32>
    %249 = arith.addf %247, %248 : vector<8x1xf32>
    %250 = math.rsqrt %249 : vector<8x1xf32>
    %251 = vector.broadcast %250 : vector<8x1xf32> to vector<8x32xf32>
    %252 = arith.mulf %242, %251 : vector<8x32xf32>
    %253 = vector.broadcast %190 : vector<1x32xf32> to vector<8x32xf32>
    %254 = arith.mulf %252, %253 : vector<8x32xf32>
    %255 = vector.broadcast %191 : vector<1x32xf32> to vector<8x32xf32>
    %256 = arith.addf %254, %255 : vector<8x32xf32>
    %cst_66 = arith.constant 0.000000e+00 : f32
    %257 = vector.broadcast %cst_66 : f32 to vector<8x32xf32>
    %258 = arith.maximumf %256, %257 : vector<8x32xf32>
    %cst_67 = arith.constant 9.99999997E-7 : f32
    %259 = vector.broadcast %cst_67 : f32 to vector<8x32xf32>
    %260 = arith.addf %236, %259 : vector<8x32xf32>
    %261 = arith.divf %258, %260 : vector<8x32xf32>
    %262 = arith.mulf %226, %261 : vector<8x32xf32>
    %263 = arith.mulf %227, %261 : vector<8x32xf32>
    %264 = arith.mulf %228, %261 : vector<8x32xf32>
    %265 = tpu.concatenate %225, %262, %263, %264 in 1 : vector<8x32xf32>, vector<8x32xf32>, vector<8x32xf32>, vector<8x32xf32> -> vector<8x128xf32>
    %266 = arith.truncf %265 : vector<8x128xf32> to vector<8x128xbf16>
    %c0_68 = arith.constant 0 : index
    %c0_69 = arith.constant 0 : index
    %267 = vector.load %arg8[%c0_68, %c0_69] : memref<128x38xbf16, #tpu.memory_space<vmem>>, vector<128x38xbf16>
    %cst_70 = arith.constant dense<0.000000e+00> : vector<8x38xf32>
    %268 = tpu.matmul %266, %267, %cst_70 {dimension_numbers = #tpu.dot_dimension_numbers<[1], [0], [0], [1], [0, 0, 1, 1], [], []>} : vector<8x128xbf16>, vector<128x38xbf16>, vector<8x38xf32> -> vector<8x38xf32>
    %c0_71 = arith.constant 0 : index
    %c0_72 = arith.constant 0 : index
    %269 = vector.load %arg9[%c0_71, %c0_72] : memref<8x38xf32, #tpu.memory_space<vmem>>, vector<8x38xf32>
    tpu.vector_store %arg9[%c0_71, %c0_72], %268 {strides = array<i32>} : memref<8x38xf32, #tpu.memory_space<vmem>>, vector<8x38xf32>,
    return
  }
  func.func @transform_0(%arg0: i32) -> (i32, i32) {
    %c0_i32 = arith.constant 0 : i32
    %c0_i32_0 = arith.constant 0 : i32
    %c0_i32_1 = arith.constant 0 : i32
    return %c0_i32, %c0_i32_0 : i32, i32
  }
  func.func @transform_1(%arg0: i32) -> (i32, i32, i32) {
    %c0_i32 = arith.constant 0 : i32
    %c0_i32_0 = arith.constant 0 : i32
    %c0_i32_1 = arith.constant 0 : i32
    return %c0_i32, %arg0, %c0_i32_0 : i32, i32, i32
  }
  func.func @transform_2(%arg0: i32) -> (i32, i32, i32) {
    %c0_i32 = arith.constant 0 : i32
    %c0_i32_0 = arith.constant 0 : i32
    %c0_i32_1 = arith.constant 0 : i32
    return %c0_i32, %arg0, %c0_i32_0 : i32, i32, i32
  }
  func.func @transform_3(%arg0: i32) -> (i32, i32) {
    %c0_i32 = arith.constant 0 : i32
    %c0_i32_0 = arith.constant 0 : i32
    %c0_i32_1 = arith.constant 0 : i32
    return %c0_i32, %c0_i32_0 : i32, i32
  }
  func.func @transform_4(%arg0: i32) -> (i32, i32) {
    %c0_i32 = arith.constant 0 : i32
    %c0_i32_0 = arith.constant 0 : i32
    %c0_i32_1 = arith.constant 0 : i32
    return %c0_i32, %c0_i32_0 : i32, i32
  }
  func.func @transform_5(%arg0: i32) -> (i32, i32) {
    %c0_i32 = arith.constant 0 : i32
    %c0_i32_0 = arith.constant 0 : i32
    %c0_i32_1 = arith.constant 0 : i32
    return %c0_i32, %c0_i32_0 : i32, i32
  }
  func.func @transform_6(%arg0: i32) -> (i32, i32) {
    %c0_i32 = arith.constant 0 : i32
    %c0_i32_0 = arith.constant 0 : i32
    %c0_i32_1 = arith.constant 0 : i32
    return %c0_i32, %c0_i32_0 : i32, i32
  }
  func.func @transform_7(%arg0: i32) -> (i32, i32) {
    %c0_i32 = arith.constant 0 : i32
    %c0_i32_0 = arith.constant 0 : i32
    %c0_i32_1 = arith.constant 0 : i32
    return %c0_i32, %c0_i32_0 : i32, i32
  }
  func.func @transform_8(%arg0: i32) -> (i32, i32) {
    %c0_i32 = arith.constant 0 : i32
    %c0_i32_0 = arith.constant 0 : i32
    return %arg0, %c0_i32 : i32, i32
  }
}

</mosaic_0001>

<llo_original>
// kernel: se3_forward.2
$region0: #{se3_forward.2}
  #allocation0 [shape = 'u32[]', space=smem, size = 0x4, offset = 0x4, fixed_abs, tag = 'smem constant byte address 0x4 - core index']
  #allocation1 [shape = 'u32[144,128]{1,0:T(1,128)}', space=vmem, size = 0x12000, scoped, tag = 'internal scratch']
  %s0 = inlined_call_operand.vmem [shape: f32[8,41], index: 0, kind: input, shape index: {}]
  %s1 = inlined_call_operand.vmem [shape: bf16[3,8,8], index: 1, kind: input, shape index: {}]
  %s2 = inlined_call_operand.vmem [shape: bf16[4,8,8], index: 2, kind: input, shape index: {}]
  %s3 = inlined_call_operand.vmem [shape: bf16[41,96], index: 3, kind: input, shape index: {}]
  %s4 = inlined_call_operand.vmem [shape: bf16[41,160], index: 4, kind: input, shape index: {}]
  %s5 = inlined_call_operand.vmem [shape: bf16[256,128], index: 5, kind: input, shape index: {}]
  %s6 = inlined_call_operand.vmem [shape: f32[8,128], index: 6, kind: input, shape index: {}]
  %s7 = inlined_call_operand.vmem [shape: f32[8,128], index: 7, kind: output, shape index: {}]
  %s8 = sld [smem:[#allocation0]]
  $region38: #{se3_forward.2} parent=0
    _
  %s10 = ssub.s32 1, %s8
  %s11 = scalar_select 0, %s10, %s8
  // Predicated region
  $region2: #{se3_forward.2} parent=0 // pred_check
    _
  $region3: #{se3_forward.2} parent=0 // pred_check_branch
    %13 = sbr.rel (0) target = $region5
  $region4: #{se3_forward.2} parent=0 // pred_region
    _
  $region5: #{se3_forward.2} parent=0 // pred_fallthru
    _
  // Predicated region
  $region6: #{se3_forward.2} parent=0 // pred_check
    _
  $region7: #{se3_forward.2} parent=0 // pred_check_branch
    %15 = sbr.rel (0) target = $region9
  $region8: #{se3_forward.2} parent=0 // pred_region
    _
  $region9: #{se3_forward.2} parent=0 // pred_fallthru
    _
  // Predicated region
  $region10: #{se3_forward.2} parent=0 // pred_check
    _
  $region11: #{se3_forward.2} parent=0 // pred_check_branch
    %17 = sbr.rel (0) target = $region13
  $region12: #{se3_forward.2} parent=0 // pred_region
    _
  $region13: #{se3_forward.2} parent=0 // pred_fallthru
    _
  // Predicated region
  $region14: #{se3_forward.2} parent=0 // pred_check
    _
  $region15: #{se3_forward.2} parent=0 // pred_check_branch
    %19 = sbr.rel (0) target = $region17
  $region16: #{se3_forward.2} parent=0 // pred_region
    _
  $region17: #{se3_forward.2} parent=0 // pred_fallthru
    _
  // Predicated region
  $region18: #{se3_forward.2} parent=0 // pred_check
    _
  $region19: #{se3_forward.2} parent=0 // pred_check_branch
    %21 = sbr.rel (0) target = $region21
  $region20: #{se3_forward.2} parent=0 // pred_region
    _
  $region21: #{se3_forward.2} parent=0 // pred_fallthru
    _
  // Predicated region
  $region22: #{se3_forward.2} parent=0 // pred_check
    _
  $region23: #{se3_forward.2} parent=0 // pred_check_branch
    %23 = sbr.rel (0) target = $region25
  $region24: #{se3_forward.2} parent=0 // pred_region
    _
  $region25: #{se3_forward.2} parent=0 // pred_fallthru
    _
  // Predicated region
  $region26: #{se3_forward.2} parent=0 // pred_check
    _
  $region27: #{se3_forward.2} parent=0 // pred_check_branch
    %25 = sbr.rel (0) target = $region29
  $region28: #{se3_forward.2} parent=0 // pred_region
    _
  $region29: #{se3_forward.2} parent=0 // pred_fallthru
    _
  %s27 = smul.u32 0, 8
  %v28 = vld [vmem:[%s0] sm:$0xff]
  %v29 = vpack.c.bf16 %v28, %v28
  %s30 = scalar_lea.vmem %s0, %s27
  %v31 = vld [vmem:[%s30] sm:$0xff]
  %v32 = vpack.c.bf16 %v31, %v31
  %v33 = vld [vmem:[%s3] sm:$0xf]
  %v34 = vld [vmem:[%s3 + $0x4] sm:$0xf]
  %v35 = vld [vmem:[%s3 + $0x8] sm:$0xf]
  %v36 = vld [vmem:[%s3 + $0xc] sm:$0xf]
  %v37 = vld [vmem:[%s3 + $0x10] sm:$0xf]
  %v38 = vld [vmem:[%s3 + $0x14] sm:$0x1]
  %v45 = vunpack.c.l.b16 %v33
  %v46 = vunpack.c.l.b16 %v34
  %v47 = vunpack.c.l.b16 %v35
  %v48 = vunpack.c.l.b16 %v36
  %v49 = vunpack.c.l.b16 %v37
  %v50 = vunpack.c.l.b16 %v38
  %v51 = vpack.c.b16 %v46, %v45
  %v52 = vpack.c.b16 %v48, %v47
  %v53 = vpack.c.b16 %v50, %v49
  %vm56 = vcmask 334848
  %v58 = vsel %vm56, %v29, 0
  %vm60 = vcmask 1043456
  %vm61 = vcmask 1044480
  %v62 = vsel %vm60, 4294967295, 65535
  %v63 = vsel %vm61, %v62, 0
  %v65 = vand.u32 %v53, %v63
  %67 = vmatprep.subr.bf16.mxu0 0
  %68 = vmatpush1.bf16.msra.mxu0 %v51
  %69 = vmatprep.subr.bf16.mxu0 0
  %70 = vmatpush1.bf16.msra.mxu0 %v52
  %71 = vmatprep.subr.bf16.mxu0 0
  %72 = vmatpush1.bf16.msra.mxu0 %v65
  %73 = vmatprep.subr.bf16.mxu0 0
  %74 = vmatpush1.bf16.msra.mxu0 0
  %75 = vmatprep.subr.bf16.mxu0 0
  %76 = vmatpush1.bf16.msra.mxu0 0
  %77 = vmatprep.subr.bf16.mxu0 0
  %78 = vmatpush1.bf16.msra.mxu0 0
  %79 = vmatprep.subr.bf16.mxu0 0
  %80 = vmatpush1.bf16.msra.mxu0 0
  %81 = vmatprep.subr.bf16.mxu0 0
  %82 = vmatpush1.bf16.msra.mxu0 0
  %83 = vmatprep.subr.bf16.mxu0 0
  %84 = vmatpush1.bf16.msra.mxu0 0
  %85 = vmatprep.subr.bf16.mxu0 0
  %86 = vmatpush1.bf16.msra.mxu0 0
  %87 = vmatprep.subr.bf16.mxu0 0
  %88 = vmatpush1.bf16.msra.mxu0 0
  %89 = vmatprep.subr.bf16.mxu0 0
  %90 = vmatpush1.bf16.msra.mxu0 0
  %91 = vmatprep.subr.bf16.mxu0 0
  %92 = vmatpush1.bf16.msra.mxu0 0
  %93 = vmatprep.subr.bf16.mxu0 0
  %94 = vmatpush1.bf16.msra.mxu0 0
  %95 = vmatprep.subr.bf16.mxu0 0
  %96 = vmatpush1.bf16.msra.mxu0 0
  %97 = vmatprep.subr.bf16.mxu0 0
  %98 = vmatpush1.bf16.msra.mxu0 0
  %99 = vmatprep.mubr.bf16.mxu0 0
  %100 = vmatmul.mubr.bf16.gmra.mrb[0].mxu0 %v58
  %v101 = vpop.f32.mrb[0].mxu0
  %v102 = vadd.f32 0.0, %v101
  %v103 = vpop.f32.mrb[0].mxu0
  %v104 = vpop.f32.mrb[0].mxu0
  %v105 = vpop.f32.mrb[0].mxu0
  %106 = vdwg.mxu0
  %v107 = vld [vmem:[%s4] sm:$0xff]
  %v108 = vld [vmem:[%s4 + $0x8] sm:$0xff]
  %v109 = vld [vmem:[%s4 + $0x10] sm:$0xff]
  %v110 = vld [vmem:[%s4 + $0x18] sm:$0xff]
  %v111 = vld [vmem:[%s4 + $0x20] sm:$0xff]
  %v112 = vld [vmem:[%s4 + $0x28] sm:$0x11]
  %v119 = vunpack.c.l.b16 %v107
  %v120 = vunpack.c.h.b16 %v107
  %v121 = vunpack.c.l.b16 %v108
  %v122 = vunpack.c.h.b16 %v108
  %v123 = vunpack.c.l.b16 %v109
  %v124 = vunpack.c.h.b16 %v109
  %v125 = vunpack.c.l.b16 %v110
  %v126 = vunpack.c.h.b16 %v110
  %v127 = vunpack.c.l.b16 %v111
  %v128 = vunpack.c.h.b16 %v111
  %v129 = vunpack.c.l.b16 %v112
  %v130 = vunpack.c.h.b16 %v112
  %v131 = vpack.c.b16 %v121, %v119
  %v132 = vpack.c.b16 %v122, %v120
  %v133 = vpack.c.b16 %v125, %v123
  %v134 = vpack.c.b16 %v126, %v124
  %v135 = vpack.c.b16 %v129, %v127
  %v136 = vpack.c.b16 %v130, %v128
  %v142 = vsel %vm56, %v32, 0
  %v145 = vand.u32 %v135, %v63
  %v148 = vand.u32 %v136, %v63
  %150 = vmatprep.subr.bf16.mxu0 %v132
  %151 = vmatpush1.bf16.msra.mxu0 %v131
  %152 = vmatprep.subr.bf16.mxu0 %v134
  %153 = vmatpush1.bf16.msra.mxu0 %v133
  %154 = vmatprep.subr.bf16.mxu0 %v148
  %155 = vmatpush1.bf16.msra.mxu0 %v145
  %156 = vmatprep.subr.bf16.mxu0 0
  %157 = vmatpush1.bf16.msra.mxu0 0
  %158 = vmatprep.subr.bf16.mxu0 0
  %159 = vmatpush1.bf16.msra.mxu0 0
  %160 = vmatprep.subr.bf16.mxu0 0
  %161 = vmatpush1.bf16.msra.mxu0 0
  %162 = vmatprep.subr.bf16.mxu0 0
  %163 = vmatpush1.bf16.msra.mxu0 0
  %164 = vmatprep.subr.bf16.mxu0 0
  %165 = vmatpush1.bf16.msra.mxu0 0
  %166 = vmatprep.subr.bf16.mxu0 0
  %167 = vmatpush1.bf16.msra.mxu0 0
  %168 = vmatprep.subr.bf16.mxu0 0
  %169 = vmatpush1.bf16.msra.mxu0 0
  %170 = vmatprep.subr.bf16.mxu0 0
  %171 = vmatpush1.bf16.msra.mxu0 0
  %172 = vmatprep.subr.bf16.mxu0 0
  %173 = vmatpush1.bf16.msra.mxu0 0
  %174 = vmatprep.subr.bf16.mxu0 0
  %175 = vmatpush1.bf16.msra.mxu0 0
  %176 = vmatprep.subr.bf16.mxu0 0
  %177 = vmatpush1.bf16.msra.mxu0 0
  %178 = vmatprep.subr.bf16.mxu0 0
  %179 = vmatpush1.bf16.msra.mxu0 0
  %180 = vmatprep.subr.bf16.mxu0 0
  %181 = vmatpush1.bf16.msra.mxu0 0
  %182 = vmatprep.mubr.bf16.mxu0 0
  %183 = vmatmul.mubr.bf16.gmra.mrb[0].mxu0 %v142
  %v184 = vpop.f32.mrb[0].mxu0
  %v185 = vadd.f32 0.0, %v184
  %v186 = vpop.f32.mrb[0].mxu0
  %v187 = vadd.f32 0.0, %v186
  %v188 = vpop.f32.mrb[0].mxu0
  %v189 = vpop.f32.mrb[0].mxu0
  %190 = vdwg.mxu0
  %v191 = vpack.c.bf16 %v102, %v102
  %v192 = vpack.c.bf16 %v185, %v185
  %v193 = vld [vmem:[%s1] sm:$0xf]
  %v194 = vld [vmem:[%s1 + $0x4] sm:$0xf]
  %v195 = vld [vmem:[%s1 + $0x8] sm:$0xf]
  %v196 = vunpack.c.l.bf16 %v193
  %v197 = vunpack.c.l.bf16 %v194
  %v198 = vunpack.c.l.bf16 %v195
  %v199 = vlaneseq
  %v200 = vshrl.u32 %v199, 7
  %v201 = vstv %s27
  %v202 = vadd.s32 %v201, %v200
  %v203 = vlaneseq
  %v204 = vand.u32 %v203, 127
  %vm205 = vcmp.eq.s32.totalorder %v202, %v204
  %v206 = vsel %vm205, -1e+09, 0.0
  %v207 = vld [vmem:[%s2] sm:$0xf]
  %v208 = vunpack.c.l.bf16 %v207
  %vm209 = vcmask 64512
  %v211 = vsel %vm209, %v192, 0
  %v214 = vsel %vm209, %v191, 0
  %216 = vmatprep.subr.bf16.mxu0 0
  %217 = vmatpush1.bf16.xpose.msra.mxu0 %v214
  %218 = vmatprep.subr.bf16.mxu0 0
  %219 = vmatpush1.bf16.xpose.msra.mxu0 0
  %220 = vmatprep.subr.bf16.mxu0 0
  %221 = vmatpush1.bf16.xpose.msra.mxu0 0
  %222 = vmatprep.subr.bf16.mxu0 0
  %223 = vmatpush1.bf16.xpose.msra.mxu0 0
  %224 = vmatprep.subr.bf16.mxu0 0
  %225 = vmatpush1.bf16.xpose.msra.mxu0 0
  %226 = vmatprep.subr.bf16.mxu0 0
  %227 = vmatpush1.bf16.xpose.msra.mxu0 0
  %228 = vmatprep.subr.bf16.mxu0 0
  %229 = vmatpush1.bf16.xpose.msra.mxu0 0
  %230 = vmatprep.subr.bf16.mxu0 0
  %231 = vmatpush1.bf16.xpose.msra.mxu0 0
  %232 = vmatprep.subr.bf16.mxu0 0
  %233 = vmatpush1.bf16.xpose.msra.mxu0 0
  %234 = vmatprep.subr.bf16.mxu0 0
  %235 = vmatpush1.bf16.xpose.msra.mxu0 0
  %236 = vmatprep.subr.bf16.mxu0 0
  %237 = vmatpush1.bf16.xpose.msra.mxu0 0
  %238 = vmatprep.subr.bf16.mxu0 0
  %239 = vmatpush1.bf16.xpose.msra.mxu0 0
  %240 = vmatprep.subr.bf16.mxu0 0
  %241 = vmatpush1.bf16.xpose.msra.mxu0 0
  %242 = vmatprep.subr.bf16.mxu0 0
  %243 = vmatpush1.bf16.xpose.msra.mxu0 0
  %244 = vmatprep.subr.bf16.mxu0 0
  %245 = vmatpush1.bf16.xpose.msra.mxu0 0
  %246 = vmatprep.subr.bf16.mxu0 0
  %247 = vmatpush1.bf16.xpose.msra.mxu0 0
  %248 = vmatprep.mubr.bf16.mxu0 0
  %249 = vmatmul.mubr.bf16.gmra.mrb[0].mxu0 %v211
  %v250 = vpop.f32.mrb[0].mxu0
  %v251 = vadd.f32 %v208, %v250
  %v252 = vpop.f32.mrb[0].mxu0
  %v253 = vpop.f32.mrb[0].mxu0
  %v254 = vpop.f32.mrb[0].mxu0
  %255 = vdwg.mxu0
  %v256 = vadd.f32 %v251, %v206
  %v257 = vsel %vm209, %v256, -inf
  %258 = vmax.xlane.f32.xlu0 %v257
  %v259 = vpop.xlane.xlu0 %258
  %v260 = vsub.f32 %v256, %v259
  %v261 = vmul.f32 %v260, 1.442695
  %v262 = vpow.pop %v261
  %v263 = vsel %vm209, %v262, 0.0
  %264 = vadd.xlane.f32.xlu0 %v263
  %v265 = vpop.xlane.xlu0 %264
  %v266 = vrcp.pop %v265
  %v267 = vmul.f32 %v262, %v266
  %v268 = vpack.c.bf16 %v267, %v267
  %v269 = vmul.f32 %v267, %v196
  %v270 = vpack.c.bf16 %v269, %v269
  %v271 = vmul.f32 %v267, %v197
  %v272 = vpack.c.bf16 %v271, %v271
  %v273 = vmul.f32 %v267, %v198
  %v274 = vpack.c.bf16 %v273, %v273
  %v276 = vrot.slane %v270, 4
  %v278 = vrot.slane %v274, 4
  %v281 = vsel %vm60, %v268, %v276
  %v284 = vsel %vm60, %v272, %v278
  %286 = vrot.lane.b32.xlu0 %v191, 96
  %v287 = vpop.permute.xlu0 %286
  %v288 = vsel %vm209, %v281, 0
  %v290 = vsel %vm209, %v284, 0
  %v293 = vsel %vm60, %v287, 0
  %295 = vmatprep.subr.bf16.mxu0 0
  %296 = vmatpush1.bf16.msra.mxu0 %v293
  %297 = vmatprep.subr.bf16.mxu0 0
  %298 = vmatpush1.bf16.msra.mxu0 0
  %299 = vmatprep.subr.bf16.mxu0 0
  %300 = vmatpush1.bf16.msra.mxu0 0
  %301 = vmatprep.subr.bf16.mxu0 0
  %302 = vmatpush1.bf16.msra.mxu0 0
  %303 = vmatprep.subr.bf16.mxu0 0
  %304 = vmatpush1.bf16.msra.mxu0 0
  %305 = vmatprep.subr.bf16.mxu0 0
  %306 = vmatpush1.bf16.msra.mxu0 0
  %307 = vmatprep.subr.bf16.mxu0 0
  %308 = vmatpush1.bf16.msra.mxu0 0
  %309 = vmatprep.subr.bf16.mxu0 0
  %310 = vmatpush1.bf16.msra.mxu0 0
  %311 = vmatprep.subr.bf16.mxu0 0
  %312 = vmatpush1.bf16.msra.mxu0 0
  %313 = vmatprep.subr.bf16.mxu0 0
  %314 = vmatpush1.bf16.msra.mxu0 0
  %315 = vmatprep.subr.bf16.mxu0 0
  %316 = vmatpush1.bf16.msra.mxu0 0
  %317 = vmatprep.subr.bf16.mxu0 0
  %318 = vmatpush1.bf16.msra.mxu0 0
  %319 = vmatprep.subr.bf16.mxu0 0
  %320 = vmatpush1.bf16.msra.mxu0 0
  %321 = vmatprep.subr.bf16.mxu0 0
  %322 = vmatpush1.bf16.msra.mxu0 0
  %323 = vmatprep.subr.bf16.mxu0 0
  %324 = vmatpush1.bf16.msra.mxu0 0
  %325 = vmatprep.subr.bf16.mxu0 0
  %326 = vmatpush1.bf16.msra.mxu0 0
  %327 = vmatprep.mubr.bf16.mxu0 0
  %328 = vmatmul.mubr.bf16.gmra.mrb[0].mxu0 %v288
  %v329 = vpop.f32.mrb[0].mxu0
  %v330 = vadd.f32 0.0, %v329
  %v331 = vpop.f32.mrb[0].mxu0
  %v332 = vpop.f32.mrb[0].mxu0
  %v333 = vadd.f32 0.0, %v332
  %v334 = vpop.f32.mrb[0].mxu0
  %335 = vmatprep.mubr.bf16.mxu0 0
  %336 = vmatmul.mubr.bf16.gmra.mrb[0].mxu0 %v290
  %v337 = vpop.f32.mrb[0].mxu0
  %v338 = vadd.f32 0.0, %v337
  %v339 = vpop.f32.mrb[0].mxu0
  %v340 = vpop.f32.mrb[0].mxu0
  %v341 = vadd.f32 0.0, %v340
  %v342 = vpop.f32.mrb[0].mxu0
  %343 = vdwg.mxu0
  %s344 = scalar_lea.vmem %s2, 4
  %v345 = vld [vmem:[%s344] sm:$0xf]
  %v346 = vunpack.c.l.bf16 %v345
  %348 = vrot.lane.b32.xlu0 %v192, 120
  %v349 = vpop.permute.xlu0 %348
  %350 = vrot.lane.b32.xlu0 %v191, 120
  %v351 = vpop.permute.xlu0 %350
  %v353 = vsel %vm209, %v349, 0
  %v356 = vsel %vm209, %v351, 0
  %358 = vmatprep.subr.bf16.mxu0 0
  %359 = vmatpush1.bf16.xpose.msra.mxu0 %v356
  %360 = vmatprep.subr.bf16.mxu0 0
  %361 = vmatpush1.bf16.xpose.msra.mxu0 0
  %362 = vmatprep.subr.bf16.mxu0 0
  %363 = vmatpush1.bf16.xpose.msra.mxu0 0
  %364 = vmatprep.subr.bf16.mxu0 0
  %365 = vmatpush1.bf16.xpose.msra.mxu0 0
  %366 = vmatprep.subr.bf16.mxu0 0
  %367 = vmatpush1.bf16.xpose.msra.mxu0 0
  %368 = vmatprep.subr.bf16.mxu0 0
  %369 = vmatpush1.bf16.xpose.msra.mxu0 0
  %370 = vmatprep.subr.bf16.mxu0 0
  %371 = vmatpush1.bf16.xpose.msra.mxu0 0
  %372 = vmatprep.subr.bf16.mxu0 0
  %373 = vmatpush1.bf16.xpose.msra.mxu0 0
  %374 = vmatprep.subr.bf16.mxu0 0
  %375 = vmatpush1.bf16.xpose.msra.mxu0 0
  %376 = vmatprep.subr.bf16.mxu0 0
  %377 = vmatpush1.bf16.xpose.msra.mxu0 0
  %378 = vmatprep.subr.bf16.mxu0 0
  %379 = vmatpush1.bf16.xpose.msra.mxu0 0
  %380 = vmatprep.subr.bf16.mxu0 0
  %381 = vmatpush1.bf16.xpose.msra.mxu0 0
  %382 = vmatprep.subr.bf16.mxu0 0
  %383 = vmatpush1.bf16.xpose.msra.mxu0 0
  %384 = vmatprep.subr.bf16.mxu0 0
  %385 = vmatpush1.bf16.xpose.msra.mxu0 0
  %386 = vmatprep.subr.bf16.mxu0 0
  %387 = vmatpush1.bf16.xpose.msra.mxu0 0
  %388 = vmatprep.subr.bf16.mxu0 0
  %389 = vmatpush1.bf16.xpose.msra.mxu0 0
  %390 = vmatprep.mubr.bf16.mxu0 0
  %391 = vmatmul.mubr.bf16.gmra.mrb[0].mxu0 %v353
  %v392 = vpop.f32.mrb[0].mxu0
  %v393 = vadd.f32 %v346, %v392
  %v394 = vpop.f32.mrb[0].mxu0
  %v395 = vpop.f32.mrb[0].mxu0
  %v396 = vpop.f32.mrb[0].mxu0
  %397 = vdwg.mxu0
  %v398 = vadd.f32 %v393, %v206
  %v399 = vsel %vm209, %v398, -inf
  %400 = vmax.xlane.f32.xlu0 %v399
  %v401 = vpop.xlane.xlu0 %400
  %v402 = vsub.f32 %v398, %v401
  %v403 = vmul.f32 %v402, 1.442695
  %v404 = vpow.pop %v403
  %v405 = vsel %vm209, %v404, 0.0
  %406 = vadd.xlane.f32.xlu0 %v405
  %v407 = vpop.xlane.xlu0 %406
  %v408 = vrcp.pop %v407
  %v409 = vmul.f32 %v404, %v408
  %v410 = vpack.c.bf16 %v409, %v409
  %v411 = vmul.f32 %v409, %v196
  %v412 = vpack.c.bf16 %v411, %v411
  %v413 = vmul.f32 %v409, %v197
  %v414 = vpack.c.bf16 %v413, %v413
  %v415 = vmul.f32 %v409, %v198
  %v416 = vpack.c.bf16 %v415, %v415
  %v418 = vrot.slane %v412, 4
  %v420 = vrot.slane %v416, 4
  %v423 = vsel %vm60, %v410, %v418
  %v426 = vsel %vm60, %v414, %v420
  %427 = vrot.lane.b32.xlu0 %v191, 80
  %v428 = vpop.permute.xlu0 %427
  %v429 = vsel %vm209, %v423, 0
  %v431 = vsel %vm209, %v426, 0
  %v434 = vsel %vm60, %v428, 0
  %436 = vmatprep.subr.bf16.mxu0 0
  %437 = vmatpush1.bf16.msra.mxu0 %v434
  %438 = vmatprep.subr.bf16.mxu0 0
  %439 = vmatpush1.bf16.msra.mxu0 0
  %440 = vmatprep.subr.bf16.mxu0 0
  %441 = vmatpush1.bf16.msra.mxu0 0
  %442 = vmatprep.subr.bf16.mxu0 0
  %443 = vmatpush1.bf16.msra.mxu0 0
  %444 = vmatprep.subr.bf16.mxu0 0
  %445 = vmatpush1.bf16.msra.mxu0 0
  %446 = vmatprep.subr.bf16.mxu0 0
  %447 = vmatpush1.bf16.msra.mxu0 0
  %448 = vmatprep.subr.bf16.mxu0 0
  %449 = vmatpush1.bf16.msra.mxu0 0
  %450 = vmatprep.subr.bf16.mxu0 0
  %451 = vmatpush1.bf16.msra.mxu0 0
  %452 = vmatprep.subr.bf16.mxu0 0
  %453 = vmatpush1.bf16.msra.mxu0 0
  %454 = vmatprep.subr.bf16.mxu0 0
  %455 = vmatpush1.bf16.msra.mxu0 0
  %456 = vmatprep.subr.bf16.mxu0 0
  %457 = vmatpush1.bf16.msra.mxu0 0
  %458 = vmatprep.subr.bf16.mxu0 0
  %459 = vmatpush1.bf16.msra.mxu0 0
  %460 = vmatprep.subr.bf16.mxu0 0
  %461 = vmatpush1.bf16.msra.mxu0 0
  %462 = vmatprep.subr.bf16.mxu0 0
  %463 = vmatpush1.bf16.msra.mxu0 0
  %464 = vmatprep.subr.bf16.mxu0 0
  %465 = vmatpush1.bf16.msra.mxu0 0
  %466 = vmatprep.subr.bf16.mxu0 0
  %467 = vmatpush1.bf16.msra.mxu0 0
  %468 = vmatprep.mubr.bf16.mxu0 0
  %469 = vmatmul.mubr.bf16.gmra.mrb[0].mxu0 %v429
  %v470 = vpop.f32.mrb[0].mxu0
  %v471 = vadd.f32 0.0, %v470
  %v472 = vpop.f32.mrb[0].mxu0
  %v473 = vpop.f32.mrb[0].mxu0
  %v474 = vadd.f32 0.0, %v473
  %v475 = vpop.f32.mrb[0].mxu0
  %476 = vmatprep.mubr.bf16.mxu0 0
  %477 = vmatmul.mubr.bf16.gmra.mrb[0].mxu0 %v431
  %v478 = vpop.f32.mrb[0].mxu0
  %v479 = vadd.f32 0.0, %v478
  %v480 = vpop.f32.mrb[0].mxu0
  %v481 = vpop.f32.mrb[0].mxu0
  %v482 = vadd.f32 0.0, %v481
  %v483 = vpop.f32.mrb[0].mxu0
  %484 = vdwg.mxu0
  %s485 = scalar_lea.vmem %s2, 8
  %v486 = vld [vmem:[%s485] sm:$0xf]
  %v487 = vunpack.c.l.bf16 %v486
  %488 = vrot.lane.b32.xlu0 %v192, 112
  %v489 = vpop.permute.xlu0 %488
  %490 = vrot.lane.b32.xlu0 %v191, 112
  %v491 = vpop.permute.xlu0 %490
  %v493 = vsel %vm209, %v489, 0
  %v496 = vsel %vm209, %v491, 0
  %498 = vmatprep.subr.bf16.mxu0 0
  %499 = vmatpush1.bf16.xpose.msra.mxu0 %v496
  %500 = vmatprep.subr.bf16.mxu0 0
  %501 = vmatpush1.bf16.xpose.msra.mxu0 0
  %502 = vmatprep.subr.bf16.mxu0 0
  %503 = vmatpush1.bf16.xpose.msra.mxu0 0
  %504 = vmatprep.subr.bf16.mxu0 0
  %505 = vmatpush1.bf16.xpose.msra.mxu0 0
  %506 = vmatprep.subr.bf16.mxu0 0
  %507 = vmatpush1.bf16.xpose.msra.mxu0 0
  %508 = vmatprep.subr.bf16.mxu0 0
  %509 = vmatpush1.bf16.xpose.msra.mxu0 0
  %510 = vmatprep.subr.bf16.mxu0 0
  %511 = vmatpush1.bf16.xpose.msra.mxu0 0
  %512 = vmatprep.subr.bf16.mxu0 0
  %513 = vmatpush1.bf16.xpose.msra.mxu0 0
  %514 = vmatprep.subr.bf16.mxu0 0
  %515 = vmatpush1.bf16.xpose.msra.mxu0 0
  %516 = vmatprep.subr.bf16.mxu0 0
  %517 = vmatpush1.bf16.xpose.msra.mxu0 0
  %518 = vmatprep.subr.bf16.mxu0 0
  %519 = vmatpush1.bf16.xpose.msra.mxu0 0
  %520 = vmatprep.subr.bf16.mxu0 0
  %521 = vmatpush1.bf16.xpose.msra.mxu0 0
  %522 = vmatprep.subr.bf16.mxu0 0
  %523 = vmatpush1.bf16.xpose.msra.mxu0 0
  %524 = vmatprep.subr.bf16.mxu0 0
  %525 = vmatpush1.bf16.xpose.msra.mxu0 0
  %526 = vmatprep.subr.bf16.mxu0 0
  %527 = vmatpush1.bf16.xpose.msra.mxu0 0
  %528 = vmatprep.subr.bf16.mxu0 0
  %529 = vmatpush1.bf16.xpose.msra.mxu0 0
  %530 = vmatprep.mubr.bf16.mxu0 0
  %531 = vmatmul.mubr.bf16.gmra.mrb[0].mxu0 %v493
  %v532 = vpop.f32.mrb[0].mxu0
  %v533 = vadd.f32 %v487, %v532
  %v534 = vpop.f32.mrb[0].mxu0
  %v535 = vpop.f32.mrb[0].mxu0
  %v536 = vpop.f32.mrb[0].mxu0
  %537 = vdwg.mxu0
  %v538 = vadd.f32 %v533, %v206
  %v539 = vsel %vm209, %v538, -inf
  %540 = vmax.xlane.f32.xlu0 %v539
  %v541 = vpop.xlane.xlu0 %540
  %v542 = vsub.f32 %v538, %v541
  %v543 = vmul.f32 %v542, 1.442695
  %v544 = vpow.pop %v543
  %v545 = vsel %vm209, %v544, 0.0
  %546 = vadd.xlane.f32.xlu0 %v545
  %v547 = vpop.xlane.xlu0 %546
  %v548 = vrcp.pop %v547
  %v549 = vmul.f32 %v544, %v548
  %v550 = vpack.c.bf16 %v549, %v549
  %v551 = vmul.f32 %v549, %v196
  %v552 = vpack.c.bf16 %v551, %v551
  %v553 = vmul.f32 %v549, %v197
  %v554 = vpack.c.bf16 %v553, %v553
  %v555 = vmul.f32 %v549, %v198
  %v556 = vpack.c.bf16 %v555, %v555
  %v558 = vrot.slane %v552, 4
  %v560 = vrot.slane %v556, 4
  %v563 = vsel %vm60, %v550, %v558
  %v566 = vsel %vm60, %v554, %v560
  %567 = vrot.lane.b32.xlu0 %v191, 64
  %v568 = vpop.permute.xlu0 %567
  %v569 = vsel %vm209, %v563, 0
  %v571 = vsel %vm209, %v566, 0
  %v574 = vsel %vm60, %v568, 0
  %576 = vmatprep.subr.bf16.mxu0 0
  %577 = vmatpush1.bf16.msra.mxu0 %v574
  %578 = vmatprep.subr.bf16.mxu0 0
  %579 = vmatpush1.bf16.msra.mxu0 0
  %580 = vmatprep.subr.bf16.mxu0 0
  %581 = vmatpush1.bf16.msra.mxu0 0
  %582 = vmatprep.subr.bf16.mxu0 0
  %583 = vmatpush1.bf16.msra.mxu0 0
  %584 = vmatprep.subr.bf16.mxu0 0
  %585 = vmatpush1.bf16.msra.mxu0 0
  %586 = vmatprep.subr.bf16.mxu0 0
  %587 = vmatpush1.bf16.msra.mxu0 0
  %588 = vmatprep.subr.bf16.mxu0 0
  %589 = vmatpush1.bf16.msra.mxu0 0
  %590 = vmatprep.subr.bf16.mxu0 0
  %591 = vmatpush1.bf16.msra.mxu0 0
  %592 = vmatprep.subr.bf16.mxu0 0
  %593 = vmatpush1.bf16.msra.mxu0 0
  %594 = vmatprep.subr.bf16.mxu0 0
  %595 = vmatpush1.bf16.msra.mxu0 0
  %596 = vmatprep.subr.bf16.mxu0 0
  %597 = vmatpush1.bf16.msra.mxu0 0
  %598 = vmatprep.subr.bf16.mxu0 0
  %599 = vmatpush1.bf16.msra.mxu0 0
  %600 = vmatprep.subr.bf16.mxu0 0
  %601 = vmatpush1.bf16.msra.mxu0 0
  %602 = vmatprep.subr.bf16.mxu0 0
  %603 = vmatpush1.bf16.msra.mxu0 0
  %604 = vmatprep.subr.bf16.mxu0 0
  %605 = vmatpush1.bf16.msra.mxu0 0
  %606 = vmatprep.subr.bf16.mxu0 0
  %607 = vmatpush1.bf16.msra.mxu0 0
  %608 = vmatprep.mubr.bf16.mxu0 0
  %609 = vmatmul.mubr.bf16.gmra.mrb[0].mxu0 %v569
  %v610 = vpop.f32.mrb[0].mxu0
  %v611 = vadd.f32 0.0, %v610
  %v612 = vpop.f32.mrb[0].mxu0
  %v613 = vpop.f32.mrb[0].mxu0
  %v614 = vadd.f32 0.0, %v613
  %v615 = vpop.f32.mrb[0].mxu0
  %616 = vmatprep.mubr.bf16.mxu0 0
  %617 = vmatmul.mubr.bf16.gmra.mrb[0].mxu0 %v571
  %v618 = vpop.f32.mrb[0].mxu0
  %v619 = vadd.f32 0.0, %v618
  %v620 = vpop.f32.mrb[0].mxu0
  %v621 = vpop.f32.mrb[0].mxu0
  %v622 = vadd.f32 0.0, %v621
  %v623 = vpop.f32.mrb[0].mxu0
  %624 = vdwg.mxu0
  %s625 = scalar_lea.vmem %s2, 12
  %v626 = vld [vmem:[%s625] sm:$0xf]
  %v627 = vunpack.c.l.bf16 %v626
  %628 = vrot.lane.b32.xlu0 %v192, 104
  %v629 = vpop.permute.xlu0 %628
  %630 = vrot.lane.b32.xlu0 %v191, 104
  %v631 = vpop.permute.xlu0 %630
  %v633 = vsel %vm209, %v629, 0
  %v636 = vsel %vm209, %v631, 0
  %638 = vmatprep.subr.bf16.mxu0 0
  %639 = vmatpush1.bf16.xpose.msra.mxu0 %v636
  %640 = vmatprep.subr.bf16.mxu0 0
  %641 = vmatpush1.bf16.xpose.msra.mxu0 0
  %642 = vmatprep.subr.bf16.mxu0 0
  %643 = vmatpush1.bf16.xpose.msra.mxu0 0
  %644 = vmatprep.subr.bf16.mxu0 0
  %645 = vmatpush1.bf16.xpose.msra.mxu0 0
  %646 = vmatprep.subr.bf16.mxu0 0
  %647 = vmatpush1.bf16.xpose.msra.mxu0 0
  %648 = vmatprep.subr.bf16.mxu0 0
  %649 = vmatpush1.bf16.xpose.msra.mxu0 0
  %650 = vmatprep.subr.bf16.mxu0 0
  %651 = vmatpush1.bf16.xpose.msra.mxu0 0
  %652 = vmatprep.subr.bf16.mxu0 0
  %653 = vmatpush1.bf16.xpose.msra.mxu0 0
  %654 = vmatprep.subr.bf16.mxu0 0
  %655 = vmatpush1.bf16.xpose.msra.mxu0 0
  %656 = vmatprep.subr.bf16.mxu0 0
  %657 = vmatpush1.bf16.xpose.msra.mxu0 0
  %658 = vmatprep.subr.bf16.mxu0 0
  %659 = vmatpush1.bf16.xpose.msra.mxu0 0
  %660 = vmatprep.subr.bf16.mxu0 0
  %661 = vmatpush1.bf16.xpose.msra.mxu0 0
  %662 = vmatprep.subr.bf16.mxu0 0
  %663 = vmatpush1.bf16.xpose.msra.mxu0 0
  %664 = vmatprep.subr.bf16.mxu0 0
  %665 = vmatpush1.bf16.xpose.msra.mxu0 0
  %666 = vmatprep.subr.bf16.mxu0 0
  %667 = vmatpush1.bf16.xpose.msra.mxu0 0
  %668 = vmatprep.subr.bf16.mxu0 0
  %669 = vmatpush1.bf16.xpose.msra.mxu0 0
  %670 = vmatprep.mubr.bf16.mxu0 0
  %671 = vmatmul.mubr.bf16.gmra.mrb[0].mxu0 %v633
  %v672 = vpop.f32.mrb[0].mxu0
  %v673 = vadd.f32 %v627, %v672
  %v674 = vpop.f32.mrb[0].mxu0
  %v675 = vpop.f32.mrb[0].mxu0
  %v676 = vpop.f32.mrb[0].mxu0
  %677 = vdwg.mxu0
  %v678 = vadd.f32 %v673, %v206
  %v679 = vsel %vm209, %v678, -inf
  %680 = vmax.xlane.f32.xlu0 %v679
  %v681 = vpop.xlane.xlu0 %680
  %v682 = vsub.f32 %v678, %v681
  %v683 = vmul.f32 %v682, 1.442695
  %v684 = vpow.pop %v683
  %v685 = vsel %vm209, %v684, 0.0
  %686 = vadd.xlane.f32.xlu0 %v685
  %v687 = vpop.xlane.xlu0 %686
  %v688 = vrcp.pop %v687
  %v689 = vmul.f32 %v684, %v688
  %v690 = vpack.c.bf16 %v689, %v689
  %v691 = vmul.f32 %v689, %v196
  %v692 = vpack.c.bf16 %v691, %v691
  %v693 = vmul.f32 %v689, %v197
  %v694 = vpack.c.bf16 %v693, %v693
  %v695 = vmul.f32 %v689, %v198
  %v696 = vpack.c.bf16 %v695, %v695
  %v698 = vrot.slane %v692, 4
  %v700 = vrot.slane %v696, 4
  %v703 = vsel %vm60, %v690, %v698
  %v706 = vsel %vm60, %v694, %v700
  %707 = vrot.lane.b32.xlu0 %v191, 48
  %v708 = vpop.permute.xlu0 %707
  %v709 = vsel %vm209, %v703, 0
  %v711 = vsel %vm209, %v706, 0
  %v714 = vsel %vm60, %v708, 0
  %716 = vmatprep.subr.bf16.mxu0 0
  %717 = vmatpush1.bf16.msra.mxu0 %v714
  %718 = vmatprep.subr.bf16.mxu0 0
  %719 = vmatpush1.bf16.msra.mxu0 0
  %720 = vmatprep.subr.bf16.mxu0 0
  %721 = vmatpush1.bf16.msra.mxu0 0
  %722 = vmatprep.subr.bf16.mxu0 0
  %723 = vmatpush1.bf16.msra.mxu0 0
  %724 = vmatprep.subr.bf16.mxu0 0
  %725 = vmatpush1.bf16.msra.mxu0 0
  %726 = vmatprep.subr.bf16.mxu0 0
  %727 = vmatpush1.bf16.msra.mxu0 0
  %728 = vmatprep.subr.bf16.mxu0 0
  %729 = vmatpush1.bf16.msra.mxu0 0
  %730 = vmatprep.subr.bf16.mxu0 0
  %731 = vmatpush1.bf16.msra.mxu0 0
  %732 = vmatprep.subr.bf16.mxu0 0
  %733 = vmatpush1.bf16.msra.mxu0 0
  %734 = vmatprep.subr.bf16.mxu0 0
  %735 = vmatpush1.bf16.msra.mxu0 0
  %736 = vmatprep.subr.bf16.mxu0 0
  %737 = vmatpush1.bf16.msra.mxu0 0
  %738 = vmatprep.subr.bf16.mxu0 0
  %739 = vmatpush1.bf16.msra.mxu0 0
  %740 = vmatprep.subr.bf16.mxu0 0
  %741 = vmatpush1.bf16.msra.mxu0 0
  %742 = vmatprep.subr.bf16.mxu0 0
  %743 = vmatpush1.bf16.msra.mxu0 0
  %744 = vmatprep.subr.bf16.mxu0 0
  %745 = vmatpush1.bf16.msra.mxu0 0
  %746 = vmatprep.subr.bf16.mxu0 0
  %747 = vmatpush1.bf16.msra.mxu0 0
  %748 = vmatprep.mubr.bf16.mxu0 0
  %749 = vmatmul.mubr.bf16.gmra.mrb[0].mxu0 %v709
  %v750 = vpop.f32.mrb[0].mxu0
  %v751 = vadd.f32 0.0, %v750
  %v752 = vpop.f32.mrb[0].mxu0
  %v753 = vpop.f32.mrb[0].mxu0
  %v754 = vadd.f32 0.0, %v753
  %v755 = vpop.f32.mrb[0].mxu0
  %756 = vmatprep.mubr.bf16.mxu0 0
  %757 = vmatmul.mubr.bf16.gmra.mrb[0].mxu0 %v711
  %v758 = vpop.f32.mrb[0].mxu0
  %v759 = vadd.f32 0.0, %v758
  %v760 = vpop.f32.mrb[0].mxu0
  %v761 = vpop.f32.mrb[0].mxu0
  %v762 = vadd.f32 0.0, %v761
  %v763 = vpop.f32.mrb[0].mxu0
  %764 = vdwg.mxu0
  %766 = vrot.lane.b32.xlu0 %v333, 16
  %v767 = vpop.permute.xlu0 %766
  %770 = vrot.lane.b32.xlu0 %v338, 32
  %v771 = vpop.permute.xlu0 %770
  %774 = vrot.lane.b32.xlu0 %v341, 48
  %v775 = vpop.permute.xlu0 %774
  %778 = vrot.lane.b32.xlu0 %v471, 64
  %v779 = vpop.permute.xlu0 %778
  %782 = vrot.lane.b32.xlu0 %v474, 80
  %v783 = vpop.permute.xlu0 %782
  %786 = vrot.lane.b32.xlu0 %v479, 96
  %v787 = vpop.permute.xlu0 %786
  %790 = vrot.lane.b32.xlu0 %v482, 112
  %v791 = vpop.permute.xlu0 %790
  %794 = vrot.lane.b32.xlu0 %v614, 16
  %v795 = vpop.permute.xlu0 %794
  %798 = vrot.lane.b32.xlu0 %v619, 32
  %v799 = vpop.permute.xlu0 %798
  %802 = vrot.lane.b32.xlu0 %v622, 48
  %v803 = vpop.permute.xlu0 %802
  %806 = vrot.lane.b32.xlu0 %v751, 64
  %v807 = vpop.permute.xlu0 %806
  %810 = vrot.lane.b32.xlu0 %v754, 80
  %v811 = vpop.permute.xlu0 %810
  %814 = vrot.lane.b32.xlu0 %v759, 96
  %v815 = vpop.permute.xlu0 %814
  %818 = vrot.lane.b32.xlu0 %v762, 112
  %v819 = vpop.permute.xlu0 %818
  %vm821 = vcmask 130048
  %v822 = vsel %vm821, %v330, %v767
  %vm823 = vcmask 261120
  %v824 = vsel %vm823, %v822, %v771
  %vm825 = vcmask 392192
  %v826 = vsel %vm825, %v824, %v775
  %vm827 = vcmask 523264
  %v828 = vsel %vm827, %v826, %v779
  %vm829 = vcmask 654336
  %v830 = vsel %vm829, %v828, %v783
  %vm831 = vcmask 785408
  %v832 = vsel %vm831, %v830, %v787
  %vm833 = vcmask 916480
  %v834 = vsel %vm833, %v832, %v791
  %v835 = vsel %vm821, %v611, %v795
  %v836 = vsel %vm823, %v835, %v799
  %v837 = vsel %vm825, %v836, %v803
  %v838 = vsel %vm827, %v837, %v807
  %v839 = vsel %vm829, %v838, %v811
  %v840 = vsel %vm831, %v839, %v815
  %v841 = vsel %vm833, %v840, %v819
  %v842 = vpack.c.bf16 %v834, %v834
  %v843 = vpack.c.bf16 %v841, %v841
  %v844 = vld [vmem:[%s5] sm:$0xf]
  %v845 = vld [vmem:[%s5 + $0x4] sm:$0xf]
  %v846 = vld [vmem:[%s5 + $0x8] sm:$0xf]
  %v847 = vld [vmem:[%s5 + $0xc] sm:$0xf]
  %v848 = vld [vmem:[%s5 + $0x10] sm:$0xf]
  %v849 = vld [vmem:[%s5 + $0x14] sm:$0xf]
  %v850 = vld [vmem:[%s5 + $0x18] sm:$0xf]
  %v851 = vld [vmem:[%s5 + $0x1c] sm:$0xf]
  %v852 = vld [vmem:[%s5 + $0x20] sm:$0xf]
  %v853 = vld [vmem:[%s5 + $0x24] sm:$0xf]
  %v854 = vld [vmem:[%s5 + $0x28] sm:$0xf]
  %v855 = vld [vmem:[%s5 + $0x2c] sm:$0xf]
  %v856 = vld [vmem:[%s5 + $0x30] sm:$0xf]
  %v857 = vld [vmem:[%s5 + $0x34] sm:$0xf]
  %v858 = vld [vmem:[%s5 + $0x38] sm:$0xf]
  %v859 = vld [vmem:[%s5 + $0x3c] sm:$0xf]
  %v860 = vld [vmem:[%s5 + $0x40] sm:$0xf]
  %v861 = vld [vmem:[%s5 + $0x44] sm:$0xf]
  %v862 = vld [vmem:[%s5 + $0x48] sm:$0xf]
  %v863 = vld [vmem:[%s5 + $0x4c] sm:$0xf]
  %v864 = vld [vmem:[%s5 + $0x50] sm:$0xf]
  %v865 = vld [vmem:[%s5 + $0x54] sm:$0xf]
  %v866 = vld [vmem:[%s5 + $0x58] sm:$0xf]
  %v867 = vld [vmem:[%s5 + $0x5c] sm:$0xf]
  %v868 = vld [vmem:[%s5 + $0x60] sm:$0xf]
  %v869 = vld [vmem:[%s5 + $0x64] sm:$0xf]
  %v870 = vld [vmem:[%s5 + $0x68] sm:$0xf]
  %v871 = vld [vmem:[%s5 + $0x6c] sm:$0xf]
  %v872 = vld [vmem:[%s5 + $0x70] sm:$0xf]
  %v873 = vld [vmem:[%s5 + $0x74] sm:$0xf]
  %v874 = vld [vmem:[%s5 + $0x78] sm:$0xf]
  %v875 = vld [vmem:[%s5 + $0x7c] sm:$0xf]
  %v908 = vunpack.c.l.b16 %v844
  %v909 = vunpack.c.l.b16 %v845
  %v910 = vunpack.c.l.b16 %v846
  %v911 = vunpack.c.l.b16 %v847
  %v912 = vunpack.c.l.b16 %v848
  %v913 = vunpack.c.l.b16 %v849
  %v914 = vunpack.c.l.b16 %v850
  %v915 = vunpack.c.l.b16 %v851
  %v916 = vunpack.c.l.b16 %v852
  %v917 = vunpack.c.l.b16 %v853
  %v918 = vunpack.c.l.b16 %v854
  %v919 = vunpack.c.l.b16 %v855
  %v920 = vunpack.c.l.b16 %v856
  %v921 = vunpack.c.l.b16 %v857
  %v922 = vunpack.c.l.b16 %v858
  %v923 = vunpack.c.l.b16 %v859
  %v924 = vunpack.c.l.b16 %v860
  %v925 = vunpack.c.l.b16 %v861
  %v926 = vunpack.c.l.b16 %v862
  %v927 = vunpack.c.l.b16 %v863
  %v928 = vunpack.c.l.b16 %v864
  %v929 = vunpack.c.l.b16 %v865
  %v930 = vunpack.c.l.b16 %v866
  %v931 = vunpack.c.l.b16 %v867
  %v932 = vunpack.c.l.b16 %v868
  %v933 = vunpack.c.l.b16 %v869
  %v934 = vunpack.c.l.b16 %v870
  %v935 = vunpack.c.l.b16 %v871
  %v936 = vunpack.c.l.b16 %v872
  %v937 = vunpack.c.l.b16 %v873
  %v938 = vunpack.c.l.b16 %v874
  %v939 = vunpack.c.l.b16 %v875
  %v940 = vpack.c.b16 %v909, %v908
  %v941 = vpack.c.b16 %v911, %v910
  %v942 = vpack.c.b16 %v913, %v912
  %v943 = vpack.c.b16 %v915, %v914
  %v944 = vpack.c.b16 %v917, %v916
  %v945 = vpack.c.b16 %v919, %v918
  %v946 = vpack.c.b16 %v921, %v920
  %v947 = vpack.c.b16 %v923, %v922
  %v948 = vpack.c.b16 %v925, %v924
  %v949 = vpack.c.b16 %v927, %v926
  %v950 = vpack.c.b16 %v929, %v928
  %v951 = vpack.c.b16 %v931, %v930
  %v952 = vpack.c.b16 %v933, %v932
  %v953 = vpack.c.b16 %v935, %v934
  %v954 = vpack.c.b16 %v937, %v936
  %v955 = vpack.c.b16 %v939, %v938
  %974 = vrot.lane.b32.xlu0 %v185, 96
  %v975 = vpop.permute.xlu0 %974
  %976 = vrot.lane.b32.xlu0 %v187, 96
  %v977 = vpop.permute.xlu0 %976
  %v978 = vsel %vm831, %v975, %v977
  %980 = vmatprep.subr.bf16.mxu0 0
  %981 = vmatpush1.bf16.msra.mxu0 %v940
  %982 = vmatprep.subr.bf16.mxu0 0
  %983 = vmatpush1.bf16.msra.mxu0 %v941
  %984 = vmatprep.subr.bf16.mxu0 0
  %985 = vmatpush1.bf16.msra.mxu0 %v942
  %986 = vmatprep.subr.bf16.mxu0 0
  %987 = vmatpush1.bf16.msra.mxu0 %v943
  %988 = vmatprep.subr.bf16.mxu0 0
  %989 = vmatpush1.bf16.msra.mxu0 %v944
  %990 = vmatprep.subr.bf16.mxu0 0
  %991 = vmatpush1.bf16.msra.mxu0 %v945
  %992 = vmatprep.subr.bf16.mxu0 0
  %993 = vmatpush1.bf16.msra.mxu0 %v946
  %994 = vmatprep.subr.bf16.mxu0 0
  %995 = vmatpush1.bf16.msra.mxu0 %v947
  %996 = vmatprep.subr.bf16.mxu0 0
  %997 = vmatpush1.bf16.msra.mxu0 %v948
  %998 = vmatprep.subr.bf16.mxu0 0
  %999 = vmatpush1.bf16.msra.mxu0 %v949
  %1000 = vmatprep.subr.bf16.mxu0 0
  %1001 = vmatpush1.bf16.msra.mxu0 %v950
  %1002 = vmatprep.subr.bf16.mxu0 0
  %1003 = vmatpush1.bf16.msra.mxu0 %v951
  %1004 = vmatprep.subr.bf16.mxu0 0
  %1005 = vmatpush1.bf16.msra.mxu0 %v952
  %1006 = vmatprep.subr.bf16.mxu0 0
  %1007 = vmatpush1.bf16.msra.mxu0 %v953
  %1008 = vmatprep.subr.bf16.mxu0 0
  %1009 = vmatpush1.bf16.msra.mxu0 %v954
  %1010 = vmatprep.subr.bf16.mxu0 0
  %1011 = vmatpush1.bf16.msra.mxu0 %v955
  %1012 = vmatprep.mubr.bf16.mxu0 %v843
  %1013 = vmatmul.mubr.bf16.gmra.mrb[0].mxu0 %v842
  %v1014 = vpop.f32.mrb[0].mxu0
  %v1015 = vadd.f32 %v978, %v1014
  %v1016 = vpop.f32.mrb[0].mxu0
  %v1017 = vpop.f32.mrb[0].mxu0
  %v1018 = vpop.f32.mrb[0].mxu0
  %1019 = vdwg.mxu0
  %v1020 = vld [vmem:[%s6] sm:$0x1]
  %v1021 = vlaneseq
  %v1022 = vshrl.u32 %v1021, 7
  %v1023 = vsub.s32 0, %v1022
  %v1024 = vrot.slane %v1020, %v1023
  %v1025 = vadd.f32 %v1015, %v1024
  %v1026 = vld [vmem:[%s6 + $0x1] sm:$0x1]
  %v1027 = vld [vmem:[%s6 + $0x2] sm:$0x1]
  %v1028 = vld [vmem:[%s6 + $0x3] sm:$0x1]
  %v1029 = vld [vmem:[%s6 + $0x4] sm:$0x1]
  %vm1030 = vcmp.gt.f32.partialorder %v1025, 0.0
  %vm1031 = vcmp.lt.f32.partialorder %v1025, 0.0
  %v1032 = vsel %vm1031, -1.0, 0.0
  %v1033 = vsel %vm1030, 1.0, %v1032
  %v1034 = vand.u32 2147483647, %v1025
  %v1035 = vsel %vm823, %v1034, 0.0
  %1036 = vadd.xlane.f32.xlu0 %v1035
  %v1037 = vpop.xlane.xlu0 %1036
  %v1038 = vrcp.pop 32.0
  %v1039 = vmul.f32 %v1037, %v1038
  %v1040 = vsub.f32 %v1034, %v1039
  %v1041 = vmul.f32 %v1040, %v1040
  %v1042 = vsel %vm823, %v1041, 0.0
  %1043 = vadd.xlane.f32.xlu0 %v1042
  %v1044 = vpop.xlane.xlu0 %1043
  %v1045 = vmul.f32 %v1044, %v1038
  %v1046 = vadd.f32 %v1045, 1e-05
  %v1047 = vrsqrt.pop %v1046
  %v1048 = vmul.f32 %v1040, %v1047
  %v1049 = vlaneseq
  %v1050 = vshrl.u32 %v1049, 7
  %v1051 = vsub.s32 0, %v1050
  %v1052 = vrot.slane %v1026, %v1051
  %v1053 = vmul.f32 %v1048, %v1052
  %v1054 = vlaneseq
  %v1055 = vshrl.u32 %v1054, 7
  %v1056 = vsub.s32 0, %v1055
  %v1057 = vrot.slane %v1027, %v1056
  %v1058 = vadd.f32 %v1053, %v1057
  %v1059 = vmax.f32 %v1058, 0.0
  %v1060 = vmul.f32 %v1033, %v1059
  %v1061 = vmul.f32 %v1025, %v1025
  %1063 = vrot.lane.b32.xlu0 %v1061, 96
  %v1064 = vpop.permute.xlu0 %1063
  %v1066 = vadd.f32 %v1061, %v1064
  %1067 = vrot.lane.b32.xlu0 %v1061, 64
  %v1068 = vpop.permute.xlu0 %1067
  %v1070 = vadd.f32 %v1066, %v1068
  %v1071 = vadd.f32 %v1070, 1e-06
  %v1072 = vrsqrt.pop %v1071
  %v1073 = vmul.f32 %v1071, %v1072
  %vm1074 = vcmp.eq.f32.partialorder %v1071, inf
  %v1075 = vsel %vm1074, %v1071, %v1073
  %vm1076 = vcmp.eq.f32.partialorder %v1071, 0.0
  %v1077 = vand.u32 %v1071, 2147483648
  %v1078 = vsel %vm1076, %v1077, %v1075
  %1080 = vrot.lane.b32.xlu0 %v1078, 96
  %v1081 = vpop.permute.xlu0 %1080
  %v1083 = vsel %vm823, %v1081, 0.0
  %1084 = vadd.xlane.f32.xlu0 %v1083
  %v1085 = vpop.xlane.xlu0 %1084
  %v1086 = vmul.f32 %v1085, %v1038
  %v1087 = vsub.f32 %v1078, %v1086
  %v1088 = vmul.f32 %v1087, %v1087
  %1090 = vrot.lane.b32.xlu0 %v1088, 96
  %v1091 = vpop.permute.xlu0 %1090
  %v1093 = vsel %vm823, %v1091, 0.0
  %1094 = vadd.xlane.f32.xlu0 %v1093
  %v1095 = vpop.xlane.xlu0 %1094
  %v1096 = vmul.f32 %v1095, %v1038
  %v1097 = vadd.f32 %v1096, 1e-05
  %v1098 = vrsqrt.pop %v1097
  %v1099 = vmul.f32 %v1087, %v1098
  %v1100 = vlaneseq
  %v1101 = vshrl.u32 %v1100, 7
  %v1102 = vsub.s32 0, %v1101
  %v1103 = vrot.slane %v1028, %v1102
  %1105 = vrot.lane.b32.xlu0 %v1103, 32
  %v1106 = vpop.permute.xlu0 %1105
  %v1108 = vmul.f32 %v1099, %v1106
  %v1109 = vlaneseq
  %v1110 = vshrl.u32 %v1109, 7
  %v1111 = vsub.s32 0, %v1110
  %v1112 = vrot.slane %v1029, %v1111
  %1114 = vrot.lane.b32.xlu0 %v1112, 32
  %v1115 = vpop.permute.xlu0 %1114
  %v1117 = vadd.f32 %v1108, %v1115
  %v1118 = vmax.f32 %v1117, 0.0
  %v1119 = vadd.f32 %v1078, 1e-06
  %v1120 = vrcp.pop %v1119
  %v1121 = vmul.f32 %v1118, %v1120
  %v1122 = vmul.f32 %v1025, %v1121
  %1124 = vrot.lane.b32.xlu0 %v1121, 32
  %v1125 = vpop.permute.xlu0 %1124
  %v1127 = vmul.f32 %v1025, %v1125
  %1128 = vrot.lane.b32.xlu0 %v1121, 64
  %v1129 = vpop.permute.xlu0 %1128
  %v1131 = vmul.f32 %v1025, %v1129
  %v1132 = vsel %vm823, %v1060, %v1122
  %v1133 = vsel %vm827, %v1132, %v1127
  %v1134 = vsel %vm831, %v1133, %v1131
  %1135 = vst [vmem:[%s7] sm:$0xff] %v1134
  // Predicated region
  $region30: #{se3_forward.2} parent=0 // pred_check
    _
  $region31: #{se3_forward.2} parent=0 // pred_check_branch
    %1137 = sbr.rel (0) target = $region33
  $region32: #{se3_forward.2} parent=0 // pred_region
    _
  $region33: #{se3_forward.2} parent=0 // pred_fallthru
    _
  // Predicated region
  $region34: #{se3_forward.2} parent=0 // pred_check
    _
  $region35: #{se3_forward.2} parent=0 // pred_check_branch
    %1139 = sbr.rel (0) target = $region37
  $region36: #{se3_forward.2} parent=0 // pred_region
    _
  $region37: #{se3_forward.2} parent=0 // pred_fallthru
    _

// kernel: se3_forward.3
$region0: #{se3_forward.3}
  #allocation0 [shape = 'u32[]', space=smem, size = 0x4, offset = 0x4, fixed_abs, tag = 'smem constant byte address 0x4 - core index']
  #allocation1 [shape = 'u32[144,128]{1,0:T(1,128)}', space=vmem, size = 0x12000, scoped, tag = 'internal scratch']
  %s0 = inlined_call_operand.vmem [shape: f32[8,128], index: 0, kind: input, shape index: {}]
  %s1 = inlined_call_operand.vmem [shape: bf16[3,8,8], index: 1, kind: input, shape index: {}]
  %s2 = inlined_call_operand.vmem [shape: bf16[4,8,8], index: 2, kind: input, shape index: {}]
  %s3 = inlined_call_operand.vmem [shape: bf16[128,96], index: 3, kind: input, shape index: {}]
  %s4 = inlined_call_operand.vmem [shape: bf16[128,160], index: 4, kind: input, shape index: {}]
  %s5 = inlined_call_operand.vmem [shape: bf16[256,128], index: 5, kind: input, shape index: {}]
  %s6 = inlined_call_operand.vmem [shape: f32[8,128], index: 6, kind: input, shape index: {}]
  %s7 = inlined_call_operand.vmem [shape: bf16[128,38], index: 7, kind: input, shape index: {}]
  %s8 = inlined_call_operand.vmem [shape: f32[8,38], index: 8, kind: output, shape index: {}]
  %s9 = sld [smem:[#allocation0]]
  $region42: #{se3_forward.3} parent=0
    _
  %s11 = ssub.s32 1, %s9
  %s12 = scalar_select 0, %s11, %s9
  // Predicated region
  $region2: #{se3_forward.3} parent=0 // pred_check
    _
  $region3: #{se3_forward.3} parent=0 // pred_check_branch
    %14 = sbr.rel (0) target = $region5
  $region4: #{se3_forward.3} parent=0 // pred_region
    _
  $region5: #{se3_forward.3} parent=0 // pred_fallthru
    _
  // Predicated region
  $region6: #{se3_forward.3} parent=0 // pred_check
    _
  $region7: #{se3_forward.3} parent=0 // pred_check_branch
    %16 = sbr.rel (0) target = $region9
  $region8: #{se3_forward.3} parent=0 // pred_region
    _
  $region9: #{se3_forward.3} parent=0 // pred_fallthru
    _
  // Predicated region
  $region10: #{se3_forward.3} parent=0 // pred_check
    _
  $region11: #{se3_forward.3} parent=0 // pred_check_branch
    %18 = sbr.rel (0) target = $region13
  $region12: #{se3_forward.3} parent=0 // pred_region
    _
  $region13: #{se3_forward.3} parent=0 // pred_fallthru
    _
  // Predicated region
  $region14: #{se3_forward.3} parent=0 // pred_check
    _
  $region15: #{se3_forward.3} parent=0 // pred_check_branch
    %20 = sbr.rel (0) target = $region17
  $region16: #{se3_forward.3} parent=0 // pred_region
    _
  $region17: #{se3_forward.3} parent=0 // pred_fallthru
    _
  // Predicated region
  $region18: #{se3_forward.3} parent=0 // pred_check
    _
  $region19: #{se3_forward.3} parent=0 // pred_check_branch
    %22 = sbr.rel (0) target = $region21
  $region20: #{se3_forward.3} parent=0 // pred_region
    _
  $region21: #{se3_forward.3} parent=0 // pred_fallthru
    _
  // Predicated region
  $region22: #{se3_forward.3} parent=0 // pred_check
    _
  $region23: #{se3_forward.3} parent=0 // pred_check_branch
    %24 = sbr.rel (0) target = $region25
  $region24: #{se3_forward.3} parent=0 // pred_region
    _
  $region25: #{se3_forward.3} parent=0 // pred_fallthru
    _
  // Predicated region
  $region26: #{se3_forward.3} parent=0 // pred_check
    _
  $region27: #{se3_forward.3} parent=0 // pred_check_branch
    %26 = sbr.rel (0) target = $region29
  $region28: #{se3_forward.3} parent=0 // pred_region
    _
  $region29: #{se3_forward.3} parent=0 // pred_fallthru
    _
  // Predicated region
  $region30: #{se3_forward.3} parent=0 // pred_check
    _
  $region31: #{se3_forward.3} parent=0 // pred_check_branch
    %28 = sbr.rel (0) target = $region33
  $region32: #{se3_forward.3} parent=0 // pred_region
    _
  $region33: #{se3_forward.3} parent=0 // pred_fallthru
    _
  %s30 = smul.u32 0, 8
  %v31 = vld [vmem:[%s0] sm:$0xff]
  %v32 = vpack.c.bf16 %v31, %v31
  %s33 = scalar_lea.vmem %s0, %s30
  %v34 = vld [vmem:[%s33] sm:$0xff]
  %v35 = vpack.c.bf16 %v34, %v34
  %v36 = vld [vmem:[%s3] sm:$0xf]
  %v37 = vld [vmem:[%s3 + $0x4] sm:$0xf]
  %v38 = vld [vmem:[%s3 + $0x8] sm:$0xf]
  %v39 = vld [vmem:[%s3 + $0xc] sm:$0xf]
  %v40 = vld [vmem:[%s3 + $0x10] sm:$0xf]
  %v41 = vld [vmem:[%s3 + $0x14] sm:$0xf]
  %v42 = vld [vmem:[%s3 + $0x18] sm:$0xf]
  %v43 = vld [vmem:[%s3 + $0x1c] sm:$0xf]
  %v44 = vld [vmem:[%s3 + $0x20] sm:$0xf]
  %v45 = vld [vmem:[%s3 + $0x24] sm:$0xf]
  %v46 = vld [vmem:[%s3 + $0x28] sm:$0xf]
  %v47 = vld [vmem:[%s3 + $0x2c] sm:$0xf]
  %v48 = vld [vmem:[%s3 + $0x30] sm:$0xf]
  %v49 = vld [vmem:[%s3 + $0x34] sm:$0xf]
  %v50 = vld [vmem:[%s3 + $0x38] sm:$0xf]
  %v51 = vld [vmem:[%s3 + $0x3c] sm:$0xf]
  %v68 = vunpack.c.l.b16 %v36
  %v69 = vunpack.c.l.b16 %v37
  %v70 = vunpack.c.l.b16 %v38
  %v71 = vunpack.c.l.b16 %v39
  %v72 = vunpack.c.l.b16 %v40
  %v73 = vunpack.c.l.b16 %v41
  %v74 = vunpack.c.l.b16 %v42
  %v75 = vunpack.c.l.b16 %v43
  %v76 = vunpack.c.l.b16 %v44
  %v77 = vunpack.c.l.b16 %v45
  %v78 = vunpack.c.l.b16 %v46
  %v79 = vunpack.c.l.b16 %v47
  %v80 = vunpack.c.l.b16 %v48
  %v81 = vunpack.c.l.b16 %v49
  %v82 = vunpack.c.l.b16 %v50
  %v83 = vunpack.c.l.b16 %v51
  %v84 = vpack.c.b16 %v69, %v68
  %v85 = vpack.c.b16 %v71, %v70
  %v86 = vpack.c.b16 %v73, %v72
  %v87 = vpack.c.b16 %v75, %v74
  %v88 = vpack.c.b16 %v77, %v76
  %v89 = vpack.c.b16 %v79, %v78
  %v90 = vpack.c.b16 %v81, %v80
  %v91 = vpack.c.b16 %v83, %v82
  %100 = vmatprep.subr.bf16.mxu0 0
  %101 = vmatpush1.bf16.msra.mxu0 %v84
  %102 = vmatprep.subr.bf16.mxu0 0
  %103 = vmatpush1.bf16.msra.mxu0 %v85
  %104 = vmatprep.subr.bf16.mxu0 0
  %105 = vmatpush1.bf16.msra.mxu0 %v86
  %106 = vmatprep.subr.bf16.mxu0 0
  %107 = vmatpush1.bf16.msra.mxu0 %v87
  %108 = vmatprep.subr.bf16.mxu0 0
  %109 = vmatpush1.bf16.msra.mxu0 %v88
  %110 = vmatprep.subr.bf16.mxu0 0
  %111 = vmatpush1.bf16.msra.mxu0 %v89
  %112 = vmatprep.subr.bf16.mxu0 0
  %113 = vmatpush1.bf16.msra.mxu0 %v90
  %114 = vmatprep.subr.bf16.mxu0 0
  %115 = vmatpush1.bf16.msra.mxu0 %v91
  %116 = vmatprep.subr.bf16.mxu0 0
  %117 = vmatpush1.bf16.msra.mxu0 0
  %118 = vmatprep.subr.bf16.mxu0 0
  %119 = vmatpush1.bf16.msra.mxu0 0
  %120 = vmatprep.subr.bf16.mxu0 0
  %121 = vmatpush1.bf16.msra.mxu0 0
  %122 = vmatprep.subr.bf16.mxu0 0
  %123 = vmatpush1.bf16.msra.mxu0 0
  %124 = vmatprep.subr.bf16.mxu0 0
  %125 = vmatpush1.bf16.msra.mxu0 0
  %126 = vmatprep.subr.bf16.mxu0 0
  %127 = vmatpush1.bf16.msra.mxu0 0
  %128 = vmatprep.subr.bf16.mxu0 0
  %129 = vmatpush1.bf16.msra.mxu0 0
  %130 = vmatprep.subr.bf16.mxu0 0
  %131 = vmatpush1.bf16.msra.mxu0 0
  %132 = vmatprep.mubr.bf16.mxu0 0
  %133 = vmatmul.mubr.bf16.gmra.mrb[0].mxu0 %v32
  %v134 = vpop.f32.mrb[0].mxu0
  %v135 = vadd.f32 0.0, %v134
  %v136 = vpop.f32.mrb[0].mxu0
  %v137 = vpop.f32.mrb[0].mxu0
  %v138 = vpop.f32.mrb[0].mxu0
  %139 = vdwg.mxu0
  %v140 = vld [vmem:[%s4] sm:$0xff]
  %v141 = vld [vmem:[%s4 + $0x8] sm:$0xff]
  %v142 = vld [vmem:[%s4 + $0x10] sm:$0xff]
  %v143 = vld [vmem:[%s4 + $0x18] sm:$0xff]
  %v144 = vld [vmem:[%s4 + $0x20] sm:$0xff]
  %v145 = vld [vmem:[%s4 + $0x28] sm:$0xff]
  %v146 = vld [vmem:[%s4 + $0x30] sm:$0xff]
  %v147 = vld [vmem:[%s4 + $0x38] sm:$0xff]
  %v148 = vld [vmem:[%s4 + $0x40] sm:$0xff]
  %v149 = vld [vmem:[%s4 + $0x48] sm:$0xff]
  %v150 = vld [vmem:[%s4 + $0x50] sm:$0xff]
  %v151 = vld [vmem:[%s4 + $0x58] sm:$0xff]
  %v152 = vld [vmem:[%s4 + $0x60] sm:$0xff]
  %v153 = vld [vmem:[%s4 + $0x68] sm:$0xff]
  %v154 = vld [vmem:[%s4 + $0x70] sm:$0xff]
  %v155 = vld [vmem:[%s4 + $0x78] sm:$0xff]
  %v172 = vunpack.c.l.b16 %v140
  %v173 = vunpack.c.h.b16 %v140
  %v174 = vunpack.c.l.b16 %v141
  %v175 = vunpack.c.h.b16 %v141
  %v176 = vunpack.c.l.b16 %v142
  %v177 = vunpack.c.h.b16 %v142
  %v178 = vunpack.c.l.b16 %v143
  %v179 = vunpack.c.h.b16 %v143
  %v180 = vunpack.c.l.b16 %v144
  %v181 = vunpack.c.h.b16 %v144
  %v182 = vunpack.c.l.b16 %v145
  %v183 = vunpack.c.h.b16 %v145
  %v184 = vunpack.c.l.b16 %v146
  %v185 = vunpack.c.h.b16 %v146
  %v186 = vunpack.c.l.b16 %v147
  %v187 = vunpack.c.h.b16 %v147
  %v188 = vunpack.c.l.b16 %v148
  %v189 = vunpack.c.h.b16 %v148
  %v190 = vunpack.c.l.b16 %v149
  %v191 = vunpack.c.h.b16 %v149
  %v192 = vunpack.c.l.b16 %v150
  %v193 = vunpack.c.h.b16 %v150
  %v194 = vunpack.c.l.b16 %v151
  %v195 = vunpack.c.h.b16 %v151
  %v196 = vunpack.c.l.b16 %v152
  %v197 = vunpack.c.h.b16 %v152
  %v198 = vunpack.c.l.b16 %v153
  %v199 = vunpack.c.h.b16 %v153
  %v200 = vunpack.c.l.b16 %v154
  %v201 = vunpack.c.h.b16 %v154
  %v202 = vunpack.c.l.b16 %v155
  %v203 = vunpack.c.h.b16 %v155
  %v204 = vpack.c.b16 %v174, %v172
  %v205 = vpack.c.b16 %v175, %v173
  %v206 = vpack.c.b16 %v178, %v176
  %v207 = vpack.c.b16 %v179, %v177
  %v208 = vpack.c.b16 %v182, %v180
  %v209 = vpack.c.b16 %v183, %v181
  %v210 = vpack.c.b16 %v186, %v184
  %v211 = vpack.c.b16 %v187, %v185
  %v212 = vpack.c.b16 %v190, %v188
  %v213 = vpack.c.b16 %v191, %v189
  %v214 = vpack.c.b16 %v194, %v192
  %v215 = vpack.c.b16 %v195, %v193
  %v216 = vpack.c.b16 %v198, %v196
  %v217 = vpack.c.b16 %v199, %v197
  %v218 = vpack.c.b16 %v202, %v200
  %v219 = vpack.c.b16 %v203, %v201
  %236 = vmatprep.subr.bf16.mxu0 %v205
  %237 = vmatpush1.bf16.msra.mxu0 %v204
  %238 = vmatprep.subr.bf16.mxu0 %v207
  %239 = vmatpush1.bf16.msra.mxu0 %v206
  %240 = vmatprep.subr.bf16.mxu0 %v209
  %241 = vmatpush1.bf16.msra.mxu0 %v208
  %242 = vmatprep.subr.bf16.mxu0 %v211
  %243 = vmatpush1.bf16.msra.mxu0 %v210
  %244 = vmatprep.subr.bf16.mxu0 %v213
  %245 = vmatpush1.bf16.msra.mxu0 %v212
  %246 = vmatprep.subr.bf16.mxu0 %v215
  %247 = vmatpush1.bf16.msra.mxu0 %v214
  %248 = vmatprep.subr.bf16.mxu0 %v217
  %249 = vmatpush1.bf16.msra.mxu0 %v216
  %250 = vmatprep.subr.bf16.mxu0 %v219
  %251 = vmatpush1.bf16.msra.mxu0 %v218
  %252 = vmatprep.subr.bf16.mxu0 0
  %253 = vmatpush1.bf16.msra.mxu0 0
  %254 = vmatprep.subr.bf16.mxu0 0
  %255 = vmatpush1.bf16.msra.mxu0 0
  %256 = vmatprep.subr.bf16.mxu0 0
  %257 = vmatpush1.bf16.msra.mxu0 0
  %258 = vmatprep.subr.bf16.mxu0 0
  %259 = vmatpush1.bf16.msra.mxu0 0
  %260 = vmatprep.subr.bf16.mxu0 0
  %261 = vmatpush1.bf16.msra.mxu0 0
  %262 = vmatprep.subr.bf16.mxu0 0
  %263 = vmatpush1.bf16.msra.mxu0 0
  %264 = vmatprep.subr.bf16.mxu0 0
  %265 = vmatpush1.bf16.msra.mxu0 0
  %266 = vmatprep.subr.bf16.mxu0 0
  %267 = vmatpush1.bf16.msra.mxu0 0
  %268 = vmatprep.mubr.bf16.mxu0 0
  %269 = vmatmul.mubr.bf16.gmra.mrb[0].mxu0 %v35
  %v270 = vpop.f32.mrb[0].mxu0
  %v271 = vadd.f32 0.0, %v270
  %v272 = vpop.f32.mrb[0].mxu0
  %v273 = vadd.f32 0.0, %v272
  %v274 = vpop.f32.mrb[0].mxu0
  %v275 = vpop.f32.mrb[0].mxu0
  %276 = vdwg.mxu0
  %v277 = vpack.c.bf16 %v135, %v135
  %v278 = vpack.c.bf16 %v271, %v271
  %v279 = vld [vmem:[%s1] sm:$0xf]
  %v280 = vld [vmem:[%s1 + $0x4] sm:$0xf]
  %v281 = vld [vmem:[%s1 + $0x8] sm:$0xf]
  %v282 = vunpack.c.l.bf16 %v279
  %v283 = vunpack.c.l.bf16 %v280
  %v284 = vunpack.c.l.bf16 %v281
  %v285 = vlaneseq
  %v286 = vshrl.u32 %v285, 7
  %v287 = vstv %s30
  %v288 = vadd.s32 %v287, %v286
  %v289 = vlaneseq
  %v290 = vand.u32 %v289, 127
  %vm291 = vcmp.eq.s32.totalorder %v288, %v290
  %v292 = vsel %vm291, -1e+09, 0.0
  %v293 = vld [vmem:[%s2] sm:$0xf]
  %v294 = vunpack.c.l.bf16 %v293
  %vm295 = vcmask 64512
  %v297 = vsel %vm295, %v278, 0
  %v300 = vsel %vm295, %v277, 0
  %302 = vmatprep.subr.bf16.mxu0 0
  %303 = vmatpush1.bf16.xpose.msra.mxu0 %v300
  %304 = vmatprep.subr.bf16.mxu0 0
  %305 = vmatpush1.bf16.xpose.msra.mxu0 0
  %306 = vmatprep.subr.bf16.mxu0 0
  %307 = vmatpush1.bf16.xpose.msra.mxu0 0
  %308 = vmatprep.subr.bf16.mxu0 0
  %309 = vmatpush1.bf16.xpose.msra.mxu0 0
  %310 = vmatprep.subr.bf16.mxu0 0
  %311 = vmatpush1.bf16.xpose.msra.mxu0 0
  %312 = vmatprep.subr.bf16.mxu0 0
  %313 = vmatpush1.bf16.xpose.msra.mxu0 0
  %314 = vmatprep.subr.bf16.mxu0 0
  %315 = vmatpush1.bf16.xpose.msra.mxu0 0
  %316 = vmatprep.subr.bf16.mxu0 0
  %317 = vmatpush1.bf16.xpose.msra.mxu0 0
  %318 = vmatprep.subr.bf16.mxu0 0
  %319 = vmatpush1.bf16.xpose.msra.mxu0 0
  %320 = vmatprep.subr.bf16.mxu0 0
  %321 = vmatpush1.bf16.xpose.msra.mxu0 0
  %322 = vmatprep.subr.bf16.mxu0 0
  %323 = vmatpush1.bf16.xpose.msra.mxu0 0
  %324 = vmatprep.subr.bf16.mxu0 0
  %325 = vmatpush1.bf16.xpose.msra.mxu0 0
  %326 = vmatprep.subr.bf16.mxu0 0
  %327 = vmatpush1.bf16.xpose.msra.mxu0 0
  %328 = vmatprep.subr.bf16.mxu0 0
  %329 = vmatpush1.bf16.xpose.msra.mxu0 0
  %330 = vmatprep.subr.bf16.mxu0 0
  %331 = vmatpush1.bf16.xpose.msra.mxu0 0
  %332 = vmatprep.subr.bf16.mxu0 0
  %333 = vmatpush1.bf16.xpose.msra.mxu0 0
  %334 = vmatprep.mubr.bf16.mxu0 0
  %335 = vmatmul.mubr.bf16.gmra.mrb[0].mxu0 %v297
  %v336 = vpop.f32.mrb[0].mxu0
  %v337 = vadd.f32 %v294, %v336
  %v338 = vpop.f32.mrb[0].mxu0
  %v339 = vpop.f32.mrb[0].mxu0
  %v340 = vpop.f32.mrb[0].mxu0
  %341 = vdwg.mxu0
  %v342 = vadd.f32 %v337, %v292
  %v343 = vsel %vm295, %v342, -inf
  %344 = vmax.xlane.f32.xlu0 %v343
  %v345 = vpop.xlane.xlu0 %344
  %v346 = vsub.f32 %v342, %v345
  %v347 = vmul.f32 %v346, 1.442695
  %v348 = vpow.pop %v347
  %v349 = vsel %vm295, %v348, 0.0
  %350 = vadd.xlane.f32.xlu0 %v349
  %v351 = vpop.xlane.xlu0 %350
  %v352 = vrcp.pop %v351
  %v353 = vmul.f32 %v348, %v352
  %v354 = vpack.c.bf16 %v353, %v353
  %v355 = vmul.f32 %v353, %v282
  %v356 = vpack.c.bf16 %v355, %v355
  %v357 = vmul.f32 %v353, %v283
  %v358 = vpack.c.bf16 %v357, %v357
  %v359 = vmul.f32 %v353, %v284
  %v360 = vpack.c.bf16 %v359, %v359
  %v362 = vrot.slane %v356, 4
  %v364 = vrot.slane %v360, 4
  %vm365 = vcmask 1043456
  %v368 = vsel %vm365, %v354, %v362
  %v371 = vsel %vm365, %v358, %v364
  %373 = vrot.lane.b32.xlu0 %v277, 96
  %v374 = vpop.permute.xlu0 %373
  %v375 = vsel %vm295, %v368, 0
  %v377 = vsel %vm295, %v371, 0
  %v380 = vsel %vm365, %v374, 0
  %382 = vmatprep.subr.bf16.mxu0 0
  %383 = vmatpush1.bf16.msra.mxu0 %v380
  %384 = vmatprep.subr.bf16.mxu0 0
  %385 = vmatpush1.bf16.msra.mxu0 0
  %386 = vmatprep.subr.bf16.mxu0 0
  %387 = vmatpush1.bf16.msra.mxu0 0
  %388 = vmatprep.subr.bf16.mxu0 0
  %389 = vmatpush1.bf16.msra.mxu0 0
  %390 = vmatprep.subr.bf16.mxu0 0
  %391 = vmatpush1.bf16.msra.mxu0 0
  %392 = vmatprep.subr.bf16.mxu0 0
  %393 = vmatpush1.bf16.msra.mxu0 0
  %394 = vmatprep.subr.bf16.mxu0 0
  %395 = vmatpush1.bf16.msra.mxu0 0
  %396 = vmatprep.subr.bf16.mxu0 0
  %397 = vmatpush1.bf16.msra.mxu0 0
  %398 = vmatprep.subr.bf16.mxu0 0
  %399 = vmatpush1.bf16.msra.mxu0 0
  %400 = vmatprep.subr.bf16.mxu0 0
  %401 = vmatpush1.bf16.msra.mxu0 0
  %402 = vmatprep.subr.bf16.mxu0 0
  %403 = vmatpush1.bf16.msra.mxu0 0
  %404 = vmatprep.subr.bf16.mxu0 0
  %405 = vmatpush1.bf16.msra.mxu0 0
  %406 = vmatprep.subr.bf16.mxu0 0
  %407 = vmatpush1.bf16.msra.mxu0 0
  %408 = vmatprep.subr.bf16.mxu0 0
  %409 = vmatpush1.bf16.msra.mxu0 0
  %410 = vmatprep.subr.bf16.mxu0 0
  %411 = vmatpush1.bf16.msra.mxu0 0
  %412 = vmatprep.subr.bf16.mxu0 0
  %413 = vmatpush1.bf16.msra.mxu0 0
  %414 = vmatprep.mubr.bf16.mxu0 0
  %415 = vmatmul.mubr.bf16.gmra.mrb[0].mxu0 %v375
  %v416 = vpop.f32.mrb[0].mxu0
  %v417 = vadd.f32 0.0, %v416
  %v418 = vpop.f32.mrb[0].mxu0
  %v419 = vpop.f32.mrb[0].mxu0
  %v420 = vadd.f32 0.0, %v419
  %v421 = vpop.f32.mrb[0].mxu0
  %422 = vmatprep.mubr.bf16.mxu0 0
  %423 = vmatmul.mubr.bf16.gmra.mrb[0].mxu0 %v377
  %v424 = vpop.f32.mrb[0].mxu0
  %v425 = vadd.f32 0.0, %v424
  %v426 = vpop.f32.mrb[0].mxu0
  %v427 = vpop.f32.mrb[0].mxu0
  %v428 = vadd.f32 0.0, %v427
  %v429 = vpop.f32.mrb[0].mxu0
  %430 = vdwg.mxu0
  %s431 = scalar_lea.vmem %s2, 4
  %v432 = vld [vmem:[%s431] sm:$0xf]
  %v433 = vunpack.c.l.bf16 %v432
  %435 = vrot.lane.b32.xlu0 %v278, 120
  %v436 = vpop.permute.xlu0 %435
  %437 = vrot.lane.b32.xlu0 %v277, 120
  %v438 = vpop.permute.xlu0 %437
  %v440 = vsel %vm295, %v436, 0
  %v443 = vsel %vm295, %v438, 0
  %445 = vmatprep.subr.bf16.mxu0 0
  %446 = vmatpush1.bf16.xpose.msra.mxu0 %v443
  %447 = vmatprep.subr.bf16.mxu0 0
  %448 = vmatpush1.bf16.xpose.msra.mxu0 0
  %449 = vmatprep.subr.bf16.mxu0 0
  %450 = vmatpush1.bf16.xpose.msra.mxu0 0
  %451 = vmatprep.subr.bf16.mxu0 0
  %452 = vmatpush1.bf16.xpose.msra.mxu0 0
  %453 = vmatprep.subr.bf16.mxu0 0
  %454 = vmatpush1.bf16.xpose.msra.mxu0 0
  %455 = vmatprep.subr.bf16.mxu0 0
  %456 = vmatpush1.bf16.xpose.msra.mxu0 0
  %457 = vmatprep.subr.bf16.mxu0 0
  %458 = vmatpush1.bf16.xpose.msra.mxu0 0
  %459 = vmatprep.subr.bf16.mxu0 0
  %460 = vmatpush1.bf16.xpose.msra.mxu0 0
  %461 = vmatprep.subr.bf16.mxu0 0
  %462 = vmatpush1.bf16.xpose.msra.mxu0 0
  %463 = vmatprep.subr.bf16.mxu0 0
  %464 = vmatpush1.bf16.xpose.msra.mxu0 0
  %465 = vmatprep.subr.bf16.mxu0 0
  %466 = vmatpush1.bf16.xpose.msra.mxu0 0
  %467 = vmatprep.subr.bf16.mxu0 0
  %468 = vmatpush1.bf16.xpose.msra.mxu0 0
  %469 = vmatprep.subr.bf16.mxu0 0
  %470 = vmatpush1.bf16.xpose.msra.mxu0 0
  %471 = vmatprep.subr.bf16.mxu0 0
  %472 = vmatpush1.bf16.xpose.msra.mxu0 0
  %473 = vmatprep.subr.bf16.mxu0 0
  %474 = vmatpush1.bf16.xpose.msra.mxu0 0
  %475 = vmatprep.subr.bf16.mxu0 0
  %476 = vmatpush1.bf16.xpose.msra.mxu0 0
  %477 = vmatprep.mubr.bf16.mxu0 0
  %478 = vmatmul.mubr.bf16.gmra.mrb[0].mxu0 %v440
  %v479 = vpop.f32.mrb[0].mxu0
  %v480 = vadd.f32 %v433, %v479
  %v481 = vpop.f32.mrb[0].mxu0
  %v482 = vpop.f32.mrb[0].mxu0
  %v483 = vpop.f32.mrb[0].mxu0
  %484 = vdwg.mxu0
  %v485 = vadd.f32 %v480, %v292
  %v486 = vsel %vm295, %v485, -inf
  %487 = vmax.xlane.f32.xlu0 %v486
  %v488 = vpop.xlane.xlu0 %487
  %v489 = vsub.f32 %v485, %v488
  %v490 = vmul.f32 %v489, 1.442695
  %v491 = vpow.pop %v490
  %v492 = vsel %vm295, %v491, 0.0
  %493 = vadd.xlane.f32.xlu0 %v492
  %v494 = vpop.xlane.xlu0 %493
  %v495 = vrcp.pop %v494
  %v496 = vmul.f32 %v491, %v495
  %v497 = vpack.c.bf16 %v496, %v496
  %v498 = vmul.f32 %v496, %v282
  %v499 = vpack.c.bf16 %v498, %v498
  %v500 = vmul.f32 %v496, %v283
  %v501 = vpack.c.bf16 %v500, %v500
  %v502 = vmul.f32 %v496, %v284
  %v503 = vpack.c.bf16 %v502, %v502
  %v505 = vrot.slane %v499, 4
  %v507 = vrot.slane %v503, 4
  %v510 = vsel %vm365, %v497, %v505
  %v513 = vsel %vm365, %v501, %v507
  %514 = vrot.lane.b32.xlu0 %v277, 80
  %v515 = vpop.permute.xlu0 %514
  %v516 = vsel %vm295, %v510, 0
  %v518 = vsel %vm295, %v513, 0
  %v521 = vsel %vm365, %v515, 0
  %523 = vmatprep.subr.bf16.mxu0 0
  %524 = vmatpush1.bf16.msra.mxu0 %v521
  %525 = vmatprep.subr.bf16.mxu0 0
  %526 = vmatpush1.bf16.msra.mxu0 0
  %527 = vmatprep.subr.bf16.mxu0 0
  %528 = vmatpush1.bf16.msra.mxu0 0
  %529 = vmatprep.subr.bf16.mxu0 0
  %530 = vmatpush1.bf16.msra.mxu0 0
  %531 = vmatprep.subr.bf16.mxu0 0
  %532 = vmatpush1.bf16.msra.mxu0 0
  %533 = vmatprep.subr.bf16.mxu0 0
  %534 = vmatpush1.bf16.msra.mxu0 0
  %535 = vmatprep.subr.bf16.mxu0 0
  %536 = vmatpush1.bf16.msra.mxu0 0
  %537 = vmatprep.subr.bf16.mxu0 0
  %538 = vmatpush1.bf16.msra.mxu0 0
  %539 = vmatprep.subr.bf16.mxu0 0
  %540 = vmatpush1.bf16.msra.mxu0 0
  %541 = vmatprep.subr.bf16.mxu0 0
  %542 = vmatpush1.bf16.msra.mxu0 0
  %543 = vmatprep.subr.bf16.mxu0 0
  %544 = vmatpush1.bf16.msra.mxu0 0
  %545 = vmatprep.subr.bf16.mxu0 0
  %546 = vmatpush1.bf16.msra.mxu0 0
  %547 = vmatprep.subr.bf16.mxu0 0
  %548 = vmatpush1.bf16.msra.mxu0 0
  %549 = vmatprep.subr.bf16.mxu0 0
  %550 = vmatpush1.bf16.msra.mxu0 0
  %551 = vmatprep.subr.bf16.mxu0 0
  %552 = vmatpush1.bf16.msra.mxu0 0
  %553 = vmatprep.subr.bf16.mxu0 0
  %554 = vmatpush1.bf16.msra.mxu0 0
  %555 = vmatprep.mubr.bf16.mxu0 0
  %556 = vmatmul.mubr.bf16.gmra.mrb[0].mxu0 %v516
  %v557 = vpop.f32.mrb[0].mxu0
  %v558 = vadd.f32 0.0, %v557
  %v559 = vpop.f32.mrb[0].mxu0
  %v560 = vpop.f32.mrb[0].mxu0
  %v561 = vadd.f32 0.0, %v560
  %v562 = vpop.f32.mrb[0].mxu0
  %563 = vmatprep.mubr.bf16.mxu0 0
  %564 = vmatmul.mubr.bf16.gmra.mrb[0].mxu0 %v518
  %v565 = vpop.f32.mrb[0].mxu0
  %v566 = vadd.f32 0.0, %v565
  %v567 = vpop.f32.mrb[0].mxu0
  %v568 = vpop.f32.mrb[0].mxu0
  %v569 = vadd.f32 0.0, %v568
  %v570 = vpop.f32.mrb[0].mxu0
  %571 = vdwg.mxu0
  %s572 = scalar_lea.vmem %s2, 8
  %v573 = vld [vmem:[%s572] sm:$0xf]
  %v574 = vunpack.c.l.bf16 %v573
  %575 = vrot.lane.b32.xlu0 %v278, 112
  %v576 = vpop.permute.xlu0 %575
  %577 = vrot.lane.b32.xlu0 %v277, 112
  %v578 = vpop.permute.xlu0 %577
  %v580 = vsel %vm295, %v576, 0
  %v583 = vsel %vm295, %v578, 0
  %585 = vmatprep.subr.bf16.mxu0 0
  %586 = vmatpush1.bf16.xpose.msra.mxu0 %v583
  %587 = vmatprep.subr.bf16.mxu0 0
  %588 = vmatpush1.bf16.xpose.msra.mxu0 0
  %589 = vmatprep.subr.bf16.mxu0 0
  %590 = vmatpush1.bf16.xpose.msra.mxu0 0
  %591 = vmatprep.subr.bf16.mxu0 0
  %592 = vmatpush1.bf16.xpose.msra.mxu0 0
  %593 = vmatprep.subr.bf16.mxu0 0
  %594 = vmatpush1.bf16.xpose.msra.mxu0 0
  %595 = vmatprep.subr.bf16.mxu0 0
  %596 = vmatpush1.bf16.xpose.msra.mxu0 0
  %597 = vmatprep.subr.bf16.mxu0 0
  %598 = vmatpush1.bf16.xpose.msra.mxu0 0
  %599 = vmatprep.subr.bf16.mxu0 0
  %600 = vmatpush1.bf16.xpose.msra.mxu0 0
  %601 = vmatprep.subr.bf16.mxu0 0
  %602 = vmatpush1.bf16.xpose.msra.mxu0 0
  %603 = vmatprep.subr.bf16.mxu0 0
  %604 = vmatpush1.bf16.xpose.msra.mxu0 0
  %605 = vmatprep.subr.bf16.mxu0 0
  %606 = vmatpush1.bf16.xpose.msra.mxu0 0
  %607 = vmatprep.subr.bf16.mxu0 0
  %608 = vmatpush1.bf16.xpose.msra.mxu0 0
  %609 = vmatprep.subr.bf16.mxu0 0
  %610 = vmatpush1.bf16.xpose.msra.mxu0 0
  %611 = vmatprep.subr.bf16.mxu0 0
  %612 = vmatpush1.bf16.xpose.msra.mxu0 0
  %613 = vmatprep.subr.bf16.mxu0 0
  %614 = vmatpush1.bf16.xpose.msra.mxu0 0
  %615 = vmatprep.subr.bf16.mxu0 0
  %616 = vmatpush1.bf16.xpose.msra.mxu0 0
  %617 = vmatprep.mubr.bf16.mxu0 0
  %618 = vmatmul.mubr.bf16.gmra.mrb[0].mxu0 %v580
  %v619 = vpop.f32.mrb[0].mxu0
  %v620 = vadd.f32 %v574, %v619
  %v621 = vpop.f32.mrb[0].mxu0
  %v622 = vpop.f32.mrb[0].mxu0
  %v623 = vpop.f32.mrb[0].mxu0
  %624 = vdwg.mxu0
  %v625 = vadd.f32 %v620, %v292
  %v626 = vsel %vm295, %v625, -inf
  %627 = vmax.xlane.f32.xlu0 %v626
  %v628 = vpop.xlane.xlu0 %627
  %v629 = vsub.f32 %v625, %v628
  %v630 = vmul.f32 %v629, 1.442695
  %v631 = vpow.pop %v630
  %v632 = vsel %vm295, %v631, 0.0
  %633 = vadd.xlane.f32.xlu0 %v632
  %v634 = vpop.xlane.xlu0 %633
  %v635 = vrcp.pop %v634
  %v636 = vmul.f32 %v631, %v635
  %v637 = vpack.c.bf16 %v636, %v636
  %v638 = vmul.f32 %v636, %v282
  %v639 = vpack.c.bf16 %v638, %v638
  %v640 = vmul.f32 %v636, %v283
  %v641 = vpack.c.bf16 %v640, %v640
  %v642 = vmul.f32 %v636, %v284
  %v643 = vpack.c.bf16 %v642, %v642
  %v645 = vrot.slane %v639, 4
  %v647 = vrot.slane %v643, 4
  %v650 = vsel %vm365, %v637, %v645
  %v653 = vsel %vm365, %v641, %v647
  %654 = vrot.lane.b32.xlu0 %v277, 64
  %v655 = vpop.permute.xlu0 %654
  %v656 = vsel %vm295, %v650, 0
  %v658 = vsel %vm295, %v653, 0
  %v661 = vsel %vm365, %v655, 0
  %663 = vmatprep.subr.bf16.mxu0 0
  %664 = vmatpush1.bf16.msra.mxu0 %v661
  %665 = vmatprep.subr.bf16.mxu0 0
  %666 = vmatpush1.bf16.msra.mxu0 0
  %667 = vmatprep.subr.bf16.mxu0 0
  %668 = vmatpush1.bf16.msra.mxu0 0
  %669 = vmatprep.subr.bf16.mxu0 0
  %670 = vmatpush1.bf16.msra.mxu0 0
  %671 = vmatprep.subr.bf16.mxu0 0
  %672 = vmatpush1.bf16.msra.mxu0 0
  %673 = vmatprep.subr.bf16.mxu0 0
  %674 = vmatpush1.bf16.msra.mxu0 0
  %675 = vmatprep.subr.bf16.mxu0 0
  %676 = vmatpush1.bf16.msra.mxu0 0
  %677 = vmatprep.subr.bf16.mxu0 0
  %678 = vmatpush1.bf16.msra.mxu0 0
  %679 = vmatprep.subr.bf16.mxu0 0
  %680 = vmatpush1.bf16.msra.mxu0 0
  %681 = vmatprep.subr.bf16.mxu0 0
  %682 = vmatpush1.bf16.msra.mxu0 0
  %683 = vmatprep.subr.bf16.mxu0 0
  %684 = vmatpush1.bf16.msra.mxu0 0
  %685 = vmatprep.subr.bf16.mxu0 0
  %686 = vmatpush1.bf16.msra.mxu0 0
  %687 = vmatprep.subr.bf16.mxu0 0
  %688 = vmatpush1.bf16.msra.mxu0 0
  %689 = vmatprep.subr.bf16.mxu0 0
  %690 = vmatpush1.bf16.msra.mxu0 0
  %691 = vmatprep.subr.bf16.mxu0 0
  %692 = vmatpush1.bf16.msra.mxu0 0
  %693 = vmatprep.subr.bf16.mxu0 0
  %694 = vmatpush1.bf16.msra.mxu0 0
  %695 = vmatprep.mubr.bf16.mxu0 0
  %696 = vmatmul.mubr.bf16.gmra.mrb[0].mxu0 %v656
  %v697 = vpop.f32.mrb[0].mxu0
  %v698 = vadd.f32 0.0, %v697
  %v699 = vpop.f32.mrb[0].mxu0
  %v700 = vpop.f32.mrb[0].mxu0
  %v701 = vadd.f32 0.0, %v700
  %v702 = vpop.f32.mrb[0].mxu0
  %703 = vmatprep.mubr.bf16.mxu0 0
  %704 = vmatmul.mubr.bf16.gmra.mrb[0].mxu0 %v658
  %v705 = vpop.f32.mrb[0].mxu0
  %v706 = vadd.f32 0.0, %v705
  %v707 = vpop.f32.mrb[0].mxu0
  %v708 = vpop.f32.mrb[0].mxu0
  %v709 = vadd.f32 0.0, %v708
  %v710 = vpop.f32.mrb[0].mxu0
  %711 = vdwg.mxu0
  %s712 = scalar_lea.vmem %s2, 12
  %v713 = vld [vmem:[%s712] sm:$0xf]
  %v714 = vunpack.c.l.bf16 %v713
  %715 = vrot.lane.b32.xlu0 %v278, 104
  %v716 = vpop.permute.xlu0 %715
  %717 = vrot.lane.b32.xlu0 %v277, 104
  %v718 = vpop.permute.xlu0 %717
  %v720 = vsel %vm295, %v716, 0
  %v723 = vsel %vm295, %v718, 0
  %725 = vmatprep.subr.bf16.mxu0 0
  %726 = vmatpush1.bf16.xpose.msra.mxu0 %v723
  %727 = vmatprep.subr.bf16.mxu0 0
  %728 = vmatpush1.bf16.xpose.msra.mxu0 0
  %729 = vmatprep.subr.bf16.mxu0 0
  %730 = vmatpush1.bf16.xpose.msra.mxu0 0
  %731 = vmatprep.subr.bf16.mxu0 0
  %732 = vmatpush1.bf16.xpose.msra.mxu0 0
  %733 = vmatprep.subr.bf16.mxu0 0
  %734 = vmatpush1.bf16.xpose.msra.mxu0 0
  %735 = vmatprep.subr.bf16.mxu0 0
  %736 = vmatpush1.bf16.xpose.msra.mxu0 0
  %737 = vmatprep.subr.bf16.mxu0 0
  %738 = vmatpush1.bf16.xpose.msra.mxu0 0
  %739 = vmatprep.subr.bf16.mxu0 0
  %740 = vmatpush1.bf16.xpose.msra.mxu0 0
  %741 = vmatprep.subr.bf16.mxu0 0
  %742 = vmatpush1.bf16.xpose.msra.mxu0 0
  %743 = vmatprep.subr.bf16.mxu0 0
  %744 = vmatpush1.bf16.xpose.msra.mxu0 0
  %745 = vmatprep.subr.bf16.mxu0 0
  %746 = vmatpush1.bf16.xpose.msra.mxu0 0
  %747 = vmatprep.subr.bf16.mxu0 0
  %748 = vmatpush1.bf16.xpose.msra.mxu0 0
  %749 = vmatprep.subr.bf16.mxu0 0
  %750 = vmatpush1.bf16.xpose.msra.mxu0 0
  %751 = vmatprep.subr.bf16.mxu0 0
  %752 = vmatpush1.bf16.xpose.msra.mxu0 0
  %753 = vmatprep.subr.bf16.mxu0 0
  %754 = vmatpush1.bf16.xpose.msra.mxu0 0
  %755 = vmatprep.subr.bf16.mxu0 0
  %756 = vmatpush1.bf16.xpose.msra.mxu0 0
  %757 = vmatprep.mubr.bf16.mxu0 0
  %758 = vmatmul.mubr.bf16.gmra.mrb[0].mxu0 %v720
  %v759 = vpop.f32.mrb[0].mxu0
  %v760 = vadd.f32 %v714, %v759
  %v761 = vpop.f32.mrb[0].mxu0
  %v762 = vpop.f32.mrb[0].mxu0
  %v763 = vpop.f32.mrb[0].mxu0
  %764 = vdwg.mxu0
  %v765 = vadd.f32 %v760, %v292
  %v766 = vsel %vm295, %v765, -inf
  %767 = vmax.xlane.f32.xlu0 %v766
  %v768 = vpop.xlane.xlu0 %767
  %v769 = vsub.f32 %v765, %v768
  %v770 = vmul.f32 %v769, 1.442695
  %v771 = vpow.pop %v770
  %v772 = vsel %vm295, %v771, 0.0
  %773 = vadd.xlane.f32.xlu0 %v772
  %v774 = vpop.xlane.xlu0 %773
  %v775 = vrcp.pop %v774
  %v776 = vmul.f32 %v771, %v775
  %v777 = vpack.c.bf16 %v776, %v776
  %v778 = vmul.f32 %v776, %v282
  %v779 = vpack.c.bf16 %v778, %v778
  %v780 = vmul.f32 %v776, %v283
  %v781 = vpack.c.bf16 %v780, %v780
  %v782 = vmul.f32 %v776, %v284
  %v783 = vpack.c.bf16 %v782, %v782
  %v785 = vrot.slane %v779, 4
  %v787 = vrot.slane %v783, 4
  %v790 = vsel %vm365, %v777, %v785
  %v793 = vsel %vm365, %v781, %v787
  %794 = vrot.lane.b32.xlu0 %v277, 48
  %v795 = vpop.permute.xlu0 %794
  %v796 = vsel %vm295, %v790, 0
  %v798 = vsel %vm295, %v793, 0
  %v801 = vsel %vm365, %v795, 0
  %803 = vmatprep.subr.bf16.mxu0 0
  %804 = vmatpush1.bf16.msra.mxu0 %v801
  %805 = vmatprep.subr.bf16.mxu0 0
  %806 = vmatpush1.bf16.msra.mxu0 0
  %807 = vmatprep.subr.bf16.mxu0 0
  %808 = vmatpush1.bf16.msra.mxu0 0
  %809 = vmatprep.subr.bf16.mxu0 0
  %810 = vmatpush1.bf16.msra.mxu0 0
  %811 = vmatprep.subr.bf16.mxu0 0
  %812 = vmatpush1.bf16.msra.mxu0 0
  %813 = vmatprep.subr.bf16.mxu0 0
  %814 = vmatpush1.bf16.msra.mxu0 0
  %815 = vmatprep.subr.bf16.mxu0 0
  %816 = vmatpush1.bf16.msra.mxu0 0
  %817 = vmatprep.subr.bf16.mxu0 0
  %818 = vmatpush1.bf16.msra.mxu0 0
  %819 = vmatprep.subr.bf16.mxu0 0
  %820 = vmatpush1.bf16.msra.mxu0 0
  %821 = vmatprep.subr.bf16.mxu0 0
  %822 = vmatpush1.bf16.msra.mxu0 0
  %823 = vmatprep.subr.bf16.mxu0 0
  %824 = vmatpush1.bf16.msra.mxu0 0
  %825 = vmatprep.subr.bf16.mxu0 0
  %826 = vmatpush1.bf16.msra.mxu0 0
  %827 = vmatprep.subr.bf16.mxu0 0
  %828 = vmatpush1.bf16.msra.mxu0 0
  %829 = vmatprep.subr.bf16.mxu0 0
  %830 = vmatpush1.bf16.msra.mxu0 0
  %831 = vmatprep.subr.bf16.mxu0 0
  %832 = vmatpush1.bf16.msra.mxu0 0
  %833 = vmatprep.subr.bf16.mxu0 0
  %834 = vmatpush1.bf16.msra.mxu0 0
  %835 = vmatprep.mubr.bf16.mxu0 0
  %836 = vmatmul.mubr.bf16.gmra.mrb[0].mxu0 %v796
  %v837 = vpop.f32.mrb[0].mxu0
  %v838 = vadd.f32 0.0, %v837
  %v839 = vpop.f32.mrb[0].mxu0
  %v840 = vpop.f32.mrb[0].mxu0
  %v841 = vadd.f32 0.0, %v840
  %v842 = vpop.f32.mrb[0].mxu0
  %843 = vmatprep.mubr.bf16.mxu0 0
  %844 = vmatmul.mubr.bf16.gmra.mrb[0].mxu0 %v798
  %v845 = vpop.f32.mrb[0].mxu0
  %v846 = vadd.f32 0.0, %v845
  %v847 = vpop.f32.mrb[0].mxu0
  %v848 = vpop.f32.mrb[0].mxu0
  %v849 = vadd.f32 0.0, %v848
  %v850 = vpop.f32.mrb[0].mxu0
  %851 = vdwg.mxu0
  %853 = vrot.lane.b32.xlu0 %v420, 16
  %v854 = vpop.permute.xlu0 %853
  %857 = vrot.lane.b32.xlu0 %v425, 32
  %v858 = vpop.permute.xlu0 %857
  %861 = vrot.lane.b32.xlu0 %v428, 48
  %v862 = vpop.permute.xlu0 %861
  %865 = vrot.lane.b32.xlu0 %v558, 64
  %v866 = vpop.permute.xlu0 %865
  %869 = vrot.lane.b32.xlu0 %v561, 80
  %v870 = vpop.permute.xlu0 %869
  %873 = vrot.lane.b32.xlu0 %v566, 96
  %v874 = vpop.permute.xlu0 %873
  %877 = vrot.lane.b32.xlu0 %v569, 112
  %v878 = vpop.permute.xlu0 %877
  %881 = vrot.lane.b32.xlu0 %v701, 16
  %v882 = vpop.permute.xlu0 %881
  %885 = vrot.lane.b32.xlu0 %v706, 32
  %v886 = vpop.permute.xlu0 %885
  %889 = vrot.lane.b32.xlu0 %v709, 48
  %v890 = vpop.permute.xlu0 %889
  %893 = vrot.lane.b32.xlu0 %v838, 64
  %v894 = vpop.permute.xlu0 %893
  %897 = vrot.lane.b32.xlu0 %v841, 80
  %v898 = vpop.permute.xlu0 %897
  %901 = vrot.lane.b32.xlu0 %v846, 96
  %v902 = vpop.permute.xlu0 %901
  %905 = vrot.lane.b32.xlu0 %v849, 112
  %v906 = vpop.permute.xlu0 %905
  %vm908 = vcmask 130048
  %v909 = vsel %vm908, %v417, %v854
  %vm910 = vcmask 261120
  %v911 = vsel %vm910, %v909, %v858
  %vm912 = vcmask 392192
  %v913 = vsel %vm912, %v911, %v862
  %vm914 = vcmask 523264
  %v915 = vsel %vm914, %v913, %v866
  %vm916 = vcmask 654336
  %v917 = vsel %vm916, %v915, %v870
  %vm918 = vcmask 785408
  %v919 = vsel %vm918, %v917, %v874
  %vm920 = vcmask 916480
  %v921 = vsel %vm920, %v919, %v878
  %v922 = vsel %vm908, %v698, %v882
  %v923 = vsel %vm910, %v922, %v886
  %v924 = vsel %vm912, %v923, %v890
  %v925 = vsel %vm914, %v924, %v894
  %v926 = vsel %vm916, %v925, %v898
  %v927 = vsel %vm918, %v926, %v902
  %v928 = vsel %vm920, %v927, %v906
  %v929 = vpack.c.bf16 %v921, %v921
  %v930 = vpack.c.bf16 %v928, %v928
  %v931 = vld [vmem:[%s5] sm:$0xf]
  %v932 = vld [vmem:[%s5 + $0x4] sm:$0xf]
  %v933 = vld [vmem:[%s5 + $0x8] sm:$0xf]
  %v934 = vld [vmem:[%s5 + $0xc] sm:$0xf]
  %v935 = vld [vmem:[%s5 + $0x10] sm:$0xf]
  %v936 = vld [vmem:[%s5 + $0x14] sm:$0xf]
  %v937 = vld [vmem:[%s5 + $0x18] sm:$0xf]
  %v938 = vld [vmem:[%s5 + $0x1c] sm:$0xf]
  %v939 = vld [vmem:[%s5 + $0x20] sm:$0xf]
  %v940 = vld [vmem:[%s5 + $0x24] sm:$0xf]
  %v941 = vld [vmem:[%s5 + $0x28] sm:$0xf]
  %v942 = vld [vmem:[%s5 + $0x2c] sm:$0xf]
  %v943 = vld [vmem:[%s5 + $0x30] sm:$0xf]
  %v944 = vld [vmem:[%s5 + $0x34] sm:$0xf]
  %v945 = vld [vmem:[%s5 + $0x38] sm:$0xf]
  %v946 = vld [vmem:[%s5 + $0x3c] sm:$0xf]
  %v947 = vld [vmem:[%s5 + $0x40] sm:$0xf]
  %v948 = vld [vmem:[%s5 + $0x44] sm:$0xf]
  %v949 = vld [vmem:[%s5 + $0x48] sm:$0xf]
  %v950 = vld [vmem:[%s5 + $0x4c] sm:$0xf]
  %v951 = vld [vmem:[%s5 + $0x50] sm:$0xf]
  %v952 = vld [vmem:[%s5 + $0x54] sm:$0xf]
  %v953 = vld [vmem:[%s5 + $0x58] sm:$0xf]
  %v954 = vld [vmem:[%s5 + $0x5c] sm:$0xf]
  %v955 = vld [vmem:[%s5 + $0x60] sm:$0xf]
  %v956 = vld [vmem:[%s5 + $0x64] sm:$0xf]
  %v957 = vld [vmem:[%s5 + $0x68] sm:$0xf]
  %v958 = vld [vmem:[%s5 + $0x6c] sm:$0xf]
  %v959 = vld [vmem:[%s5 + $0x70] sm:$0xf]
  %v960 = vld [vmem:[%s5 + $0x74] sm:$0xf]
  %v961 = vld [vmem:[%s5 + $0x78] sm:$0xf]
  %v962 = vld [vmem:[%s5 + $0x7c] sm:$0xf]
  %v995 = vunpack.c.l.b16 %v931
  %v996 = vunpack.c.l.b16 %v932
  %v997 = vunpack.c.l.b16 %v933
  %v998 = vunpack.c.l.b16 %v934
  %v999 = vunpack.c.l.b16 %v935
  %v1000 = vunpack.c.l.b16 %v936
  %v1001 = vunpack.c.l.b16 %v937
  %v1002 = vunpack.c.l.b16 %v938
  %v1003 = vunpack.c.l.b16 %v939
  %v1004 = vunpack.c.l.b16 %v940
  %v1005 = vunpack.c.l.b16 %v941
  %v1006 = vunpack.c.l.b16 %v942
  %v1007 = vunpack.c.l.b16 %v943
  %v1008 = vunpack.c.l.b16 %v944
  %v1009 = vunpack.c.l.b16 %v945
  %v1010 = vunpack.c.l.b16 %v946
  %v1011 = vunpack.c.l.b16 %v947
  %v1012 = vunpack.c.l.b16 %v948
  %v1013 = vunpack.c.l.b16 %v949
  %v1014 = vunpack.c.l.b16 %v950
  %v1015 = vunpack.c.l.b16 %v951
  %v1016 = vunpack.c.l.b16 %v952
  %v1017 = vunpack.c.l.b16 %v953
  %v1018 = vunpack.c.l.b16 %v954
  %v1019 = vunpack.c.l.b16 %v955
  %v1020 = vunpack.c.l.b16 %v956
  %v1021 = vunpack.c.l.b16 %v957
  %v1022 = vunpack.c.l.b16 %v958
  %v1023 = vunpack.c.l.b16 %v959
  %v1024 = vunpack.c.l.b16 %v960
  %v1025 = vunpack.c.l.b16 %v961
  %v1026 = vunpack.c.l.b16 %v962
  %v1027 = vpack.c.b16 %v996, %v995
  %v1028 = vpack.c.b16 %v998, %v997
  %v1029 = vpack.c.b16 %v1000, %v999
  %v1030 = vpack.c.b16 %v1002, %v1001
  %v1031 = vpack.c.b16 %v1004, %v1003
  %v1032 = vpack.c.b16 %v1006, %v1005
  %v1033 = vpack.c.b16 %v1008, %v1007
  %v1034 = vpack.c.b16 %v1010, %v1009
  %v1035 = vpack.c.b16 %v1012, %v1011
  %v1036 = vpack.c.b16 %v1014, %v1013
  %v1037 = vpack.c.b16 %v1016, %v1015
  %v1038 = vpack.c.b16 %v1018, %v1017
  %v1039 = vpack.c.b16 %v1020, %v1019
  %v1040 = vpack.c.b16 %v1022, %v1021
  %v1041 = vpack.c.b16 %v1024, %v1023
  %v1042 = vpack.c.b16 %v1026, %v1025
  %1061 = vrot.lane.b32.xlu0 %v271, 96
  %v1062 = vpop.permute.xlu0 %1061
  %1063 = vrot.lane.b32.xlu0 %v273, 96
  %v1064 = vpop.permute.xlu0 %1063
  %v1065 = vsel %vm918, %v1062, %v1064
  %1067 = vmatprep.subr.bf16.mxu0 0
  %1068 = vmatpush1.bf16.msra.mxu0 %v1027
  %1069 = vmatprep.subr.bf16.mxu0 0
  %1070 = vmatpush1.bf16.msra.mxu0 %v1028
  %1071 = vmatprep.subr.bf16.mxu0 0
  %1072 = vmatpush1.bf16.msra.mxu0 %v1029
  %1073 = vmatprep.subr.bf16.mxu0 0
  %1074 = vmatpush1.bf16.msra.mxu0 %v1030
  %1075 = vmatprep.subr.bf16.mxu0 0
  %1076 = vmatpush1.bf16.msra.mxu0 %v1031
  %1077 = vmatprep.subr.bf16.mxu0 0
  %1078 = vmatpush1.bf16.msra.mxu0 %v1032
  %1079 = vmatprep.subr.bf16.mxu0 0
  %1080 = vmatpush1.bf16.msra.mxu0 %v1033
  %1081 = vmatprep.subr.bf16.mxu0 0
  %1082 = vmatpush1.bf16.msra.mxu0 %v1034
  %1083 = vmatprep.subr.bf16.mxu0 0
  %1084 = vmatpush1.bf16.msra.mxu0 %v1035
  %1085 = vmatprep.subr.bf16.mxu0 0
  %1086 = vmatpush1.bf16.msra.mxu0 %v1036
  %1087 = vmatprep.subr.bf16.mxu0 0
  %1088 = vmatpush1.bf16.msra.mxu0 %v1037
  %1089 = vmatprep.subr.bf16.mxu0 0
  %1090 = vmatpush1.bf16.msra.mxu0 %v1038
  %1091 = vmatprep.subr.bf16.mxu0 0
  %1092 = vmatpush1.bf16.msra.mxu0 %v1039
  %1093 = vmatprep.subr.bf16.mxu0 0
  %1094 = vmatpush1.bf16.msra.mxu0 %v1040
  %1095 = vmatprep.subr.bf16.mxu0 0
  %1096 = vmatpush1.bf16.msra.mxu0 %v1041
  %1097 = vmatprep.subr.bf16.mxu0 0
  %1098 = vmatpush1.bf16.msra.mxu0 %v1042
  %1099 = vmatprep.mubr.bf16.mxu0 %v930
  %1100 = vmatmul.mubr.bf16.gmra.mrb[0].mxu0 %v929
  %v1101 = vpop.f32.mrb[0].mxu0
  %v1102 = vadd.f32 %v1065, %v1101
  %v1103 = vpop.f32.mrb[0].mxu0
  %v1104 = vpop.f32.mrb[0].mxu0
  %v1105 = vpop.f32.mrb[0].mxu0
  %1106 = vdwg.mxu0
  %v1107 = vld [vmem:[%s6] sm:$0x1]
  %v1108 = vlaneseq
  %v1109 = vshrl.u32 %v1108, 7
  %v1110 = vsub.s32 0, %v1109
  %v1111 = vrot.slane %v1107, %v1110
  %v1112 = vadd.f32 %v1102, %v1111
  %v1113 = vld [vmem:[%s6 + $0x1] sm:$0x1]
  %v1114 = vld [vmem:[%s6 + $0x2] sm:$0x1]
  %v1115 = vld [vmem:[%s6 + $0x3] sm:$0x1]
  %v1116 = vld [vmem:[%s6 + $0x4] sm:$0x1]
  %vm1117 = vcmp.gt.f32.partialorder %v1112, 0.0
  %vm1118 = vcmp.lt.f32.partialorder %v1112, 0.0
  %v1119 = vsel %vm1118, -1.0, 0.0
  %v1120 = vsel %vm1117, 1.0, %v1119
  %v1121 = vand.u32 2147483647, %v1112
  %v1122 = vsel %vm910, %v1121, 0.0
  %1123 = vadd.xlane.f32.xlu0 %v1122
  %v1124 = vpop.xlane.xlu0 %1123
  %v1125 = vrcp.pop 32.0
  %v1126 = vmul.f32 %v1124, %v1125
  %v1127 = vsub.f32 %v1121, %v1126
  %v1128 = vmul.f32 %v1127, %v1127
  %v1129 = vsel %vm910, %v1128, 0.0
  %1130 = vadd.xlane.f32.xlu0 %v1129
  %v1131 = vpop.xlane.xlu0 %1130
  %v1132 = vmul.f32 %v1131, %v1125
  %v1133 = vadd.f32 %v1132, 1e-05
  %v1134 = vrsqrt.pop %v1133
  %v1135 = vmul.f32 %v1127, %v1134
  %v1136 = vlaneseq
  %v1137 = vshrl.u32 %v1136, 7
  %v1138 = vsub.s32 0, %v1137
  %v1139 = vrot.slane %v1113, %v1138
  %v1140 = vmul.f32 %v1135, %v1139
  %v1141 = vlaneseq
  %v1142 = vshrl.u32 %v1141, 7
  %v1143 = vsub.s32 0, %v1142
  %v1144 = vrot.slane %v1114, %v1143
  %v1145 = vadd.f32 %v1140, %v1144
  %v1146 = vmax.f32 %v1145, 0.0
  %v1147 = vmul.f32 %v1120, %v1146
  %v1148 = vmul.f32 %v1112, %v1112
  %1150 = vrot.lane.b32.xlu0 %v1148, 96
  %v1151 = vpop.permute.xlu0 %1150
  %v1153 = vadd.f32 %v1148, %v1151
  %1154 = vrot.lane.b32.xlu0 %v1148, 64
  %v1155 = vpop.permute.xlu0 %1154
  %v1157 = vadd.f32 %v1153, %v1155
  %v1158 = vadd.f32 %v1157, 1e-06
  %v1159 = vrsqrt.pop %v1158
  %v1160 = vmul.f32 %v1158, %v1159
  %vm1161 = vcmp.eq.f32.partialorder %v1158, inf
  %v1162 = vsel %vm1161, %v1158, %v1160
  %vm1163 = vcmp.eq.f32.partialorder %v1158, 0.0
  %v1164 = vand.u32 %v1158, 2147483648
  %v1165 = vsel %vm1163, %v1164, %v1162
  %1167 = vrot.lane.b32.xlu0 %v1165, 96
  %v1168 = vpop.permute.xlu0 %1167
  %v1170 = vsel %vm910, %v1168, 0.0
  %1171 = vadd.xlane.f32.xlu0 %v1170
  %v1172 = vpop.xlane.xlu0 %1171
  %v1173 = vmul.f32 %v1172, %v1125
  %v1174 = vsub.f32 %v1165, %v1173
  %v1175 = vmul.f32 %v1174, %v1174
  %1177 = vrot.lane.b32.xlu0 %v1175, 96
  %v1178 = vpop.permute.xlu0 %1177
  %v1180 = vsel %vm910, %v1178, 0.0
  %1181 = vadd.xlane.f32.xlu0 %v1180
  %v1182 = vpop.xlane.xlu0 %1181
  %v1183 = vmul.f32 %v1182, %v1125
  %v1184 = vadd.f32 %v1183, 1e-05
  %v1185 = vrsqrt.pop %v1184
  %v1186 = vmul.f32 %v1174, %v1185
  %v1187 = vlaneseq
  %v1188 = vshrl.u32 %v1187, 7
  %v1189 = vsub.s32 0, %v1188
  %v1190 = vrot.slane %v1115, %v1189
  %1192 = vrot.lane.b32.xlu0 %v1190, 32
  %v1193 = vpop.permute.xlu0 %1192
  %v1195 = vmul.f32 %v1186, %v1193
  %v1196 = vlaneseq
  %v1197 = vshrl.u32 %v1196, 7
  %v1198 = vsub.s32 0, %v1197
  %v1199 = vrot.slane %v1116, %v1198
  %1201 = vrot.lane.b32.xlu0 %v1199, 32
  %v1202 = vpop.permute.xlu0 %1201
  %v1204 = vadd.f32 %v1195, %v1202
  %v1205 = vmax.f32 %v1204, 0.0
  %v1206 = vadd.f32 %v1165, 1e-06
  %v1207 = vrcp.pop %v1206
  %v1208 = vmul.f32 %v1205, %v1207
  %v1209 = vmul.f32 %v1112, %v1208
  %1211 = vrot.lane.b32.xlu0 %v1208, 32
  %v1212 = vpop.permute.xlu0 %1211
  %v1214 = vmul.f32 %v1112, %v1212
  %1215 = vrot.lane.b32.xlu0 %v1208, 64
  %v1216 = vpop.permute.xlu0 %1215
  %v1218 = vmul.f32 %v1112, %v1216
  %v1219 = vsel %vm910, %v1147, %v1209
  %v1220 = vsel %vm914, %v1219, %v1214
  %v1221 = vsel %vm918, %v1220, %v1218
  %v1222 = vpack.c.bf16 %v1221, %v1221
  %v1223 = vld [vmem:[%s7] sm:$0xf]
  %v1224 = vld [vmem:[%s7 + $0x4] sm:$0xf]
  %v1225 = vld [vmem:[%s7 + $0x8] sm:$0xf]
  %v1226 = vld [vmem:[%s7 + $0xc] sm:$0xf]
  %v1227 = vld [vmem:[%s7 + $0x10] sm:$0xf]
  %v1228 = vld [vmem:[%s7 + $0x14] sm:$0xf]
  %v1229 = vld [vmem:[%s7 + $0x18] sm:$0xf]
  %v1230 = vld [vmem:[%s7 + $0x1c] sm:$0xf]
  %v1231 = vld [vmem:[%s7 + $0x20] sm:$0xf]
  %v1232 = vld [vmem:[%s7 + $0x24] sm:$0xf]
  %v1233 = vld [vmem:[%s7 + $0x28] sm:$0xf]
  %v1234 = vld [vmem:[%s7 + $0x2c] sm:$0xf]
  %v1235 = vld [vmem:[%s7 + $0x30] sm:$0xf]
  %v1236 = vld [vmem:[%s7 + $0x34] sm:$0xf]
  %v1237 = vld [vmem:[%s7 + $0x38] sm:$0xf]
  %v1238 = vld [vmem:[%s7 + $0x3c] sm:$0xf]
  %v1255 = vunpack.c.l.b16 %v1223
  %v1256 = vunpack.c.l.b16 %v1224
  %v1257 = vunpack.c.l.b16 %v1225
  %v1258 = vunpack.c.l.b16 %v1226
  %v1259 = vunpack.c.l.b16 %v1227
  %v1260 = vunpack.c.l.b16 %v1228
  %v1261 = vunpack.c.l.b16 %v1229
  %v1262 = vunpack.c.l.b16 %v1230
  %v1263 = vunpack.c.l.b16 %v1231
  %v1264 = vunpack.c.l.b16 %v1232
  %v1265 = vunpack.c.l.b16 %v1233
  %v1266 = vunpack.c.l.b16 %v1234
  %v1267 = vunpack.c.l.b16 %v1235
  %v1268 = vunpack.c.l.b16 %v1236
  %v1269 = vunpack.c.l.b16 %v1237
  %v1270 = vunpack.c.l.b16 %v1238
  %v1271 = vpack.c.b16 %v1256, %v1255
  %v1272 = vpack.c.b16 %v1258, %v1257
  %v1273 = vpack.c.b16 %v1260, %v1259
  %v1274 = vpack.c.b16 %v1262, %v1261
  %v1275 = vpack.c.b16 %v1264, %v1263
  %v1276 = vpack.c.b16 %v1266, %v1265
  %v1277 = vpack.c.b16 %v1268, %v1267
  %v1278 = vpack.c.b16 %v1270, %v1269
  %1287 = vmatprep.subr.bf16.mxu0 0
  %1288 = vmatpush1.bf16.msra.mxu0 %v1271
  %1289 = vmatprep.subr.bf16.mxu0 0
  %1290 = vmatpush1.bf16.msra.mxu0 %v1272
  %1291 = vmatprep.subr.bf16.mxu0 0
  %1292 = vmatpush1.bf16.msra.mxu0 %v1273
  %1293 = vmatprep.subr.bf16.mxu0 0
  %1294 = vmatpush1.bf16.msra.mxu0 %v1274
  %1295 = vmatprep.subr.bf16.mxu0 0
  %1296 = vmatpush1.bf16.msra.mxu0 %v1275
  %1297 = vmatprep.subr.bf16.mxu0 0
  %1298 = vmatpush1.bf16.msra.mxu0 %v1276
  %1299 = vmatprep.subr.bf16.mxu0 0
  %1300 = vmatpush1.bf16.msra.mxu0 %v1277
  %1301 = vmatprep.subr.bf16.mxu0 0
  %1302 = vmatpush1.bf16.msra.mxu0 %v1278
  %1303 = vmatprep.subr.bf16.mxu0 0
  %1304 = vmatpush1.bf16.msra.mxu0 0
  %1305 = vmatprep.subr.bf16.mxu0 0
  %1306 = vmatpush1.bf16.msra.mxu0 0
  %1307 = vmatprep.subr.bf16.mxu0 0
  %1308 = vmatpush1.bf16.msra.mxu0 0
  %1309 = vmatprep.subr.bf16.mxu0 0
  %1310 = vmatpush1.bf16.msra.mxu0 0
  %1311 = vmatprep.subr.bf16.mxu0 0
  %1312 = vmatpush1.bf16.msra.mxu0 0
  %1313 = vmatprep.subr.bf16.mxu0 0
  %1314 = vmatpush1.bf16.msra.mxu0 0
  %1315 = vmatprep.subr.bf16.mxu0 0
  %1316 = vmatpush1.bf16.msra.mxu0 0
  %1317 = vmatprep.subr.bf16.mxu0 0
  %1318 = vmatpush1.bf16.msra.mxu0 0
  %1319 = vmatprep.mubr.bf16.mxu0 0
  %1320 = vmatmul.mubr.bf16.gmra.mrb[0].mxu0 %v1222
  %v1321 = vpop.f32.mrb[0].mxu0
  %v1322 = vadd.f32 0.0, %v1321
  %v1323 = vpop.f32.mrb[0].mxu0
  %v1324 = vpop.f32.mrb[0].mxu0
  %v1325 = vpop.f32.mrb[0].mxu0
  %1326 = vdwg.mxu0
  %vm1327 = vcmask 310272
  %1328 = vst.msk [vmem:[%s8] sm:$0xff] %vm1327, %v1322
  // Predicated region
  $region34: #{se3_forward.3} parent=0 // pred_check
    _
  $region35: #{se3_forward.3} parent=0 // pred_check_branch
    %1330 = sbr.rel (0) target = $region37
  $region36: #{se3_forward.3} parent=0 // pred_region
    _
  $region37: #{se3_forward.3} parent=0 // pred_fallthru
    _
  // Predicated region
  $region38: #{se3_forward.3} parent=0 // pred_check
    _
  $region39: #{se3_forward.3} parent=0 // pred_check_branch
    %1332 = sbr.rel (0) target = $region41
  $region40: #{se3_forward.3} parent=0 // pred_region
    _
  $region41: #{se3_forward.3} parent=0 // pred_fallthru
    _

</llo_original>
